<compile_context>
chip_gen: v5e
topology: v5e:2x2
jax: 0.10.0
libtpu: 0.0.40
codegen_flags: <defaults>
</compile_context>

<pallas_src>
import functools

import jax
import jax.numpy as jnp
from jax import lax
from jax.experimental import pallas as pl
from jax.experimental.pallas import tpu as pltpu

_LANE = 128      # minor (lane) tile
_SUBLANE = 8     # second-minor (sublane) tile


# ----------------------------------------------------------------------------
# Sizing helpers (generation-aware VMEM budget, time block, unroll, batch split)
# ----------------------------------------------------------------------------
def _round_up(x, m):
    return (x + m - 1) // m * m


def _vmem_capacity_bytes():
    """Physical per-core VMEM (v5e/v6e 128 MiB, v7x 64 MiB); safe fallback."""
    try:
        info = pltpu.get_tpu_info()
        cap = getattr(info, "vmem_capacity_bytes", None)
        if cap:
            return int(cap)
    except Exception:
        pass
    return 64 * 1024 * 1024


def _tile_bytes(rows, cols, itemsize):
    return _round_up(max(rows, 1), _SUBLANE) * _round_up(max(cols, 1), _LANE) * itemsize


def _working_set_bytes(t_blk, bb, din, hp, mxu_bytes):
    f32 = 4
    x_blk = 2 * t_blk * _tile_bytes(bb, din, f32)          # double-buffered
    m_blk = 2 * t_blk * _tile_bytes(bb, 1, f32)
    o_blk = 2 * t_blk * _tile_bytes(bb, hp, f32)
    wih = _tile_bytes(din, 4 * hp, mxu_bytes)               # single-buffered consts
    whh = _tile_bytes(hp, 4 * hp, mxu_bytes)
    bias = _tile_bytes(1, 4 * hp, f32)
    h0c0 = 2 * _tile_bytes(bb, hp, f32)
    scratch = 2 * _tile_bytes(bb, hp, f32)
    return x_blk + m_blk + o_blk + wih + whh + bias + h0c0 + scratch


def _pick_time_block(seq_len, bb, din, hp, mxu_bytes, cap, desired=64):
    budget = int(0.7 * cap)
    t = min(desired, seq_len)
    while t > 1:
        if seq_len % t == 0 and _working_set_bytes(t, bb, din, hp, mxu_bytes) <= budget:
            return t
        t -= 1
    return 1


def _pick_unroll(bb, hp, t_blk):
    # Keep the per-step live gates tile (bb x 4H f32) a small fraction of the
    # 64 vregs; timesteps are serially dependent so deep unroll only spills.
    gate_vregs = max(1, (bb * 4 * hp) // (_SUBLANE * _LANE))
    if gate_vregs <= 4:
        u = 8
    elif gate_vregs <= 16:
        u = 4
    else:
        u = 2
    return max(1, min(t_blk, u))


def _pick_batch_block(bp):
    # Split batch across the two v7x TensorCores when both halves stay
    # sublane-aligned; the time axis remains 'arbitrary' on each core.
    if bp % 16 == 0:
        return bp // 2
    return bp


# ----------------------------------------------------------------------------
# Pallas kernel: one masked LSTM layer, recurrent over time blocks.
# Per grid step (bi, tb): t_blk timesteps; each timestep does the fused
# x-projection + h-projection matmuls, gate nonlinearities, cell/hidden update
# and the mask blend, with (h, c) carried in VMEM scratch.
# ----------------------------------------------------------------------------
def _lstm_layer_kernel(x_ref, m_ref, wih_ref, whh_ref, b_ref, h0_ref, c0_ref,
                       out_ref, hn_ref, cn_ref, h_sc, c_sc,
                       *, hidden_size, t_blk, unroll):
    tb = pl.program_id(1)

    # New batch block (and first time block): (re)load the recurrent carry.
    @pl.when(tb == 0)
    def _():
        h_sc[...] = h0_ref[...]
        c_sc[...] = c0_ref[...]

    H = hidden_size
    h0 = h0_ref[...]                  # [bb, H]
    c0 = c0_ref[...]                  # [bb, H]
    wih = wih_ref[...]                # [Din, 4H]   (bf16 by default)
    whh = whh_ref[...]                # [H, 4H]     (bf16 by default)
    bias = b_ref[...]                 # [1, 4H]     f32 (b_ih + b_hh)

    def sigmoid1(z):                  # one EUP push instead of exp+reciprocal
        return 0.5 * jnp.tanh(0.5 * z) + 0.5

    def step(tt, carry):
        h, c = carry
        x_t = x_ref[tt]               # [bb, Din]
        m = m_ref[tt]                 # [bb, 1] broadcasts over H in the blend

        # Fused input projection (off the recurrent critical path) + h-proj.
        gates = (bias
                 + jnp.dot(x_t.astype(wih.dtype), wih,
                           preferred_element_type=jnp.float32)
                 + jnp.dot(h.astype(whh.dtype), whh,
                           preferred_element_type=jnp.float32))     # [bb, 4H]

        # H is padded to a multiple of 128, so these slices are lane-aligned.
        i_g = sigmoid1(gates[:, 0 * H:1 * H])
        f_g = sigmoid1(gates[:, 1 * H:2 * H])
        g_g = jnp.tanh(gates[:, 2 * H:3 * H])
        o_g = sigmoid1(gates[:, 3 * H:4 * H])

        c_new = f_g * c + i_g * g_g
        h_new = o_g * jnp.tanh(c_new)

        # PyTorch blend  x_new*m + x0*(1-m), rewritten as x0 + m*(x_new-x0).
        h_next = h0 + m * (h_new - h0)
        c_next = c0 + m * (c_new - c0)

        out_ref[tt] = h_next
        return h_next, c_next

    h, c = lax.fori_loop(0, t_blk, step, (h_sc[...], c_sc[...]), unroll=unroll)
    h_sc[...] = h
    c_sc[...] = c

    # hn/cn blocks are revisited across the time axis and only written on the
    # last time block; Pallas writes the (unchanged-index) output block back
    # after the last revisit, so the final write is the one that lands in HBM.
    @pl.when(tb == pl.num_programs(1) - 1)
    def _():
        hn_ref[...] = h
        cn_ref[...] = c


def lstm_layer_pallas(x, mask3, w_ih_p, w_hh_p, bias_p, h0, c0, *, hidden_pad,
                      mxu_dtype=jnp.bfloat16):
    """One masked LSTM layer over the sequence (padded, lane/sublane aligned).

    x:      [S, Bp, Din]  (Bp % 8 == 0)
    mask3:  [S, Bp, 1]
    w_ih_p: [4Hp, Din], w_hh_p: [4Hp, Hp], bias_p: [4Hp], h0/c0: [Bp, Hp]
    Returns (out [S,Bp,Hp], h_last [Bp,Hp], c_last [Bp,Hp]), all f32.
    """
    S, Bp, Din = x.shape
    Hp = hidden_pad
    assert Bp % _SUBLANE == 0 and Hp % _LANE == 0

    bb = _pick_batch_block(Bp)
    nbb = Bp // bb

    cap = _vmem_capacity_bytes()
    mxu_bytes = jnp.dtype(mxu_dtype).itemsize
    t_blk = _pick_time_block(S, bb, Din, Hp, mxu_bytes, cap)
    nb = S // t_blk
    unroll = _pick_unroll(bb, Hp, t_blk)
    need = _working_set_bytes(t_blk, bb, Din, Hp, mxu_bytes)
    vmem_limit = int(min(int(0.88 * cap), max(int(need * 1.5), 16 * 1024 * 1024)))

    wih_t = jnp.transpose(w_ih_p).astype(mxu_dtype)       # [Din, 4Hp]
    whh_t = jnp.transpose(w_hh_p).astype(mxu_dtype)       # [Hp, 4Hp]
    bias2 = bias_p.reshape(1, 4 * Hp).astype(jnp.float32)

    kernel = functools.partial(_lstm_layer_kernel, hidden_size=Hp,
                               t_blk=t_blk, unroll=unroll)

    def build(single_buffer_consts):
        def const_spec(shape, index_map):
            if single_buffer_consts:
                # Constant-index operands: never re-DMAed -> one VMEM copy.
                return pl.BlockSpec(shape, index_map, pipeline_mode=pl.Buffered(1))
            return pl.BlockSpec(shape, index_map)

        grid_spec = pltpu.PrefetchScalarGridSpec(
            num_scalar_prefetch=0,
            grid=(nbb, nb),
            in_specs=[
                pl.BlockSpec((t_blk, bb, Din), lambda bi, tb: (tb, bi, 0)),   # x
                pl.BlockSpec((t_blk, bb, 1), lambda bi, tb: (tb, bi, 0)),     # mask
                const_spec((Din, 4 * Hp), lambda bi, tb: (0, 0)),             # W_ih^T
                const_spec((Hp, 4 * Hp), lambda bi, tb: (0, 0)),              # W_hh^T
                const_spec((1, 4 * Hp), lambda bi, tb: (0, 0)),               # bias
                const_spec((bb, Hp), lambda bi, tb: (bi, 0)),                 # h0
                const_spec((bb, Hp), lambda bi, tb: (bi, 0)),                 # c0
            ],
            out_specs=(
                pl.BlockSpec((t_blk, bb, Hp), lambda bi, tb: (tb, bi, 0)),    # out
                pl.BlockSpec((bb, Hp), lambda bi, tb: (bi, 0)),               # hn
                pl.BlockSpec((bb, Hp), lambda bi, tb: (bi, 0)),               # cn
            ),
            scratch_shapes=[pltpu.VMEM((bb, Hp), jnp.float32),                # h carry
                            pltpu.VMEM((bb, Hp), jnp.float32)],               # c carry
        )
        return pl.pallas_call(
            kernel,
            out_shape=(jax.ShapeDtypeStruct((S, Bp, Hp), jnp.float32),
                       jax.ShapeDtypeStruct((Bp, Hp), jnp.float32),
                       jax.ShapeDtypeStruct((Bp, Hp), jnp.float32)),
            grid_spec=grid_spec,
            compiler_params=pltpu.CompilerParams(
                # batch blocks independent -> parallel; time is recurrent.
                dimension_semantics=("parallel", "arbitrary"),
                vmem_limit_bytes=vmem_limit),
        )

    args = (x.astype(jnp.float32), mask3.astype(jnp.float32), wih_t, whh_t,
            bias2, h0.astype(jnp.float32), c0.astype(jnp.float32))
    try:
        return build(True)(*args)
    except Exception:
        # TODO(synk): fallback if this Pallas build rejects Buffered(1)
        # single-buffering of the constant operands; semantics are identical.
        return build(False)(*args)


# ----------------------------------------------------------------------------
# Full module forward (multi-layer stacked LSTM, unidirectional)
# ----------------------------------------------------------------------------
def _pad_gate_rows(w, h, hp):
    """Pad each of the 4 stacked LSTM gate blocks along dim 0 from h to hp."""
    if hp == h:
        return w
    pad = [(0, hp - h)] + [(0, 0)] * (w.ndim - 1)
    return jnp.concatenate(
        [jnp.pad(w[k * h:(k + 1) * h], pad) for k in range(4)], axis=0)


def rnn_forward(params, inputs, mask, *, hidden_size, num_layers,
                batch_first=False, init_hidden=None, mxu_dtype=jnp.bfloat16):
    """Equivalent of RNN.forward for rnn_type='lstm', bidirectional=False.

    inputs: [S, B, input_size] (or [B, S, input_size] if batch_first)
    mask:   [S, B]             (or [B, S] if batch_first), float 0/1
    Returns (output [S,B,H] (or [B,S,H]), (hn [L,B,H], cn [L,B,H])).
    """
    if batch_first:
        inputs = jnp.transpose(inputs, (1, 0, 2))
        mask = jnp.transpose(mask, (1, 0))
    S, B, _ = inputs.shape
    H = hidden_size
    Hp = _round_up(H, _LANE)      # lane-aligned hidden -> aligned gate slices
    Bp = _round_up(B, _SUBLANE)   # sublane-aligned batch -> unmasked stores

    # TODO(synk): mask could be scalar-prefetched into SMEM instead of a
    # lane-padded [S,B,1] VMEM stream; kept as a VMEM input for simplicity.
    mask3 = jnp.pad(mask.astype(jnp.float32), ((0, 0), (0, Bp - B)))[:, :, None]

    if init_hidden is None:
        h0 = jnp.zeros((Bp, Hp), jnp.float32)
        c0 = jnp.zeros((Bp, Hp), jnp.float32)
    else:
        h0u, c0u = init_hidden
        h0 = jnp.pad(h0u.astype(jnp.float32), ((0, Bp - B), (0, Hp - H)))
        c0 = jnp.pad(c0u.astype(jnp.float32), ((0, Bp - B), (0, Hp - H)))

    x = jnp.pad(inputs.astype(jnp.float32), ((0, 0), (0, Bp - B), (0, 0)))

    hn, cn = [], []
    for layer in range(num_layers):
        w_ih, w_hh, b_ih, b_hh = params[layer]
        din_true = w_ih.shape[1]
        din_in = x.shape[-1]
        wih_p = _pad_gate_rows(w_ih, H, Hp)                         # [4Hp, din_true]
        if din_in != din_true:                                      # layers > 0: Hp-wide input
            wih_p = jnp.pad(wih_p, ((0, 0), (0, din_in - din_true)))
        whh_p = jnp.pad(_pad_gate_rows(w_hh, H, Hp), ((0, 0), (0, Hp - H)))  # [4Hp, Hp]
        bias_p = _pad_gate_rows((b_ih + b_hh)[:, None], H, Hp)[:, 0]         # [4Hp]

        out, h_last, c_last = lstm_layer_pallas(
            x, mask3, wih_p, whh_p, bias_p, h0, c0,
            hidden_pad=Hp, mxu_dtype=mxu_dtype)
        hn.append(h_last[:B, :H])
        cn.append(c_last[:B, :H])
        # Padded features stay exactly zero, so the padded output feeds the
        # next layer directly (its W_ih columns are zero-padded to match).
        x = out

    output = x[:, :B, :H]
    if batch_first:
        output = jnp.transpose(output, (1, 0, 2))
    return output, (jnp.stack(hn, axis=0), jnp.stack(cn, axis=0))


# ----------------------------------------------------------------------------
# Pure-JAX reference (for correctness check only)
# ----------------------------------------------------------------------------
def _lstm_cell_ref(x, h, c, w_ih, w_hh, b_ih, b_hh):
    gates = x @ w_ih.T + b_ih + h @ w_hh.T + b_hh
    H = h.shape[-1]
    i = jax.nn.sigmoid(gates[:, :H])
    f = jax.nn.sigmoid(gates[:, H:2 * H])
    g = jnp.tanh(gates[:, 2 * H:3 * H])
    o = jax.nn.sigmoid(gates[:, 3 * H:])
    c_new = f * c + i * g
    h_new = o * jnp.tanh(c_new)
    return h_new, c_new


def rnn_forward_ref(params, inputs, mask, *, hidden_size, num_layers):
    S, B, _ = inputs.shape
    mask_exp = jnp.broadcast_to(mask[:, :, None], (S, B, hidden_size))
    h0 = jnp.zeros((B, hidden_size), jnp.float32)
    c0 = jnp.zeros((B, hidden_size), jnp.float32)
    hn, cn = [], []
    x = inputs
    for layer in range(num_layers):
        w_ih, w_hh, b_ih, b_hh = params[layer]
        h, c = h0, c0
        outs = []
        for t in range(S):
            h_new, c_new = _lstm_cell_ref(x[t], h, c, w_ih, w_hh, b_ih, b_hh)
            m = mask_exp[t]
            h = h_new * m + h0 * (1.0 - m)
            c = c_new * m + c0 * (1.0 - m)
            outs.append(h)
        hn.append(h)
        cn.append(c)
        x = jnp.stack(outs, axis=0)
    return x, (jnp.stack(hn, 0), jnp.stack(cn, 0))


# ----------------------------------------------------------------------------
# Deterministic parameter init (matches nn.LSTMCell shapes; U(-1/sqrt(H), ..))
# ----------------------------------------------------------------------------
def init_params(key, input_size, hidden_size, num_layers):
    params = []
    bound = 1.0 / (hidden_size ** 0.5)
    for layer in range(num_layers):
        din = input_size if layer == 0 else hidden_size
        key, k1, k2, k3, k4 = jax.random.split(key, 5)
        w_ih = jax.random.uniform(k1, (4 * hidden_size, din),
                                  jnp.float32, -bound, bound)
        w_hh = jax.random.uniform(k2, (4 * hidden_size, hidden_size),
                                  jnp.float32, -bound, bound)
        b_ih = jax.random.uniform(k3, (4 * hidden_size,),
                                  jnp.float32, -bound, bound)
        b_hh = jax.random.uniform(k4, (4 * hidden_size,),
                                  jnp.float32, -bound, bound)
        params.append((w_ih, w_hh, b_ih, b_hh))
    return params


if __name__ == "__main__":
    SEQ, BATCH, INPUT, HIDDEN, LAYERS = 8, 2, 16, 32, 2

    key = jax.random.PRNGKey(0)
    key, kx, km = jax.random.split(key, 3)
    params = init_params(key, INPUT, HIDDEN, LAYERS)

    # Time-major inputs (batch_first=False): [seq_len, batch, input_size]
    x = jax.random.normal(kx, (SEQ, BATCH, INPUT), jnp.float32)
    # 0/1 mask, last two timesteps of batch element 1 padded out.
    mask = jnp.ones((SEQ, BATCH), jnp.float32)
    mask = mask.at[-2:, 1].set(0.0)

    # Pure-JAX reference of the PyTorch semantics.
    out_ref, (hn_ref, cn_ref) = rnn_forward_ref(
        params, x, mask, hidden_size=HIDDEN, num_layers=LAYERS)

    # 1) f32 MXU path: tight check of the kernel semantics (padding, fused
    #    projection, mask blend, gate order).
    out32, (hn32, cn32) = rnn_forward(
        params, x, mask, hidden_size=HIDDEN, num_layers=LAYERS,
        batch_first=False, mxu_dtype=jnp.float32)
    out32 = jax.block_until_ready(out32)
    assert out32.shape == (SEQ, BATCH, HIDDEN)
    assert hn32.shape == (LAYERS, BATCH, HIDDEN)
    assert cn32.shape == (LAYERS, BATCH, HIDDEN)
    assert jnp.allclose(out32, out_ref, rtol=1e-4, atol=1e-4)
    assert jnp.allclose(hn32, hn_ref, rtol=1e-4, atol=1e-4)
    assert jnp.allclose(cn32, cn_ref, rtol=1e-4, atol=1e-4)

    # 2) Default production path (bf16 weights, f32 accumulation): loose check,
    #    bf16 weight/activation rounding drifts vs. the f32 reference.
    output, (hn, cn) = rnn_forward(
        params, x, mask, hidden_size=HIDDEN, num_layers=LAYERS,
        batch_first=False)
    output = jax.block_until_ready(output)
    hn = jax.block_until_ready(hn)
    cn = jax.block_until_ready(cn)
    assert output.shape == (SEQ, BATCH, HIDDEN)
    assert hn.shape == (LAYERS, BATCH, HIDDEN)
    assert cn.shape == (LAYERS, BATCH, HIDDEN)
    assert jnp.allclose(output, out_ref, rtol=1e-1, atol=1e-1)
    assert jnp.allclose(hn, hn_ref, rtol=1e-1, atol=1e-1)
    assert jnp.allclose(cn, cn_ref, rtol=1e-1, atol=1e-1)

    print("KERNEL_OK")
</pallas_src>

<mosaic_0001>
module attributes {stable_mosaic.version = 11 : i64} {
  func.func @_lstm_layer_kernel(%arg0: i32, %arg1: i32, %arg2: memref<8x8x16xf32, #tpu.memory_space<vmem>>, %arg3: memref<8x8x1xf32, #tpu.memory_space<vmem>>, %arg4: memref<16x512xf32, #tpu.memory_space<vmem>>, %arg5: memref<128x512xf32, #tpu.memory_space<vmem>>, %arg6: memref<1x512xf32, #tpu.memory_space<vmem>>, %arg7: memref<8x128xf32, #tpu.memory_space<vmem>>, %arg8: memref<8x128xf32, #tpu.memory_space<vmem>>, %arg9: memref<8x8x128xf32, #tpu.memory_space<vmem>>, %arg10: memref<8x128xf32, #tpu.memory_space<vmem>>, %arg11: memref<8x128xf32, #tpu.memory_space<vmem>>, %arg12: memref<8x128xf32, #tpu.memory_space<vmem>>, %arg13: memref<8x128xf32, #tpu.memory_space<vmem>>) attributes {dimension_semantics = [#tpu.dimension_semantics<parallel>, #tpu.dimension_semantics<arbitrary>], iteration_bounds = array<i64: 1, 1>, scalar_prefetch = 0 : i64, scratch_operands = 2 : i64, tpu.core_type = #tpu.core_type<tc>, window_params = [{transform_indices = @transform_0, window_bounds = array<i64: 8, 8, 16>}, {transform_indices = @transform_1, window_bounds = array<i64: 8, 8, 1>}, {pipeline_mode = #tpu.pipeline_mode<synchronous>, transform_indices = @transform_2, window_bounds = array<i64: 16, 512>}, {pipeline_mode = #tpu.pipeline_mode<synchronous>, transform_indices = @transform_3, window_bounds = array<i64: 128, 512>}, {pipeline_mode = #tpu.pipeline_mode<synchronous>, transform_indices = @transform_4, window_bounds = array<i64: 1, 512>}, {pipeline_mode = #tpu.pipeline_mode<synchronous>, transform_indices = @transform_5, window_bounds = array<i64: 8, 128>}, {pipeline_mode = #tpu.pipeline_mode<synchronous>, transform_indices = @transform_6, window_bounds = array<i64: 8, 128>}, {transform_indices = @transform_7, window_bounds = array<i64: 8, 8, 128>}, {transform_indices = @transform_8, window_bounds = array<i64: 8, 128>}, {transform_indices = @transform_9, window_bounds = array<i64: 8, 128>}]} {
    %c0_i32 = arith.constant 0 : i32
    %0 = arith.cmpi eq, %arg1, %c0_i32 : i32
    %1 = arith.extui %0 : i1 to i32
    %c0_i32_0 = arith.constant 0 : i32
    %2 = arith.cmpi ne, %1, %c0_i32_0 : i32
    scf.if %2 {
      %c0_156 = arith.constant 0 : index
      %c0_157 = arith.constant 0 : index
      %447 = vector.load %arg7[%c0_156, %c0_157] : memref<8x128xf32, #tpu.memory_space<vmem>>, vector<8x128xf32>
      %c0_158 = arith.constant 0 : index
      %c0_159 = arith.constant 0 : index
      %448 = vector.load %arg12[%c0_158, %c0_159] : memref<8x128xf32, #tpu.memory_space<vmem>>, vector<8x128xf32>
      tpu.vector_store %arg12[%c0_158, %c0_159], %447 {strides = array<i32>} : memref<8x128xf32, #tpu.memory_space<vmem>>, vector<8x128xf32>,
      %c0_160 = arith.constant 0 : index
      %c0_161 = arith.constant 0 : index
      %449 = vector.load %arg8[%c0_160, %c0_161] : memref<8x128xf32, #tpu.memory_space<vmem>>, vector<8x128xf32>
      %c0_162 = arith.constant 0 : index
      %c0_163 = arith.constant 0 : index
      %450 = vector.load %arg13[%c0_162, %c0_163] : memref<8x128xf32, #tpu.memory_space<vmem>>, vector<8x128xf32>
      tpu.vector_store %arg13[%c0_162, %c0_163], %449 {strides = array<i32>} : memref<8x128xf32, #tpu.memory_space<vmem>>, vector<8x128xf32>,
    } else {
    }
    %c0 = arith.constant 0 : index
    %c0_1 = arith.constant 0 : index
    %3 = vector.load %arg7[%c0, %c0_1] : memref<8x128xf32, #tpu.memory_space<vmem>>, vector<8x128xf32>
    %c0_2 = arith.constant 0 : index
    %c0_3 = arith.constant 0 : index
    %4 = vector.load %arg8[%c0_2, %c0_3] : memref<8x128xf32, #tpu.memory_space<vmem>>, vector<8x128xf32>
    %c0_4 = arith.constant 0 : index
    %c0_5 = arith.constant 0 : index
    %5 = vector.load %arg4[%c0_4, %c0_5] : memref<16x512xf32, #tpu.memory_space<vmem>>, vector<16x512xf32>
    %c0_6 = arith.constant 0 : index
    %c0_7 = arith.constant 0 : index
    %6 = vector.load %arg5[%c0_6, %c0_7] : memref<128x512xf32, #tpu.memory_space<vmem>>, vector<128x512xf32>
    %c0_8 = arith.constant 0 : index
    %c0_9 = arith.constant 0 : index
    %7 = vector.load %arg6[%c0_8, %c0_9] : memref<1x512xf32, #tpu.memory_space<vmem>>, vector<1x512xf32>
    %c0_10 = arith.constant 0 : index
    %c0_11 = arith.constant 0 : index
    %8 = vector.load %arg12[%c0_10, %c0_11] : memref<8x128xf32, #tpu.memory_space<vmem>>, vector<8x128xf32>
    %c0_12 = arith.constant 0 : index
    %c0_13 = arith.constant 0 : index
    %9 = vector.load %arg13[%c0_12, %c0_13] : memref<8x128xf32, #tpu.memory_space<vmem>>, vector<8x128xf32>
    %c0_i32_14 = arith.constant 0 : i32
    %10 = arith.index_cast %c0_i32_14 : i32 to index
    %c0_15 = arith.constant 0 : index
    %c0_16 = arith.constant 0 : index
    %11 = vector.load %arg2[%10, %c0_15, %c0_16] : memref<8x8x16xf32, #tpu.memory_space<vmem>>, vector<1x8x16xf32>
    %12 = vector.shape_cast %11 : vector<1x8x16xf32> to vector<8x16xf32>
    %13 = arith.index_cast %c0_i32_14 : i32 to index
    %c0_17 = arith.constant 0 : index
    %c0_18 = arith.constant 0 : index
    %14 = vector.load %arg3[%13, %c0_17, %c0_18] : memref<8x8x1xf32, #tpu.memory_space<vmem>>, vector<1x8x1xf32>
    %15 = vector.shape_cast %14 : vector<1x8x1xf32> to vector<8x1xf32>
    %cst = arith.constant dense<0.000000e+00> : vector<8x512xf32>
    %16 = tpu.matmul %12, %5, %cst {dimension_numbers = #tpu.dot_dimension_numbers<[1], [0], [0], [1], [0, 0, 1, 1], [], []>} : vector<8x16xf32>, vector<16x512xf32>, vector<8x512xf32> -> vector<8x512xf32>
    %17 = vector.broadcast %7 : vector<1x512xf32> to vector<8x512xf32>
    %18 = arith.addf %17, %16 : vector<8x512xf32>
    %cst_19 = arith.constant dense<0.000000e+00> : vector<8x512xf32>
    %19 = tpu.matmul %8, %6, %cst_19 {dimension_numbers = #tpu.dot_dimension_numbers<[1], [0], [0], [1], [0, 0, 1, 1], [], []>} : vector<8x128xf32>, vector<128x512xf32>, vector<8x512xf32> -> vector<8x512xf32>
    %20 = arith.addf %18, %19 : vector<8x512xf32>
    %21 = vector.extract_strided_slice %20 {offsets = [0, 0], sizes = [8, 128], strides = [1, 1]} : vector<8x512xf32> to vector<8x128xf32>
    %cst_20 = arith.constant 5.000000e-01 : f32
    %22 = vector.broadcast %cst_20 : f32 to vector<8x128xf32>
    %23 = arith.mulf %22, %21 : vector<8x128xf32>
    %24 = math.tanh %23 : vector<8x128xf32>
    %cst_21 = arith.constant 5.000000e-01 : f32
    %25 = vector.broadcast %cst_21 : f32 to vector<8x128xf32>
    %26 = arith.mulf %25, %24 : vector<8x128xf32>
    %cst_22 = arith.constant 5.000000e-01 : f32
    %27 = vector.broadcast %cst_22 : f32 to vector<8x128xf32>
    %28 = arith.addf %26, %27 : vector<8x128xf32>
    %29 = vector.extract_strided_slice %20 {offsets = [0, 128], sizes = [8, 128], strides = [1, 1]} : vector<8x512xf32> to vector<8x128xf32>
    %cst_23 = arith.constant 5.000000e-01 : f32
    %30 = vector.broadcast %cst_23 : f32 to vector<8x128xf32>
    %31 = arith.mulf %30, %29 : vector<8x128xf32>
    %32 = math.tanh %31 : vector<8x128xf32>
    %cst_24 = arith.constant 5.000000e-01 : f32
    %33 = vector.broadcast %cst_24 : f32 to vector<8x128xf32>
    %34 = arith.mulf %33, %32 : vector<8x128xf32>
    %cst_25 = arith.constant 5.000000e-01 : f32
    %35 = vector.broadcast %cst_25 : f32 to vector<8x128xf32>
    %36 = arith.addf %34, %35 : vector<8x128xf32>
    %37 = vector.extract_strided_slice %20 {offsets = [0, 256], sizes = [8, 128], strides = [1, 1]} : vector<8x512xf32> to vector<8x128xf32>
    %38 = math.tanh %37 : vector<8x128xf32>
    %39 = vector.extract_strided_slice %20 {offsets = [0, 384], sizes = [8, 128], strides = [1, 1]} : vector<8x512xf32> to vector<8x128xf32>
    %cst_26 = arith.constant 5.000000e-01 : f32
    %40 = vector.broadcast %cst_26 : f32 to vector<8x128xf32>
    %41 = arith.mulf %40, %39 : vector<8x128xf32>
    %42 = math.tanh %41 : vector<8x128xf32>
    %cst_27 = arith.constant 5.000000e-01 : f32
    %43 = vector.broadcast %cst_27 : f32 to vector<8x128xf32>
    %44 = arith.mulf %43, %42 : vector<8x128xf32>
    %cst_28 = arith.constant 5.000000e-01 : f32
    %45 = vector.broadcast %cst_28 : f32 to vector<8x128xf32>
    %46 = arith.addf %44, %45 : vector<8x128xf32>
    %47 = arith.mulf %36, %9 : vector<8x128xf32>
    %48 = arith.mulf %28, %38 : vector<8x128xf32>
    %49 = arith.addf %47, %48 : vector<8x128xf32>
    %50 = math.tanh %49 : vector<8x128xf32>
    %51 = arith.mulf %46, %50 : vector<8x128xf32>
    %52 = arith.subf %51, %3 : vector<8x128xf32>
    %53 = vector.broadcast %15 : vector<8x1xf32> to vector<8x128xf32>
    %54 = arith.mulf %53, %52 : vector<8x128xf32>
    %55 = arith.addf %3, %54 : vector<8x128xf32>
    %56 = arith.subf %49, %4 : vector<8x128xf32>
    %57 = vector.broadcast %15 : vector<8x1xf32> to vector<8x128xf32>
    %58 = arith.mulf %57, %56 : vector<8x128xf32>
    %59 = arith.addf %4, %58 : vector<8x128xf32>
    %60 = arith.index_cast %c0_i32_14 : i32 to index
    %c0_29 = arith.constant 0 : index
    %c0_30 = arith.constant 0 : index
    %61 = vector.load %arg9[%60, %c0_29, %c0_30] : memref<8x8x128xf32, #tpu.memory_space<vmem>>, vector<1x8x128xf32>
    %62 = vector.shape_cast %61 : vector<1x8x128xf32> to vector<8x128xf32>
    %63 = vector.shape_cast %55 : vector<8x128xf32> to vector<1x8x128xf32>
    tpu.vector_store %arg9[%60, %c0_29, %c0_30], %63 {strides = array<i32>} : memref<8x8x128xf32, #tpu.memory_space<vmem>>, vector<1x8x128xf32>,
    %c1_i32 = arith.constant 1 : i32
    %64 = arith.index_cast %c1_i32 : i32 to index
    %c0_31 = arith.constant 0 : index
    %c0_32 = arith.constant 0 : index
    %65 = vector.load %arg2[%64, %c0_31, %c0_32] : memref<8x8x16xf32, #tpu.memory_space<vmem>>, vector<1x8x16xf32>
    %66 = vector.shape_cast %65 : vector<1x8x16xf32> to vector<8x16xf32>
    %67 = arith.index_cast %c1_i32 : i32 to index
    %c0_33 = arith.constant 0 : index
    %c0_34 = arith.constant 0 : index
    %68 = vector.load %arg3[%67, %c0_33, %c0_34] : memref<8x8x1xf32, #tpu.memory_space<vmem>>, vector<1x8x1xf32>
    %69 = vector.shape_cast %68 : vector<1x8x1xf32> to vector<8x1xf32>
    %cst_35 = arith.constant dense<0.000000e+00> : vector<8x512xf32>
    %70 = tpu.matmul %66, %5, %cst_35 {dimension_numbers = #tpu.dot_dimension_numbers<[1], [0], [0], [1], [0, 0, 1, 1], [], []>} : vector<8x16xf32>, vector<16x512xf32>, vector<8x512xf32> -> vector<8x512xf32>
    %71 = vector.broadcast %7 : vector<1x512xf32> to vector<8x512xf32>
    %72 = arith.addf %71, %70 : vector<8x512xf32>
    %cst_36 = arith.constant dense<0.000000e+00> : vector<8x512xf32>
    %73 = tpu.matmul %55, %6, %cst_36 {dimension_numbers = #tpu.dot_dimension_numbers<[1], [0], [0], [1], [0, 0, 1, 1], [], []>} : vector<8x128xf32>, vector<128x512xf32>, vector<8x512xf32> -> vector<8x512xf32>
    %74 = arith.addf %72, %73 : vector<8x512xf32>
    %75 = vector.extract_strided_slice %74 {offsets = [0, 0], sizes = [8, 128], strides = [1, 1]} : vector<8x512xf32> to vector<8x128xf32>
    %cst_37 = arith.constant 5.000000e-01 : f32
    %76 = vector.broadcast %cst_37 : f32 to vector<8x128xf32>
    %77 = arith.mulf %76, %75 : vector<8x128xf32>
    %78 = math.tanh %77 : vector<8x128xf32>
    %cst_38 = arith.constant 5.000000e-01 : f32
    %79 = vector.broadcast %cst_38 : f32 to vector<8x128xf32>
    %80 = arith.mulf %79, %78 : vector<8x128xf32>
    %cst_39 = arith.constant 5.000000e-01 : f32
    %81 = vector.broadcast %cst_39 : f32 to vector<8x128xf32>
    %82 = arith.addf %80, %81 : vector<8x128xf32>
    %83 = vector.extract_strided_slice %74 {offsets = [0, 128], sizes = [8, 128], strides = [1, 1]} : vector<8x512xf32> to vector<8x128xf32>
    %cst_40 = arith.constant 5.000000e-01 : f32
    %84 = vector.broadcast %cst_40 : f32 to vector<8x128xf32>
    %85 = arith.mulf %84, %83 : vector<8x128xf32>
    %86 = math.tanh %85 : vector<8x128xf32>
    %cst_41 = arith.constant 5.000000e-01 : f32
    %87 = vector.broadcast %cst_41 : f32 to vector<8x128xf32>
    %88 = arith.mulf %87, %86 : vector<8x128xf32>
    %cst_42 = arith.constant 5.000000e-01 : f32
    %89 = vector.broadcast %cst_42 : f32 to vector<8x128xf32>
    %90 = arith.addf %88, %89 : vector<8x128xf32>
    %91 = vector.extract_strided_slice %74 {offsets = [0, 256], sizes = [8, 128], strides = [1, 1]} : vector<8x512xf32> to vector<8x128xf32>
    %92 = math.tanh %91 : vector<8x128xf32>
    %93 = vector.extract_strided_slice %74 {offsets = [0, 384], sizes = [8, 128], strides = [1, 1]} : vector<8x512xf32> to vector<8x128xf32>
    %cst_43 = arith.constant 5.000000e-01 : f32
    %94 = vector.broadcast %cst_43 : f32 to vector<8x128xf32>
    %95 = arith.mulf %94, %93 : vector<8x128xf32>
    %96 = math.tanh %95 : vector<8x128xf32>
    %cst_44 = arith.constant 5.000000e-01 : f32
    %97 = vector.broadcast %cst_44 : f32 to vector<8x128xf32>
    %98 = arith.mulf %97, %96 : vector<8x128xf32>
    %cst_45 = arith.constant 5.000000e-01 : f32
    %99 = vector.broadcast %cst_45 : f32 to vector<8x128xf32>
    %100 = arith.addf %98, %99 : vector<8x128xf32>
    %101 = arith.mulf %90, %59 : vector<8x128xf32>
    %102 = arith.mulf %82, %92 : vector<8x128xf32>
    %103 = arith.addf %101, %102 : vector<8x128xf32>
    %104 = math.tanh %103 : vector<8x128xf32>
    %105 = arith.mulf %100, %104 : vector<8x128xf32>
    %106 = arith.subf %105, %3 : vector<8x128xf32>
    %107 = vector.broadcast %69 : vector<8x1xf32> to vector<8x128xf32>
    %108 = arith.mulf %107, %106 : vector<8x128xf32>
    %109 = arith.addf %3, %108 : vector<8x128xf32>
    %110 = arith.subf %103, %4 : vector<8x128xf32>
    %111 = vector.broadcast %69 : vector<8x1xf32> to vector<8x128xf32>
    %112 = arith.mulf %111, %110 : vector<8x128xf32>
    %113 = arith.addf %4, %112 : vector<8x128xf32>
    %114 = arith.index_cast %c1_i32 : i32 to index
    %c0_46 = arith.constant 0 : index
    %c0_47 = arith.constant 0 : index
    %115 = vector.load %arg9[%114, %c0_46, %c0_47] : memref<8x8x128xf32, #tpu.memory_space<vmem>>, vector<1x8x128xf32>
    %116 = vector.shape_cast %115 : vector<1x8x128xf32> to vector<8x128xf32>
    %117 = vector.shape_cast %109 : vector<8x128xf32> to vector<1x8x128xf32>
    tpu.vector_store %arg9[%114, %c0_46, %c0_47], %117 {strides = array<i32>} : memref<8x8x128xf32, #tpu.memory_space<vmem>>, vector<1x8x128xf32>,
    %c2_i32 = arith.constant 2 : i32
    %118 = arith.index_cast %c2_i32 : i32 to index
    %c0_48 = arith.constant 0 : index
    %c0_49 = arith.constant 0 : index
    %119 = vector.load %arg2[%118, %c0_48, %c0_49] : memref<8x8x16xf32, #tpu.memory_space<vmem>>, vector<1x8x16xf32>
    %120 = vector.shape_cast %119 : vector<1x8x16xf32> to vector<8x16xf32>
    %121 = arith.index_cast %c2_i32 : i32 to index
    %c0_50 = arith.constant 0 : index
    %c0_51 = arith.constant 0 : index
    %122 = vector.load %arg3[%121, %c0_50, %c0_51] : memref<8x8x1xf32, #tpu.memory_space<vmem>>, vector<1x8x1xf32>
    %123 = vector.shape_cast %122 : vector<1x8x1xf32> to vector<8x1xf32>
    %cst_52 = arith.constant dense<0.000000e+00> : vector<8x512xf32>
    %124 = tpu.matmul %120, %5, %cst_52 {dimension_numbers = #tpu.dot_dimension_numbers<[1], [0], [0], [1], [0, 0, 1, 1], [], []>} : vector<8x16xf32>, vector<16x512xf32>, vector<8x512xf32> -> vector<8x512xf32>
    %125 = vector.broadcast %7 : vector<1x512xf32> to vector<8x512xf32>
    %126 = arith.addf %125, %124 : vector<8x512xf32>
    %cst_53 = arith.constant dense<0.000000e+00> : vector<8x512xf32>
    %127 = tpu.matmul %109, %6, %cst_53 {dimension_numbers = #tpu.dot_dimension_numbers<[1], [0], [0], [1], [0, 0, 1, 1], [], []>} : vector<8x128xf32>, vector<128x512xf32>, vector<8x512xf32> -> vector<8x512xf32>
    %128 = arith.addf %126, %127 : vector<8x512xf32>
    %129 = vector.extract_strided_slice %128 {offsets = [0, 0], sizes = [8, 128], strides = [1, 1]} : vector<8x512xf32> to vector<8x128xf32>
    %cst_54 = arith.constant 5.000000e-01 : f32
    %130 = vector.broadcast %cst_54 : f32 to vector<8x128xf32>
    %131 = arith.mulf %130, %129 : vector<8x128xf32>
    %132 = math.tanh %131 : vector<8x128xf32>
    %cst_55 = arith.constant 5.000000e-01 : f32
    %133 = vector.broadcast %cst_55 : f32 to vector<8x128xf32>
    %134 = arith.mulf %133, %132 : vector<8x128xf32>
    %cst_56 = arith.constant 5.000000e-01 : f32
    %135 = vector.broadcast %cst_56 : f32 to vector<8x128xf32>
    %136 = arith.addf %134, %135 : vector<8x128xf32>
    %137 = vector.extract_strided_slice %128 {offsets = [0, 128], sizes = [8, 128], strides = [1, 1]} : vector<8x512xf32> to vector<8x128xf32>
    %cst_57 = arith.constant 5.000000e-01 : f32
    %138 = vector.broadcast %cst_57 : f32 to vector<8x128xf32>
    %139 = arith.mulf %138, %137 : vector<8x128xf32>
    %140 = math.tanh %139 : vector<8x128xf32>
    %cst_58 = arith.constant 5.000000e-01 : f32
    %141 = vector.broadcast %cst_58 : f32 to vector<8x128xf32>
    %142 = arith.mulf %141, %140 : vector<8x128xf32>
    %cst_59 = arith.constant 5.000000e-01 : f32
    %143 = vector.broadcast %cst_59 : f32 to vector<8x128xf32>
    %144 = arith.addf %142, %143 : vector<8x128xf32>
    %145 = vector.extract_strided_slice %128 {offsets = [0, 256], sizes = [8, 128], strides = [1, 1]} : vector<8x512xf32> to vector<8x128xf32>
    %146 = math.tanh %145 : vector<8x128xf32>
    %147 = vector.extract_strided_slice %128 {offsets = [0, 384], sizes = [8, 128], strides = [1, 1]} : vector<8x512xf32> to vector<8x128xf32>
    %cst_60 = arith.constant 5.000000e-01 : f32
    %148 = vector.broadcast %cst_60 : f32 to vector<8x128xf32>
    %149 = arith.mulf %148, %147 : vector<8x128xf32>
    %150 = math.tanh %149 : vector<8x128xf32>
    %cst_61 = arith.constant 5.000000e-01 : f32
    %151 = vector.broadcast %cst_61 : f32 to vector<8x128xf32>
    %152 = arith.mulf %151, %150 : vector<8x128xf32>
    %cst_62 = arith.constant 5.000000e-01 : f32
    %153 = vector.broadcast %cst_62 : f32 to vector<8x128xf32>
    %154 = arith.addf %152, %153 : vector<8x128xf32>
    %155 = arith.mulf %144, %113 : vector<8x128xf32>
    %156 = arith.mulf %136, %146 : vector<8x128xf32>
    %157 = arith.addf %155, %156 : vector<8x128xf32>
    %158 = math.tanh %157 : vector<8x128xf32>
    %159 = arith.mulf %154, %158 : vector<8x128xf32>
    %160 = arith.subf %159, %3 : vector<8x128xf32>
    %161 = vector.broadcast %123 : vector<8x1xf32> to vector<8x128xf32>
    %162 = arith.mulf %161, %160 : vector<8x128xf32>
    %163 = arith.addf %3, %162 : vector<8x128xf32>
    %164 = arith.subf %157, %4 : vector<8x128xf32>
    %165 = vector.broadcast %123 : vector<8x1xf32> to vector<8x128xf32>
    %166 = arith.mulf %165, %164 : vector<8x128xf32>
    %167 = arith.addf %4, %166 : vector<8x128xf32>
    %168 = arith.index_cast %c2_i32 : i32 to index
    %c0_63 = arith.constant 0 : index
    %c0_64 = arith.constant 0 : index
    %169 = vector.load %arg9[%168, %c0_63, %c0_64] : memref<8x8x128xf32, #tpu.memory_space<vmem>>, vector<1x8x128xf32>
    %170 = vector.shape_cast %169 : vector<1x8x128xf32> to vector<8x128xf32>
    %171 = vector.shape_cast %163 : vector<8x128xf32> to vector<1x8x128xf32>
    tpu.vector_store %arg9[%168, %c0_63, %c0_64], %171 {strides = array<i32>} : memref<8x8x128xf32, #tpu.memory_space<vmem>>, vector<1x8x128xf32>,
    %c3_i32 = arith.constant 3 : i32
    %172 = arith.index_cast %c3_i32 : i32 to index
    %c0_65 = arith.constant 0 : index
    %c0_66 = arith.constant 0 : index
    %173 = vector.load %arg2[%172, %c0_65, %c0_66] : memref<8x8x16xf32, #tpu.memory_space<vmem>>, vector<1x8x16xf32>
    %174 = vector.shape_cast %173 : vector<1x8x16xf32> to vector<8x16xf32>
    %175 = arith.index_cast %c3_i32 : i32 to index
    %c0_67 = arith.constant 0 : index
    %c0_68 = arith.constant 0 : index
    %176 = vector.load %arg3[%175, %c0_67, %c0_68] : memref<8x8x1xf32, #tpu.memory_space<vmem>>, vector<1x8x1xf32>
    %177 = vector.shape_cast %176 : vector<1x8x1xf32> to vector<8x1xf32>
    %cst_69 = arith.constant dense<0.000000e+00> : vector<8x512xf32>
    %178 = tpu.matmul %174, %5, %cst_69 {dimension_numbers = #tpu.dot_dimension_numbers<[1], [0], [0], [1], [0, 0, 1, 1], [], []>} : vector<8x16xf32>, vector<16x512xf32>, vector<8x512xf32> -> vector<8x512xf32>
    %179 = vector.broadcast %7 : vector<1x512xf32> to vector<8x512xf32>
    %180 = arith.addf %179, %178 : vector<8x512xf32>
    %cst_70 = arith.constant dense<0.000000e+00> : vector<8x512xf32>
    %181 = tpu.matmul %163, %6, %cst_70 {dimension_numbers = #tpu.dot_dimension_numbers<[1], [0], [0], [1], [0, 0, 1, 1], [], []>} : vector<8x128xf32>, vector<128x512xf32>, vector<8x512xf32> -> vector<8x512xf32>
    %182 = arith.addf %180, %181 : vector<8x512xf32>
    %183 = vector.extract_strided_slice %182 {offsets = [0, 0], sizes = [8, 128], strides = [1, 1]} : vector<8x512xf32> to vector<8x128xf32>
    %cst_71 = arith.constant 5.000000e-01 : f32
    %184 = vector.broadcast %cst_71 : f32 to vector<8x128xf32>
    %185 = arith.mulf %184, %183 : vector<8x128xf32>
    %186 = math.tanh %185 : vector<8x128xf32>
    %cst_72 = arith.constant 5.000000e-01 : f32
    %187 = vector.broadcast %cst_72 : f32 to vector<8x128xf32>
    %188 = arith.mulf %187, %186 : vector<8x128xf32>
    %cst_73 = arith.constant 5.000000e-01 : f32
    %189 = vector.broadcast %cst_73 : f32 to vector<8x128xf32>
    %190 = arith.addf %188, %189 : vector<8x128xf32>
    %191 = vector.extract_strided_slice %182 {offsets = [0, 128], sizes = [8, 128], strides = [1, 1]} : vector<8x512xf32> to vector<8x128xf32>
    %cst_74 = arith.constant 5.000000e-01 : f32
    %192 = vector.broadcast %cst_74 : f32 to vector<8x128xf32>
    %193 = arith.mulf %192, %191 : vector<8x128xf32>
    %194 = math.tanh %193 : vector<8x128xf32>
    %cst_75 = arith.constant 5.000000e-01 : f32
    %195 = vector.broadcast %cst_75 : f32 to vector<8x128xf32>
    %196 = arith.mulf %195, %194 : vector<8x128xf32>
    %cst_76 = arith.constant 5.000000e-01 : f32
    %197 = vector.broadcast %cst_76 : f32 to vector<8x128xf32>
    %198 = arith.addf %196, %197 : vector<8x128xf32>
    %199 = vector.extract_strided_slice %182 {offsets = [0, 256], sizes = [8, 128], strides = [1, 1]} : vector<8x512xf32> to vector<8x128xf32>
    %200 = math.tanh %199 : vector<8x128xf32>
    %201 = vector.extract_strided_slice %182 {offsets = [0, 384], sizes = [8, 128], strides = [1, 1]} : vector<8x512xf32> to vector<8x128xf32>
    %cst_77 = arith.constant 5.000000e-01 : f32
    %202 = vector.broadcast %cst_77 : f32 to vector<8x128xf32>
    %203 = arith.mulf %202, %201 : vector<8x128xf32>
    %204 = math.tanh %203 : vector<8x128xf32>
    %cst_78 = arith.constant 5.000000e-01 : f32
    %205 = vector.broadcast %cst_78 : f32 to vector<8x128xf32>
    %206 = arith.mulf %205, %204 : vector<8x128xf32>
    %cst_79 = arith.constant 5.000000e-01 : f32
    %207 = vector.broadcast %cst_79 : f32 to vector<8x128xf32>
    %208 = arith.addf %206, %207 : vector<8x128xf32>
    %209 = arith.mulf %198, %167 : vector<8x128xf32>
    %210 = arith.mulf %190, %200 : vector<8x128xf32>
    %211 = arith.addf %209, %210 : vector<8x128xf32>
    %212 = math.tanh %211 : vector<8x128xf32>
    %213 = arith.mulf %208, %212 : vector<8x128xf32>
    %214 = arith.subf %213, %3 : vector<8x128xf32>
    %215 = vector.broadcast %177 : vector<8x1xf32> to vector<8x128xf32>
    %216 = arith.mulf %215, %214 : vector<8x128xf32>
    %217 = arith.addf %3, %216 : vector<8x128xf32>
    %218 = arith.subf %211, %4 : vector<8x128xf32>
    %219 = vector.broadcast %177 : vector<8x1xf32> to vector<8x128xf32>
    %220 = arith.mulf %219, %218 : vector<8x128xf32>
    %221 = arith.addf %4, %220 : vector<8x128xf32>
    %222 = arith.index_cast %c3_i32 : i32 to index
    %c0_80 = arith.constant 0 : index
    %c0_81 = arith.constant 0 : index
    %223 = vector.load %arg9[%222, %c0_80, %c0_81] : memref<8x8x128xf32, #tpu.memory_space<vmem>>, vector<1x8x128xf32>
    %224 = vector.shape_cast %223 : vector<1x8x128xf32> to vector<8x128xf32>
    %225 = vector.shape_cast %217 : vector<8x128xf32> to vector<1x8x128xf32>
    tpu.vector_store %arg9[%222, %c0_80, %c0_81], %225 {strides = array<i32>} : memref<8x8x128xf32, #tpu.memory_space<vmem>>, vector<1x8x128xf32>,
    %c4_i32 = arith.constant 4 : i32
    %226 = arith.index_cast %c4_i32 : i32 to index
    %c0_82 = arith.constant 0 : index
    %c0_83 = arith.constant 0 : index
    %227 = vector.load %arg2[%226, %c0_82, %c0_83] : memref<8x8x16xf32, #tpu.memory_space<vmem>>, vector<1x8x16xf32>
    %228 = vector.shape_cast %227 : vector<1x8x16xf32> to vector<8x16xf32>
    %229 = arith.index_cast %c4_i32 : i32 to index
    %c0_84 = arith.constant 0 : index
    %c0_85 = arith.constant 0 : index
    %230 = vector.load %arg3[%229, %c0_84, %c0_85] : memref<8x8x1xf32, #tpu.memory_space<vmem>>, vector<1x8x1xf32>
    %231 = vector.shape_cast %230 : vector<1x8x1xf32> to vector<8x1xf32>
    %cst_86 = arith.constant dense<0.000000e+00> : vector<8x512xf32>
    %232 = tpu.matmul %228, %5, %cst_86 {dimension_numbers = #tpu.dot_dimension_numbers<[1], [0], [0], [1], [0, 0, 1, 1], [], []>} : vector<8x16xf32>, vector<16x512xf32>, vector<8x512xf32> -> vector<8x512xf32>
    %233 = vector.broadcast %7 : vector<1x512xf32> to vector<8x512xf32>
    %234 = arith.addf %233, %232 : vector<8x512xf32>
    %cst_87 = arith.constant dense<0.000000e+00> : vector<8x512xf32>
    %235 = tpu.matmul %217, %6, %cst_87 {dimension_numbers = #tpu.dot_dimension_numbers<[1], [0], [0], [1], [0, 0, 1, 1], [], []>} : vector<8x128xf32>, vector<128x512xf32>, vector<8x512xf32> -> vector<8x512xf32>
    %236 = arith.addf %234, %235 : vector<8x512xf32>
    %237 = vector.extract_strided_slice %236 {offsets = [0, 0], sizes = [8, 128], strides = [1, 1]} : vector<8x512xf32> to vector<8x128xf32>
    %cst_88 = arith.constant 5.000000e-01 : f32
    %238 = vector.broadcast %cst_88 : f32 to vector<8x128xf32>
    %239 = arith.mulf %238, %237 : vector<8x128xf32>
    %240 = math.tanh %239 : vector<8x128xf32>
    %cst_89 = arith.constant 5.000000e-01 : f32
    %241 = vector.broadcast %cst_89 : f32 to vector<8x128xf32>
    %242 = arith.mulf %241, %240 : vector<8x128xf32>
    %cst_90 = arith.constant 5.000000e-01 : f32
    %243 = vector.broadcast %cst_90 : f32 to vector<8x128xf32>
    %244 = arith.addf %242, %243 : vector<8x128xf32>
    %245 = vector.extract_strided_slice %236 {offsets = [0, 128], sizes = [8, 128], strides = [1, 1]} : vector<8x512xf32> to vector<8x128xf32>
    %cst_91 = arith.constant 5.000000e-01 : f32
    %246 = vector.broadcast %cst_91 : f32 to vector<8x128xf32>
    %247 = arith.mulf %246, %245 : vector<8x128xf32>
    %248 = math.tanh %247 : vector<8x128xf32>
    %cst_92 = arith.constant 5.000000e-01 : f32
    %249 = vector.broadcast %cst_92 : f32 to vector<8x128xf32>
    %250 = arith.mulf %249, %248 : vector<8x128xf32>
    %cst_93 = arith.constant 5.000000e-01 : f32
    %251 = vector.broadcast %cst_93 : f32 to vector<8x128xf32>
    %252 = arith.addf %250, %251 : vector<8x128xf32>
    %253 = vector.extract_strided_slice %236 {offsets = [0, 256], sizes = [8, 128], strides = [1, 1]} : vector<8x512xf32> to vector<8x128xf32>
    %254 = math.tanh %253 : vector<8x128xf32>
    %255 = vector.extract_strided_slice %236 {offsets = [0, 384], sizes = [8, 128], strides = [1, 1]} : vector<8x512xf32> to vector<8x128xf32>
    %cst_94 = arith.constant 5.000000e-01 : f32
    %256 = vector.broadcast %cst_94 : f32 to vector<8x128xf32>
    %257 = arith.mulf %256, %255 : vector<8x128xf32>
    %258 = math.tanh %257 : vector<8x128xf32>
    %cst_95 = arith.constant 5.000000e-01 : f32
    %259 = vector.broadcast %cst_95 : f32 to vector<8x128xf32>
    %260 = arith.mulf %259, %258 : vector<8x128xf32>
    %cst_96 = arith.constant 5.000000e-01 : f32
    %261 = vector.broadcast %cst_96 : f32 to vector<8x128xf32>
    %262 = arith.addf %260, %261 : vector<8x128xf32>
    %263 = arith.mulf %252, %221 : vector<8x128xf32>
    %264 = arith.mulf %244, %254 : vector<8x128xf32>
    %265 = arith.addf %263, %264 : vector<8x128xf32>
    %266 = math.tanh %265 : vector<8x128xf32>
    %267 = arith.mulf %262, %266 : vector<8x128xf32>
    %268 = arith.subf %267, %3 : vector<8x128xf32>
    %269 = vector.broadcast %231 : vector<8x1xf32> to vector<8x128xf32>
    %270 = arith.mulf %269, %268 : vector<8x128xf32>
    %271 = arith.addf %3, %270 : vector<8x128xf32>
    %272 = arith.subf %265, %4 : vector<8x128xf32>
    %273 = vector.broadcast %231 : vector<8x1xf32> to vector<8x128xf32>
    %274 = arith.mulf %273, %272 : vector<8x128xf32>
    %275 = arith.addf %4, %274 : vector<8x128xf32>
    %276 = arith.index_cast %c4_i32 : i32 to index
    %c0_97 = arith.constant 0 : index
    %c0_98 = arith.constant 0 : index
    %277 = vector.load %arg9[%276, %c0_97, %c0_98] : memref<8x8x128xf32, #tpu.memory_space<vmem>>, vector<1x8x128xf32>
    %278 = vector.shape_cast %277 : vector<1x8x128xf32> to vector<8x128xf32>
    %279 = vector.shape_cast %271 : vector<8x128xf32> to vector<1x8x128xf32>
    tpu.vector_store %arg9[%276, %c0_97, %c0_98], %279 {strides = array<i32>} : memref<8x8x128xf32, #tpu.memory_space<vmem>>, vector<1x8x128xf32>,
    %c5_i32 = arith.constant 5 : i32
    %280 = arith.index_cast %c5_i32 : i32 to index
    %c0_99 = arith.constant 0 : index
    %c0_100 = arith.constant 0 : index
    %281 = vector.load %arg2[%280, %c0_99, %c0_100] : memref<8x8x16xf32, #tpu.memory_space<vmem>>, vector<1x8x16xf32>
    %282 = vector.shape_cast %281 : vector<1x8x16xf32> to vector<8x16xf32>
    %283 = arith.index_cast %c5_i32 : i32 to index
    %c0_101 = arith.constant 0 : index
    %c0_102 = arith.constant 0 : index
    %284 = vector.load %arg3[%283, %c0_101, %c0_102] : memref<8x8x1xf32, #tpu.memory_space<vmem>>, vector<1x8x1xf32>
    %285 = vector.shape_cast %284 : vector<1x8x1xf32> to vector<8x1xf32>
    %cst_103 = arith.constant dense<0.000000e+00> : vector<8x512xf32>
    %286 = tpu.matmul %282, %5, %cst_103 {dimension_numbers = #tpu.dot_dimension_numbers<[1], [0], [0], [1], [0, 0, 1, 1], [], []>} : vector<8x16xf32>, vector<16x512xf32>, vector<8x512xf32> -> vector<8x512xf32>
    %287 = vector.broadcast %7 : vector<1x512xf32> to vector<8x512xf32>
    %288 = arith.addf %287, %286 : vector<8x512xf32>
    %cst_104 = arith.constant dense<0.000000e+00> : vector<8x512xf32>
    %289 = tpu.matmul %271, %6, %cst_104 {dimension_numbers = #tpu.dot_dimension_numbers<[1], [0], [0], [1], [0, 0, 1, 1], [], []>} : vector<8x128xf32>, vector<128x512xf32>, vector<8x512xf32> -> vector<8x512xf32>
    %290 = arith.addf %288, %289 : vector<8x512xf32>
    %291 = vector.extract_strided_slice %290 {offsets = [0, 0], sizes = [8, 128], strides = [1, 1]} : vector<8x512xf32> to vector<8x128xf32>
    %cst_105 = arith.constant 5.000000e-01 : f32
    %292 = vector.broadcast %cst_105 : f32 to vector<8x128xf32>
    %293 = arith.mulf %292, %291 : vector<8x128xf32>
    %294 = math.tanh %293 : vector<8x128xf32>
    %cst_106 = arith.constant 5.000000e-01 : f32
    %295 = vector.broadcast %cst_106 : f32 to vector<8x128xf32>
    %296 = arith.mulf %295, %294 : vector<8x128xf32>
    %cst_107 = arith.constant 5.000000e-01 : f32
    %297 = vector.broadcast %cst_107 : f32 to vector<8x128xf32>
    %298 = arith.addf %296, %297 : vector<8x128xf32>
    %299 = vector.extract_strided_slice %290 {offsets = [0, 128], sizes = [8, 128], strides = [1, 1]} : vector<8x512xf32> to vector<8x128xf32>
    %cst_108 = arith.constant 5.000000e-01 : f32
    %300 = vector.broadcast %cst_108 : f32 to vector<8x128xf32>
    %301 = arith.mulf %300, %299 : vector<8x128xf32>
    %302 = math.tanh %301 : vector<8x128xf32>
    %cst_109 = arith.constant 5.000000e-01 : f32
    %303 = vector.broadcast %cst_109 : f32 to vector<8x128xf32>
    %304 = arith.mulf %303, %302 : vector<8x128xf32>
    %cst_110 = arith.constant 5.000000e-01 : f32
    %305 = vector.broadcast %cst_110 : f32 to vector<8x128xf32>
    %306 = arith.addf %304, %305 : vector<8x128xf32>
    %307 = vector.extract_strided_slice %290 {offsets = [0, 256], sizes = [8, 128], strides = [1, 1]} : vector<8x512xf32> to vector<8x128xf32>
    %308 = math.tanh %307 : vector<8x128xf32>
    %309 = vector.extract_strided_slice %290 {offsets = [0, 384], sizes = [8, 128], strides = [1, 1]} : vector<8x512xf32> to vector<8x128xf32>
    %cst_111 = arith.constant 5.000000e-01 : f32
    %310 = vector.broadcast %cst_111 : f32 to vector<8x128xf32>
    %311 = arith.mulf %310, %309 : vector<8x128xf32>
    %312 = math.tanh %311 : vector<8x128xf32>
    %cst_112 = arith.constant 5.000000e-01 : f32
    %313 = vector.broadcast %cst_112 : f32 to vector<8x128xf32>
    %314 = arith.mulf %313, %312 : vector<8x128xf32>
    %cst_113 = arith.constant 5.000000e-01 : f32
    %315 = vector.broadcast %cst_113 : f32 to vector<8x128xf32>
    %316 = arith.addf %314, %315 : vector<8x128xf32>
    %317 = arith.mulf %306, %275 : vector<8x128xf32>
    %318 = arith.mulf %298, %308 : vector<8x128xf32>
    %319 = arith.addf %317, %318 : vector<8x128xf32>
    %320 = math.tanh %319 : vector<8x128xf32>
    %321 = arith.mulf %316, %320 : vector<8x128xf32>
    %322 = arith.subf %321, %3 : vector<8x128xf32>
    %323 = vector.broadcast %285 : vector<8x1xf32> to vector<8x128xf32>
    %324 = arith.mulf %323, %322 : vector<8x128xf32>
    %325 = arith.addf %3, %324 : vector<8x128xf32>
    %326 = arith.subf %319, %4 : vector<8x128xf32>
    %327 = vector.broadcast %285 : vector<8x1xf32> to vector<8x128xf32>
    %328 = arith.mulf %327, %326 : vector<8x128xf32>
    %329 = arith.addf %4, %328 : vector<8x128xf32>
    %330 = arith.index_cast %c5_i32 : i32 to index
    %c0_114 = arith.constant 0 : index
    %c0_115 = arith.constant 0 : index
    %331 = vector.load %arg9[%330, %c0_114, %c0_115] : memref<8x8x128xf32, #tpu.memory_space<vmem>>, vector<1x8x128xf32>
    %332 = vector.shape_cast %331 : vector<1x8x128xf32> to vector<8x128xf32>
    %333 = vector.shape_cast %325 : vector<8x128xf32> to vector<1x8x128xf32>
    tpu.vector_store %arg9[%330, %c0_114, %c0_115], %333 {strides = array<i32>} : memref<8x8x128xf32, #tpu.memory_space<vmem>>, vector<1x8x128xf32>,
    %c6_i32 = arith.constant 6 : i32
    %334 = arith.index_cast %c6_i32 : i32 to index
    %c0_116 = arith.constant 0 : index
    %c0_117 = arith.constant 0 : index
    %335 = vector.load %arg2[%334, %c0_116, %c0_117] : memref<8x8x16xf32, #tpu.memory_space<vmem>>, vector<1x8x16xf32>
    %336 = vector.shape_cast %335 : vector<1x8x16xf32> to vector<8x16xf32>
    %337 = arith.index_cast %c6_i32 : i32 to index
    %c0_118 = arith.constant 0 : index
    %c0_119 = arith.constant 0 : index
    %338 = vector.load %arg3[%337, %c0_118, %c0_119] : memref<8x8x1xf32, #tpu.memory_space<vmem>>, vector<1x8x1xf32>
    %339 = vector.shape_cast %338 : vector<1x8x1xf32> to vector<8x1xf32>
    %cst_120 = arith.constant dense<0.000000e+00> : vector<8x512xf32>
    %340 = tpu.matmul %336, %5, %cst_120 {dimension_numbers = #tpu.dot_dimension_numbers<[1], [0], [0], [1], [0, 0, 1, 1], [], []>} : vector<8x16xf32>, vector<16x512xf32>, vector<8x512xf32> -> vector<8x512xf32>
    %341 = vector.broadcast %7 : vector<1x512xf32> to vector<8x512xf32>
    %342 = arith.addf %341, %340 : vector<8x512xf32>
    %cst_121 = arith.constant dense<0.000000e+00> : vector<8x512xf32>
    %343 = tpu.matmul %325, %6, %cst_121 {dimension_numbers = #tpu.dot_dimension_numbers<[1], [0], [0], [1], [0, 0, 1, 1], [], []>} : vector<8x128xf32>, vector<128x512xf32>, vector<8x512xf32> -> vector<8x512xf32>
    %344 = arith.addf %342, %343 : vector<8x512xf32>
    %345 = vector.extract_strided_slice %344 {offsets = [0, 0], sizes = [8, 128], strides = [1, 1]} : vector<8x512xf32> to vector<8x128xf32>
    %cst_122 = arith.constant 5.000000e-01 : f32
    %346 = vector.broadcast %cst_122 : f32 to vector<8x128xf32>
    %347 = arith.mulf %346, %345 : vector<8x128xf32>
    %348 = math.tanh %347 : vector<8x128xf32>
    %cst_123 = arith.constant 5.000000e-01 : f32
    %349 = vector.broadcast %cst_123 : f32 to vector<8x128xf32>
    %350 = arith.mulf %349, %348 : vector<8x128xf32>
    %cst_124 = arith.constant 5.000000e-01 : f32
    %351 = vector.broadcast %cst_124 : f32 to vector<8x128xf32>
    %352 = arith.addf %350, %351 : vector<8x128xf32>
    %353 = vector.extract_strided_slice %344 {offsets = [0, 128], sizes = [8, 128], strides = [1, 1]} : vector<8x512xf32> to vector<8x128xf32>
    %cst_125 = arith.constant 5.000000e-01 : f32
    %354 = vector.broadcast %cst_125 : f32 to vector<8x128xf32>
    %355 = arith.mulf %354, %353 : vector<8x128xf32>
    %356 = math.tanh %355 : vector<8x128xf32>
    %cst_126 = arith.constant 5.000000e-01 : f32
    %357 = vector.broadcast %cst_126 : f32 to vector<8x128xf32>
    %358 = arith.mulf %357, %356 : vector<8x128xf32>
    %cst_127 = arith.constant 5.000000e-01 : f32
    %359 = vector.broadcast %cst_127 : f32 to vector<8x128xf32>
    %360 = arith.addf %358, %359 : vector<8x128xf32>
    %361 = vector.extract_strided_slice %344 {offsets = [0, 256], sizes = [8, 128], strides = [1, 1]} : vector<8x512xf32> to vector<8x128xf32>
    %362 = math.tanh %361 : vector<8x128xf32>
    %363 = vector.extract_strided_slice %344 {offsets = [0, 384], sizes = [8, 128], strides = [1, 1]} : vector<8x512xf32> to vector<8x128xf32>
    %cst_128 = arith.constant 5.000000e-01 : f32
    %364 = vector.broadcast %cst_128 : f32 to vector<8x128xf32>
    %365 = arith.mulf %364, %363 : vector<8x128xf32>
    %366 = math.tanh %365 : vector<8x128xf32>
    %cst_129 = arith.constant 5.000000e-01 : f32
    %367 = vector.broadcast %cst_129 : f32 to vector<8x128xf32>
    %368 = arith.mulf %367, %366 : vector<8x128xf32>
    %cst_130 = arith.constant 5.000000e-01 : f32
    %369 = vector.broadcast %cst_130 : f32 to vector<8x128xf32>
    %370 = arith.addf %368, %369 : vector<8x128xf32>
    %371 = arith.mulf %360, %329 : vector<8x128xf32>
    %372 = arith.mulf %352, %362 : vector<8x128xf32>
    %373 = arith.addf %371, %372 : vector<8x128xf32>
    %374 = math.tanh %373 : vector<8x128xf32>
    %375 = arith.mulf %370, %374 : vector<8x128xf32>
    %376 = arith.subf %375, %3 : vector<8x128xf32>
    %377 = vector.broadcast %339 : vector<8x1xf32> to vector<8x128xf32>
    %378 = arith.mulf %377, %376 : vector<8x128xf32>
    %379 = arith.addf %3, %378 : vector<8x128xf32>
    %380 = arith.subf %373, %4 : vector<8x128xf32>
    %381 = vector.broadcast %339 : vector<8x1xf32> to vector<8x128xf32>
    %382 = arith.mulf %381, %380 : vector<8x128xf32>
    %383 = arith.addf %4, %382 : vector<8x128xf32>
    %384 = arith.index_cast %c6_i32 : i32 to index
    %c0_131 = arith.constant 0 : index
    %c0_132 = arith.constant 0 : index
    %385 = vector.load %arg9[%384, %c0_131, %c0_132] : memref<8x8x128xf32, #tpu.memory_space<vmem>>, vector<1x8x128xf32>
    %386 = vector.shape_cast %385 : vector<1x8x128xf32> to vector<8x128xf32>
    %387 = vector.shape_cast %379 : vector<8x128xf32> to vector<1x8x128xf32>
    tpu.vector_store %arg9[%384, %c0_131, %c0_132], %387 {strides = array<i32>} : memref<8x8x128xf32, #tpu.memory_space<vmem>>, vector<1x8x128xf32>,
    %c7_i32 = arith.constant 7 : i32
    %388 = arith.index_cast %c7_i32 : i32 to index
    %c0_133 = arith.constant 0 : index
    %c0_134 = arith.constant 0 : index
    %389 = vector.load %arg2[%388, %c0_133, %c0_134] : memref<8x8x16xf32, #tpu.memory_space<vmem>>, vector<1x8x16xf32>
    %390 = vector.shape_cast %389 : vector<1x8x16xf32> to vector<8x16xf32>
    %391 = arith.index_cast %c7_i32 : i32 to index
    %c0_135 = arith.constant 0 : index
    %c0_136 = arith.constant 0 : index
    %392 = vector.load %arg3[%391, %c0_135, %c0_136] : memref<8x8x1xf32, #tpu.memory_space<vmem>>, vector<1x8x1xf32>
    %393 = vector.shape_cast %392 : vector<1x8x1xf32> to vector<8x1xf32>
    %cst_137 = arith.constant dense<0.000000e+00> : vector<8x512xf32>
    %394 = tpu.matmul %390, %5, %cst_137 {dimension_numbers = #tpu.dot_dimension_numbers<[1], [0], [0], [1], [0, 0, 1, 1], [], []>} : vector<8x16xf32>, vector<16x512xf32>, vector<8x512xf32> -> vector<8x512xf32>
    %395 = vector.broadcast %7 : vector<1x512xf32> to vector<8x512xf32>
    %396 = arith.addf %395, %394 : vector<8x512xf32>
    %cst_138 = arith.constant dense<0.000000e+00> : vector<8x512xf32>
    %397 = tpu.matmul %379, %6, %cst_138 {dimension_numbers = #tpu.dot_dimension_numbers<[1], [0], [0], [1], [0, 0, 1, 1], [], []>} : vector<8x128xf32>, vector<128x512xf32>, vector<8x512xf32> -> vector<8x512xf32>
    %398 = arith.addf %396, %397 : vector<8x512xf32>
    %399 = vector.extract_strided_slice %398 {offsets = [0, 0], sizes = [8, 128], strides = [1, 1]} : vector<8x512xf32> to vector<8x128xf32>
    %cst_139 = arith.constant 5.000000e-01 : f32
    %400 = vector.broadcast %cst_139 : f32 to vector<8x128xf32>
    %401 = arith.mulf %400, %399 : vector<8x128xf32>
    %402 = math.tanh %401 : vector<8x128xf32>
    %cst_140 = arith.constant 5.000000e-01 : f32
    %403 = vector.broadcast %cst_140 : f32 to vector<8x128xf32>
    %404 = arith.mulf %403, %402 : vector<8x128xf32>
    %cst_141 = arith.constant 5.000000e-01 : f32
    %405 = vector.broadcast %cst_141 : f32 to vector<8x128xf32>
    %406 = arith.addf %404, %405 : vector<8x128xf32>
    %407 = vector.extract_strided_slice %398 {offsets = [0, 128], sizes = [8, 128], strides = [1, 1]} : vector<8x512xf32> to vector<8x128xf32>
    %cst_142 = arith.constant 5.000000e-01 : f32
    %408 = vector.broadcast %cst_142 : f32 to vector<8x128xf32>
    %409 = arith.mulf %408, %407 : vector<8x128xf32>
    %410 = math.tanh %409 : vector<8x128xf32>
    %cst_143 = arith.constant 5.000000e-01 : f32
    %411 = vector.broadcast %cst_143 : f32 to vector<8x128xf32>
    %412 = arith.mulf %411, %410 : vector<8x128xf32>
    %cst_144 = arith.constant 5.000000e-01 : f32
    %413 = vector.broadcast %cst_144 : f32 to vector<8x128xf32>
    %414 = arith.addf %412, %413 : vector<8x128xf32>
    %415 = vector.extract_strided_slice %398 {offsets = [0, 256], sizes = [8, 128], strides = [1, 1]} : vector<8x512xf32> to vector<8x128xf32>
    %416 = math.tanh %415 : vector<8x128xf32>
    %417 = vector.extract_strided_slice %398 {offsets = [0, 384], sizes = [8, 128], strides = [1, 1]} : vector<8x512xf32> to vector<8x128xf32>
    %cst_145 = arith.constant 5.000000e-01 : f32
    %418 = vector.broadcast %cst_145 : f32 to vector<8x128xf32>
    %419 = arith.mulf %418, %417 : vector<8x128xf32>
    %420 = math.tanh %419 : vector<8x128xf32>
    %cst_146 = arith.constant 5.000000e-01 : f32
    %421 = vector.broadcast %cst_146 : f32 to vector<8x128xf32>
    %422 = arith.mulf %421, %420 : vector<8x128xf32>
    %cst_147 = arith.constant 5.000000e-01 : f32
    %423 = vector.broadcast %cst_147 : f32 to vector<8x128xf32>
    %424 = arith.addf %422, %423 : vector<8x128xf32>
    %425 = arith.mulf %414, %383 : vector<8x128xf32>
    %426 = arith.mulf %406, %416 : vector<8x128xf32>
    %427 = arith.addf %425, %426 : vector<8x128xf32>
    %428 = math.tanh %427 : vector<8x128xf32>
    %429 = arith.mulf %424, %428 : vector<8x128xf32>
    %430 = arith.subf %429, %3 : vector<8x128xf32>
    %431 = vector.broadcast %393 : vector<8x1xf32> to vector<8x128xf32>
    %432 = arith.mulf %431, %430 : vector<8x128xf32>
    %433 = arith.addf %3, %432 : vector<8x128xf32>
    %434 = arith.subf %427, %4 : vector<8x128xf32>
    %435 = vector.broadcast %393 : vector<8x1xf32> to vector<8x128xf32>
    %436 = arith.mulf %435, %434 : vector<8x128xf32>
    %437 = arith.addf %4, %436 : vector<8x128xf32>
    %438 = arith.index_cast %c7_i32 : i32 to index
    %c0_148 = arith.constant 0 : index
    %c0_149 = arith.constant 0 : index
    %439 = vector.load %arg9[%438, %c0_148, %c0_149] : memref<8x8x128xf32, #tpu.memory_space<vmem>>, vector<1x8x128xf32>
    %440 = vector.shape_cast %439 : vector<1x8x128xf32> to vector<8x128xf32>
    %441 = vector.shape_cast %433 : vector<8x128xf32> to vector<1x8x128xf32>
    tpu.vector_store %arg9[%438, %c0_148, %c0_149], %441 {strides = array<i32>} : memref<8x8x128xf32, #tpu.memory_space<vmem>>, vector<1x8x128xf32>,
    %c8_i32 = arith.constant 8 : i32
    %c0_150 = arith.constant 0 : index
    %c0_151 = arith.constant 0 : index
    %442 = vector.load %arg12[%c0_150, %c0_151] : memref<8x128xf32, #tpu.memory_space<vmem>>, vector<8x128xf32>
    tpu.vector_store %arg12[%c0_150, %c0_151], %433 {strides = array<i32>} : memref<8x128xf32, #tpu.memory_space<vmem>>, vector<8x128xf32>,
    %c0_152 = arith.constant 0 : index
    %c0_153 = arith.constant 0 : index
    %443 = vector.load %arg13[%c0_152, %c0_153] : memref<8x128xf32, #tpu.memory_space<vmem>>, vector<8x128xf32>
    tpu.vector_store %arg13[%c0_152, %c0_153], %437 {strides = array<i32>} : memref<8x128xf32, #tpu.memory_space<vmem>>, vector<8x128xf32>,
    %c0_i32_154 = arith.constant 0 : i32
    %444 = arith.cmpi eq, %arg1, %c0_i32_154 : i32
    %445 = arith.extui %444 : i1 to i32
    %c0_i32_155 = arith.constant 0 : i32
    %446 = arith.cmpi ne, %445, %c0_i32_155 : i32
    scf.if %446 {
      %c0_156 = arith.constant 0 : index
      %c0_157 = arith.constant 0 : index
      %447 = vector.load %arg10[%c0_156, %c0_157] : memref<8x128xf32, #tpu.memory_space<vmem>>, vector<8x128xf32>
      tpu.vector_store %arg10[%c0_156, %c0_157], %433 {strides = array<i32>} : memref<8x128xf32, #tpu.memory_space<vmem>>, vector<8x128xf32>,
      %c0_158 = arith.constant 0 : index
      %c0_159 = arith.constant 0 : index
      %448 = vector.load %arg11[%c0_158, %c0_159] : memref<8x128xf32, #tpu.memory_space<vmem>>, vector<8x128xf32>
      tpu.vector_store %arg11[%c0_158, %c0_159], %437 {strides = array<i32>} : memref<8x128xf32, #tpu.memory_space<vmem>>, vector<8x128xf32>,
    } else {
    }
    return
  }
  func.func @transform_0(%arg0: i32, %arg1: i32) -> (i32, i32, i32) {
    %c0_i32 = arith.constant 0 : i32
    %c0_i32_0 = arith.constant 0 : i32
    return %arg1, %arg0, %c0_i32 : i32, i32, i32
  }
  func.func @transform_1(%arg0: i32, %arg1: i32) -> (i32, i32, i32) {
    %c0_i32 = arith.constant 0 : i32
    %c0_i32_0 = arith.constant 0 : i32
    return %arg1, %arg0, %c0_i32 : i32, i32, i32
  }
  func.func @transform_2(%arg0: i32, %arg1: i32) -> (i32, i32) {
    %c0_i32 = arith.constant 0 : i32
    %c0_i32_0 = arith.constant 0 : i32
    %c0_i32_1 = arith.constant 0 : i32
    return %c0_i32, %c0_i32_0 : i32, i32
  }
  func.func @transform_3(%arg0: i32, %arg1: i32) -> (i32, i32) {
    %c0_i32 = arith.constant 0 : i32
    %c0_i32_0 = arith.constant 0 : i32
    %c0_i32_1 = arith.constant 0 : i32
    return %c0_i32, %c0_i32_0 : i32, i32
  }
  func.func @transform_4(%arg0: i32, %arg1: i32) -> (i32, i32) {
    %c0_i32 = arith.constant 0 : i32
    %c0_i32_0 = arith.constant 0 : i32
    %c0_i32_1 = arith.constant 0 : i32
    return %c0_i32, %c0_i32_0 : i32, i32
  }
  func.func @transform_5(%arg0: i32, %arg1: i32) -> (i32, i32) {
    %c0_i32 = arith.constant 0 : i32
    %c0_i32_0 = arith.constant 0 : i32
    return %arg0, %c0_i32 : i32, i32
  }
  func.func @transform_6(%arg0: i32, %arg1: i32) -> (i32, i32) {
    %c0_i32 = arith.constant 0 : i32
    %c0_i32_0 = arith.constant 0 : i32
    return %arg0, %c0_i32 : i32, i32
  }
  func.func @transform_7(%arg0: i32, %arg1: i32) -> (i32, i32, i32) {
    %c0_i32 = arith.constant 0 : i32
    %c0_i32_0 = arith.constant 0 : i32
    return %arg1, %arg0, %c0_i32 : i32, i32, i32
  }
  func.func @transform_8(%arg0: i32, %arg1: i32) -> (i32, i32) {
    %c0_i32 = arith.constant 0 : i32
    %c0_i32_0 = arith.constant 0 : i32
    return %arg0, %c0_i32 : i32, i32
  }
  func.func @transform_9(%arg0: i32, %arg1: i32) -> (i32, i32) {
    %c0_i32 = arith.constant 0 : i32
    %c0_i32_0 = arith.constant 0 : i32
    return %arg0, %c0_i32 : i32, i32
  }
}

module attributes {stable_mosaic.version = 11 : i64} {
  func.func @_lstm_layer_kernel(%arg0: i32, %arg1: i32, %arg2: memref<8x8x16xf32, #tpu.memory_space<vmem>>, %arg3: memref<8x8x1xf32, #tpu.memory_space<vmem>>, %arg4: memref<16x512xf32, #tpu.memory_space<vmem>>, %arg5: memref<128x512xf32, #tpu.memory_space<vmem>>, %arg6: memref<1x512xf32, #tpu.memory_space<vmem>>, %arg7: memref<8x128xf32, #tpu.memory_space<vmem>>, %arg8: memref<8x128xf32, #tpu.memory_space<vmem>>, %arg9: memref<8x8x128xf32, #tpu.memory_space<vmem>>, %arg10: memref<8x128xf32, #tpu.memory_space<vmem>>, %arg11: memref<8x128xf32, #tpu.memory_space<vmem>>, %arg12: memref<8x128xf32, #tpu.memory_space<vmem>>, %arg13: memref<8x128xf32, #tpu.memory_space<vmem>>) attributes {dimension_semantics = [#tpu.dimension_semantics<parallel>, #tpu.dimension_semantics<arbitrary>], iteration_bounds = array<i64: 1, 1>, scalar_prefetch = 0 : i64, scratch_operands = 2 : i64, tpu.core_type = #tpu.core_type<tc>, window_params = [{transform_indices = @transform_0, window_bounds = array<i64: 8, 8, 16>}, {transform_indices = @transform_1, window_bounds = array<i64: 8, 8, 1>}, {pipeline_mode = #tpu.pipeline_mode<synchronous>, transform_indices = @transform_2, window_bounds = array<i64: 16, 512>}, {pipeline_mode = #tpu.pipeline_mode<synchronous>, transform_indices = @transform_3, window_bounds = array<i64: 128, 512>}, {pipeline_mode = #tpu.pipeline_mode<synchronous>, transform_indices = @transform_4, window_bounds = array<i64: 1, 512>}, {transform_indices = @transform_5, window_bounds = array<i64: 8, 128>}, {transform_indices = @transform_6, window_bounds = array<i64: 8, 128>}, {transform_indices = @transform_7, window_bounds = array<i64: 8, 8, 128>}, {transform_indices = @transform_8, window_bounds = array<i64: 8, 128>}, {transform_indices = @transform_9, window_bounds = array<i64: 8, 128>}]} {
    %c0_i32 = arith.constant 0 : i32
    %0 = arith.cmpi eq, %arg1, %c0_i32 : i32
    %1 = arith.extui %0 : i1 to i32
    %c0_i32_0 = arith.constant 0 : i32
    %2 = arith.cmpi ne, %1, %c0_i32_0 : i32
    scf.if %2 {
      %c0_156 = arith.constant 0 : index
      %c0_157 = arith.constant 0 : index
      %447 = vector.load %arg7[%c0_156, %c0_157] : memref<8x128xf32, #tpu.memory_space<vmem>>, vector<8x128xf32>
      %c0_158 = arith.constant 0 : index
      %c0_159 = arith.constant 0 : index
      %448 = vector.load %arg12[%c0_158, %c0_159] : memref<8x128xf32, #tpu.memory_space<vmem>>, vector<8x128xf32>
      tpu.vector_store %arg12[%c0_158, %c0_159], %447 {strides = array<i32>} : memref<8x128xf32, #tpu.memory_space<vmem>>, vector<8x128xf32>,
      %c0_160 = arith.constant 0 : index
      %c0_161 = arith.constant 0 : index
      %449 = vector.load %arg8[%c0_160, %c0_161] : memref<8x128xf32, #tpu.memory_space<vmem>>, vector<8x128xf32>
      %c0_162 = arith.constant 0 : index
      %c0_163 = arith.constant 0 : index
      %450 = vector.load %arg13[%c0_162, %c0_163] : memref<8x128xf32, #tpu.memory_space<vmem>>, vector<8x128xf32>
      tpu.vector_store %arg13[%c0_162, %c0_163], %449 {strides = array<i32>} : memref<8x128xf32, #tpu.memory_space<vmem>>, vector<8x128xf32>,
    } else {
    }
    %c0 = arith.constant 0 : index
    %c0_1 = arith.constant 0 : index
    %3 = vector.load %arg7[%c0, %c0_1] : memref<8x128xf32, #tpu.memory_space<vmem>>, vector<8x128xf32>
    %c0_2 = arith.constant 0 : index
    %c0_3 = arith.constant 0 : index
    %4 = vector.load %arg8[%c0_2, %c0_3] : memref<8x128xf32, #tpu.memory_space<vmem>>, vector<8x128xf32>
    %c0_4 = arith.constant 0 : index
    %c0_5 = arith.constant 0 : index
    %5 = vector.load %arg4[%c0_4, %c0_5] : memref<16x512xf32, #tpu.memory_space<vmem>>, vector<16x512xf32>
    %c0_6 = arith.constant 0 : index
    %c0_7 = arith.constant 0 : index
    %6 = vector.load %arg5[%c0_6, %c0_7] : memref<128x512xf32, #tpu.memory_space<vmem>>, vector<128x512xf32>
    %c0_8 = arith.constant 0 : index
    %c0_9 = arith.constant 0 : index
    %7 = vector.load %arg6[%c0_8, %c0_9] : memref<1x512xf32, #tpu.memory_space<vmem>>, vector<1x512xf32>
    %c0_10 = arith.constant 0 : index
    %c0_11 = arith.constant 0 : index
    %8 = vector.load %arg12[%c0_10, %c0_11] : memref<8x128xf32, #tpu.memory_space<vmem>>, vector<8x128xf32>
    %c0_12 = arith.constant 0 : index
    %c0_13 = arith.constant 0 : index
    %9 = vector.load %arg13[%c0_12, %c0_13] : memref<8x128xf32, #tpu.memory_space<vmem>>, vector<8x128xf32>
    %c0_i32_14 = arith.constant 0 : i32
    %10 = arith.index_cast %c0_i32_14 : i32 to index
    %c0_15 = arith.constant 0 : index
    %c0_16 = arith.constant 0 : index
    %11 = vector.load %arg2[%10, %c0_15, %c0_16] : memref<8x8x16xf32, #tpu.memory_space<vmem>>, vector<1x8x16xf32>
    %12 = vector.shape_cast %11 : vector<1x8x16xf32> to vector<8x16xf32>
    %13 = arith.index_cast %c0_i32_14 : i32 to index
    %c0_17 = arith.constant 0 : index
    %c0_18 = arith.constant 0 : index
    %14 = vector.load %arg3[%13, %c0_17, %c0_18] : memref<8x8x1xf32, #tpu.memory_space<vmem>>, vector<1x8x1xf32>
    %15 = vector.shape_cast %14 : vector<1x8x1xf32> to vector<8x1xf32>
    %cst = arith.constant dense<0.000000e+00> : vector<8x512xf32>
    %16 = tpu.matmul %12, %5, %cst {dimension_numbers = #tpu.dot_dimension_numbers<[1], [0], [0], [1], [0, 0, 1, 1], [], []>} : vector<8x16xf32>, vector<16x512xf32>, vector<8x512xf32> -> vector<8x512xf32>
    %17 = vector.broadcast %7 : vector<1x512xf32> to vector<8x512xf32>
    %18 = arith.addf %17, %16 : vector<8x512xf32>
    %cst_19 = arith.constant dense<0.000000e+00> : vector<8x512xf32>
    %19 = tpu.matmul %8, %6, %cst_19 {dimension_numbers = #tpu.dot_dimension_numbers<[1], [0], [0], [1], [0, 0, 1, 1], [], []>} : vector<8x128xf32>, vector<128x512xf32>, vector<8x512xf32> -> vector<8x512xf32>
    %20 = arith.addf %18, %19 : vector<8x512xf32>
    %21 = vector.extract_strided_slice %20 {offsets = [0, 0], sizes = [8, 128], strides = [1, 1]} : vector<8x512xf32> to vector<8x128xf32>
    %cst_20 = arith.constant 5.000000e-01 : f32
    %22 = vector.broadcast %cst_20 : f32 to vector<8x128xf32>
    %23 = arith.mulf %22, %21 : vector<8x128xf32>
    %24 = math.tanh %23 : vector<8x128xf32>
    %cst_21 = arith.constant 5.000000e-01 : f32
    %25 = vector.broadcast %cst_21 : f32 to vector<8x128xf32>
    %26 = arith.mulf %25, %24 : vector<8x128xf32>
    %cst_22 = arith.constant 5.000000e-01 : f32
    %27 = vector.broadcast %cst_22 : f32 to vector<8x128xf32>
    %28 = arith.addf %26, %27 : vector<8x128xf32>
    %29 = vector.extract_strided_slice %20 {offsets = [0, 128], sizes = [8, 128], strides = [1, 1]} : vector<8x512xf32> to vector<8x128xf32>
    %cst_23 = arith.constant 5.000000e-01 : f32
    %30 = vector.broadcast %cst_23 : f32 to vector<8x128xf32>
    %31 = arith.mulf %30, %29 : vector<8x128xf32>
    %32 = math.tanh %31 : vector<8x128xf32>
    %cst_24 = arith.constant 5.000000e-01 : f32
    %33 = vector.broadcast %cst_24 : f32 to vector<8x128xf32>
    %34 = arith.mulf %33, %32 : vector<8x128xf32>
    %cst_25 = arith.constant 5.000000e-01 : f32
    %35 = vector.broadcast %cst_25 : f32 to vector<8x128xf32>
    %36 = arith.addf %34, %35 : vector<8x128xf32>
    %37 = vector.extract_strided_slice %20 {offsets = [0, 256], sizes = [8, 128], strides = [1, 1]} : vector<8x512xf32> to vector<8x128xf32>
    %38 = math.tanh %37 : vector<8x128xf32>
    %39 = vector.extract_strided_slice %20 {offsets = [0, 384], sizes = [8, 128], strides = [1, 1]} : vector<8x512xf32> to vector<8x128xf32>
    %cst_26 = arith.constant 5.000000e-01 : f32
    %40 = vector.broadcast %cst_26 : f32 to vector<8x128xf32>
    %41 = arith.mulf %40, %39 : vector<8x128xf32>
    %42 = math.tanh %41 : vector<8x128xf32>
    %cst_27 = arith.constant 5.000000e-01 : f32
    %43 = vector.broadcast %cst_27 : f32 to vector<8x128xf32>
    %44 = arith.mulf %43, %42 : vector<8x128xf32>
    %cst_28 = arith.constant 5.000000e-01 : f32
    %45 = vector.broadcast %cst_28 : f32 to vector<8x128xf32>
    %46 = arith.addf %44, %45 : vector<8x128xf32>
    %47 = arith.mulf %36, %9 : vector<8x128xf32>
    %48 = arith.mulf %28, %38 : vector<8x128xf32>
    %49 = arith.addf %47, %48 : vector<8x128xf32>
    %50 = math.tanh %49 : vector<8x128xf32>
    %51 = arith.mulf %46, %50 : vector<8x128xf32>
    %52 = arith.subf %51, %3 : vector<8x128xf32>
    %53 = vector.broadcast %15 : vector<8x1xf32> to vector<8x128xf32>
    %54 = arith.mulf %53, %52 : vector<8x128xf32>
    %55 = arith.addf %3, %54 : vector<8x128xf32>
    %56 = arith.subf %49, %4 : vector<8x128xf32>
    %57 = vector.broadcast %15 : vector<8x1xf32> to vector<8x128xf32>
    %58 = arith.mulf %57, %56 : vector<8x128xf32>
    %59 = arith.addf %4, %58 : vector<8x128xf32>
    %60 = arith.index_cast %c0_i32_14 : i32 to index
    %c0_29 = arith.constant 0 : index
    %c0_30 = arith.constant 0 : index
    %61 = vector.load %arg9[%60, %c0_29, %c0_30] : memref<8x8x128xf32, #tpu.memory_space<vmem>>, vector<1x8x128xf32>
    %62 = vector.shape_cast %61 : vector<1x8x128xf32> to vector<8x128xf32>
    %63 = vector.shape_cast %55 : vector<8x128xf32> to vector<1x8x128xf32>
    tpu.vector_store %arg9[%60, %c0_29, %c0_30], %63 {strides = array<i32>} : memref<8x8x128xf32, #tpu.memory_space<vmem>>, vector<1x8x128xf32>,
    %c1_i32 = arith.constant 1 : i32
    %64 = arith.index_cast %c1_i32 : i32 to index
    %c0_31 = arith.constant 0 : index
    %c0_32 = arith.constant 0 : index
    %65 = vector.load %arg2[%64, %c0_31, %c0_32] : memref<8x8x16xf32, #tpu.memory_space<vmem>>, vector<1x8x16xf32>
    %66 = vector.shape_cast %65 : vector<1x8x16xf32> to vector<8x16xf32>
    %67 = arith.index_cast %c1_i32 : i32 to index
    %c0_33 = arith.constant 0 : index
    %c0_34 = arith.constant 0 : index
    %68 = vector.load %arg3[%67, %c0_33, %c0_34] : memref<8x8x1xf32, #tpu.memory_space<vmem>>, vector<1x8x1xf32>
    %69 = vector.shape_cast %68 : vector<1x8x1xf32> to vector<8x1xf32>
    %cst_35 = arith.constant dense<0.000000e+00> : vector<8x512xf32>
    %70 = tpu.matmul %66, %5, %cst_35 {dimension_numbers = #tpu.dot_dimension_numbers<[1], [0], [0], [1], [0, 0, 1, 1], [], []>} : vector<8x16xf32>, vector<16x512xf32>, vector<8x512xf32> -> vector<8x512xf32>
    %71 = vector.broadcast %7 : vector<1x512xf32> to vector<8x512xf32>
    %72 = arith.addf %71, %70 : vector<8x512xf32>
    %cst_36 = arith.constant dense<0.000000e+00> : vector<8x512xf32>
    %73 = tpu.matmul %55, %6, %cst_36 {dimension_numbers = #tpu.dot_dimension_numbers<[1], [0], [0], [1], [0, 0, 1, 1], [], []>} : vector<8x128xf32>, vector<128x512xf32>, vector<8x512xf32> -> vector<8x512xf32>
    %74 = arith.addf %72, %73 : vector<8x512xf32>
    %75 = vector.extract_strided_slice %74 {offsets = [0, 0], sizes = [8, 128], strides = [1, 1]} : vector<8x512xf32> to vector<8x128xf32>
    %cst_37 = arith.constant 5.000000e-01 : f32
    %76 = vector.broadcast %cst_37 : f32 to vector<8x128xf32>
    %77 = arith.mulf %76, %75 : vector<8x128xf32>
    %78 = math.tanh %77 : vector<8x128xf32>
    %cst_38 = arith.constant 5.000000e-01 : f32
    %79 = vector.broadcast %cst_38 : f32 to vector<8x128xf32>
    %80 = arith.mulf %79, %78 : vector<8x128xf32>
    %cst_39 = arith.constant 5.000000e-01 : f32
    %81 = vector.broadcast %cst_39 : f32 to vector<8x128xf32>
    %82 = arith.addf %80, %81 : vector<8x128xf32>
    %83 = vector.extract_strided_slice %74 {offsets = [0, 128], sizes = [8, 128], strides = [1, 1]} : vector<8x512xf32> to vector<8x128xf32>
    %cst_40 = arith.constant 5.000000e-01 : f32
    %84 = vector.broadcast %cst_40 : f32 to vector<8x128xf32>
    %85 = arith.mulf %84, %83 : vector<8x128xf32>
    %86 = math.tanh %85 : vector<8x128xf32>
    %cst_41 = arith.constant 5.000000e-01 : f32
    %87 = vector.broadcast %cst_41 : f32 to vector<8x128xf32>
    %88 = arith.mulf %87, %86 : vector<8x128xf32>
    %cst_42 = arith.constant 5.000000e-01 : f32
    %89 = vector.broadcast %cst_42 : f32 to vector<8x128xf32>
    %90 = arith.addf %88, %89 : vector<8x128xf32>
    %91 = vector.extract_strided_slice %74 {offsets = [0, 256], sizes = [8, 128], strides = [1, 1]} : vector<8x512xf32> to vector<8x128xf32>
    %92 = math.tanh %91 : vector<8x128xf32>
    %93 = vector.extract_strided_slice %74 {offsets = [0, 384], sizes = [8, 128], strides = [1, 1]} : vector<8x512xf32> to vector<8x128xf32>
    %cst_43 = arith.constant 5.000000e-01 : f32
    %94 = vector.broadcast %cst_43 : f32 to vector<8x128xf32>
    %95 = arith.mulf %94, %93 : vector<8x128xf32>
    %96 = math.tanh %95 : vector<8x128xf32>
    %cst_44 = arith.constant 5.000000e-01 : f32
    %97 = vector.broadcast %cst_44 : f32 to vector<8x128xf32>
    %98 = arith.mulf %97, %96 : vector<8x128xf32>
    %cst_45 = arith.constant 5.000000e-01 : f32
    %99 = vector.broadcast %cst_45 : f32 to vector<8x128xf32>
    %100 = arith.addf %98, %99 : vector<8x128xf32>
    %101 = arith.mulf %90, %59 : vector<8x128xf32>
    %102 = arith.mulf %82, %92 : vector<8x128xf32>
    %103 = arith.addf %101, %102 : vector<8x128xf32>
    %104 = math.tanh %103 : vector<8x128xf32>
    %105 = arith.mulf %100, %104 : vector<8x128xf32>
    %106 = arith.subf %105, %3 : vector<8x128xf32>
    %107 = vector.broadcast %69 : vector<8x1xf32> to vector<8x128xf32>
    %108 = arith.mulf %107, %106 : vector<8x128xf32>
    %109 = arith.addf %3, %108 : vector<8x128xf32>
    %110 = arith.subf %103, %4 : vector<8x128xf32>
    %111 = vector.broadcast %69 : vector<8x1xf32> to vector<8x128xf32>
    %112 = arith.mulf %111, %110 : vector<8x128xf32>
    %113 = arith.addf %4, %112 : vector<8x128xf32>
    %114 = arith.index_cast %c1_i32 : i32 to index
    %c0_46 = arith.constant 0 : index
    %c0_47 = arith.constant 0 : index
    %115 = vector.load %arg9[%114, %c0_46, %c0_47] : memref<8x8x128xf32, #tpu.memory_space<vmem>>, vector<1x8x128xf32>
    %116 = vector.shape_cast %115 : vector<1x8x128xf32> to vector<8x128xf32>
    %117 = vector.shape_cast %109 : vector<8x128xf32> to vector<1x8x128xf32>
    tpu.vector_store %arg9[%114, %c0_46, %c0_47], %117 {strides = array<i32>} : memref<8x8x128xf32, #tpu.memory_space<vmem>>, vector<1x8x128xf32>,
    %c2_i32 = arith.constant 2 : i32
    %118 = arith.index_cast %c2_i32 : i32 to index
    %c0_48 = arith.constant 0 : index
    %c0_49 = arith.constant 0 : index
    %119 = vector.load %arg2[%118, %c0_48, %c0_49] : memref<8x8x16xf32, #tpu.memory_space<vmem>>, vector<1x8x16xf32>
    %120 = vector.shape_cast %119 : vector<1x8x16xf32> to vector<8x16xf32>
    %121 = arith.index_cast %c2_i32 : i32 to index
    %c0_50 = arith.constant 0 : index
    %c0_51 = arith.constant 0 : index
    %122 = vector.load %arg3[%121, %c0_50, %c0_51] : memref<8x8x1xf32, #tpu.memory_space<vmem>>, vector<1x8x1xf32>
    %123 = vector.shape_cast %122 : vector<1x8x1xf32> to vector<8x1xf32>
    %cst_52 = arith.constant dense<0.000000e+00> : vector<8x512xf32>
    %124 = tpu.matmul %120, %5, %cst_52 {dimension_numbers = #tpu.dot_dimension_numbers<[1], [0], [0], [1], [0, 0, 1, 1], [], []>} : vector<8x16xf32>, vector<16x512xf32>, vector<8x512xf32> -> vector<8x512xf32>
    %125 = vector.broadcast %7 : vector<1x512xf32> to vector<8x512xf32>
    %126 = arith.addf %125, %124 : vector<8x512xf32>
    %cst_53 = arith.constant dense<0.000000e+00> : vector<8x512xf32>
    %127 = tpu.matmul %109, %6, %cst_53 {dimension_numbers = #tpu.dot_dimension_numbers<[1], [0], [0], [1], [0, 0, 1, 1], [], []>} : vector<8x128xf32>, vector<128x512xf32>, vector<8x512xf32> -> vector<8x512xf32>
    %128 = arith.addf %126, %127 : vector<8x512xf32>
    %129 = vector.extract_strided_slice %128 {offsets = [0, 0], sizes = [8, 128], strides = [1, 1]} : vector<8x512xf32> to vector<8x128xf32>
    %cst_54 = arith.constant 5.000000e-01 : f32
    %130 = vector.broadcast %cst_54 : f32 to vector<8x128xf32>
    %131 = arith.mulf %130, %129 : vector<8x128xf32>
    %132 = math.tanh %131 : vector<8x128xf32>
    %cst_55 = arith.constant 5.000000e-01 : f32
    %133 = vector.broadcast %cst_55 : f32 to vector<8x128xf32>
    %134 = arith.mulf %133, %132 : vector<8x128xf32>
    %cst_56 = arith.constant 5.000000e-01 : f32
    %135 = vector.broadcast %cst_56 : f32 to vector<8x128xf32>
    %136 = arith.addf %134, %135 : vector<8x128xf32>
    %137 = vector.extract_strided_slice %128 {offsets = [0, 128], sizes = [8, 128], strides = [1, 1]} : vector<8x512xf32> to vector<8x128xf32>
    %cst_57 = arith.constant 5.000000e-01 : f32
    %138 = vector.broadcast %cst_57 : f32 to vector<8x128xf32>
    %139 = arith.mulf %138, %137 : vector<8x128xf32>
    %140 = math.tanh %139 : vector<8x128xf32>
    %cst_58 = arith.constant 5.000000e-01 : f32
    %141 = vector.broadcast %cst_58 : f32 to vector<8x128xf32>
    %142 = arith.mulf %141, %140 : vector<8x128xf32>
    %cst_59 = arith.constant 5.000000e-01 : f32
    %143 = vector.broadcast %cst_59 : f32 to vector<8x128xf32>
    %144 = arith.addf %142, %143 : vector<8x128xf32>
    %145 = vector.extract_strided_slice %128 {offsets = [0, 256], sizes = [8, 128], strides = [1, 1]} : vector<8x512xf32> to vector<8x128xf32>
    %146 = math.tanh %145 : vector<8x128xf32>
    %147 = vector.extract_strided_slice %128 {offsets = [0, 384], sizes = [8, 128], strides = [1, 1]} : vector<8x512xf32> to vector<8x128xf32>
    %cst_60 = arith.constant 5.000000e-01 : f32
    %148 = vector.broadcast %cst_60 : f32 to vector<8x128xf32>
    %149 = arith.mulf %148, %147 : vector<8x128xf32>
    %150 = math.tanh %149 : vector<8x128xf32>
    %cst_61 = arith.constant 5.000000e-01 : f32
    %151 = vector.broadcast %cst_61 : f32 to vector<8x128xf32>
    %152 = arith.mulf %151, %150 : vector<8x128xf32>
    %cst_62 = arith.constant 5.000000e-01 : f32
    %153 = vector.broadcast %cst_62 : f32 to vector<8x128xf32>
    %154 = arith.addf %152, %153 : vector<8x128xf32>
    %155 = arith.mulf %144, %113 : vector<8x128xf32>
    %156 = arith.mulf %136, %146 : vector<8x128xf32>
    %157 = arith.addf %155, %156 : vector<8x128xf32>
    %158 = math.tanh %157 : vector<8x128xf32>
    %159 = arith.mulf %154, %158 : vector<8x128xf32>
    %160 = arith.subf %159, %3 : vector<8x128xf32>
    %161 = vector.broadcast %123 : vector<8x1xf32> to vector<8x128xf32>
    %162 = arith.mulf %161, %160 : vector<8x128xf32>
    %163 = arith.addf %3, %162 : vector<8x128xf32>
    %164 = arith.subf %157, %4 : vector<8x128xf32>
    %165 = vector.broadcast %123 : vector<8x1xf32> to vector<8x128xf32>
    %166 = arith.mulf %165, %164 : vector<8x128xf32>
    %167 = arith.addf %4, %166 : vector<8x128xf32>
    %168 = arith.index_cast %c2_i32 : i32 to index
    %c0_63 = arith.constant 0 : index
    %c0_64 = arith.constant 0 : index
    %169 = vector.load %arg9[%168, %c0_63, %c0_64] : memref<8x8x128xf32, #tpu.memory_space<vmem>>, vector<1x8x128xf32>
    %170 = vector.shape_cast %169 : vector<1x8x128xf32> to vector<8x128xf32>
    %171 = vector.shape_cast %163 : vector<8x128xf32> to vector<1x8x128xf32>
    tpu.vector_store %arg9[%168, %c0_63, %c0_64], %171 {strides = array<i32>} : memref<8x8x128xf32, #tpu.memory_space<vmem>>, vector<1x8x128xf32>,
    %c3_i32 = arith.constant 3 : i32
    %172 = arith.index_cast %c3_i32 : i32 to index
    %c0_65 = arith.constant 0 : index
    %c0_66 = arith.constant 0 : index
    %173 = vector.load %arg2[%172, %c0_65, %c0_66] : memref<8x8x16xf32, #tpu.memory_space<vmem>>, vector<1x8x16xf32>
    %174 = vector.shape_cast %173 : vector<1x8x16xf32> to vector<8x16xf32>
    %175 = arith.index_cast %c3_i32 : i32 to index
    %c0_67 = arith.constant 0 : index
    %c0_68 = arith.constant 0 : index
    %176 = vector.load %arg3[%175, %c0_67, %c0_68] : memref<8x8x1xf32, #tpu.memory_space<vmem>>, vector<1x8x1xf32>
    %177 = vector.shape_cast %176 : vector<1x8x1xf32> to vector<8x1xf32>
    %cst_69 = arith.constant dense<0.000000e+00> : vector<8x512xf32>
    %178 = tpu.matmul %174, %5, %cst_69 {dimension_numbers = #tpu.dot_dimension_numbers<[1], [0], [0], [1], [0, 0, 1, 1], [], []>} : vector<8x16xf32>, vector<16x512xf32>, vector<8x512xf32> -> vector<8x512xf32>
    %179 = vector.broadcast %7 : vector<1x512xf32> to vector<8x512xf32>
    %180 = arith.addf %179, %178 : vector<8x512xf32>
    %cst_70 = arith.constant dense<0.000000e+00> : vector<8x512xf32>
    %181 = tpu.matmul %163, %6, %cst_70 {dimension_numbers = #tpu.dot_dimension_numbers<[1], [0], [0], [1], [0, 0, 1, 1], [], []>} : vector<8x128xf32>, vector<128x512xf32>, vector<8x512xf32> -> vector<8x512xf32>
    %182 = arith.addf %180, %181 : vector<8x512xf32>
    %183 = vector.extract_strided_slice %182 {offsets = [0, 0], sizes = [8, 128], strides = [1, 1]} : vector<8x512xf32> to vector<8x128xf32>
    %cst_71 = arith.constant 5.000000e-01 : f32
    %184 = vector.broadcast %cst_71 : f32 to vector<8x128xf32>
    %185 = arith.mulf %184, %183 : vector<8x128xf32>
    %186 = math.tanh %185 : vector<8x128xf32>
    %cst_72 = arith.constant 5.000000e-01 : f32
    %187 = vector.broadcast %cst_72 : f32 to vector<8x128xf32>
    %188 = arith.mulf %187, %186 : vector<8x128xf32>
    %cst_73 = arith.constant 5.000000e-01 : f32
    %189 = vector.broadcast %cst_73 : f32 to vector<8x128xf32>
    %190 = arith.addf %188, %189 : vector<8x128xf32>
    %191 = vector.extract_strided_slice %182 {offsets = [0, 128], sizes = [8, 128], strides = [1, 1]} : vector<8x512xf32> to vector<8x128xf32>
    %cst_74 = arith.constant 5.000000e-01 : f32
    %192 = vector.broadcast %cst_74 : f32 to vector<8x128xf32>
    %193 = arith.mulf %192, %191 : vector<8x128xf32>
    %194 = math.tanh %193 : vector<8x128xf32>
    %cst_75 = arith.constant 5.000000e-01 : f32
    %195 = vector.broadcast %cst_75 : f32 to vector<8x128xf32>
    %196 = arith.mulf %195, %194 : vector<8x128xf32>
    %cst_76 = arith.constant 5.000000e-01 : f32
    %197 = vector.broadcast %cst_76 : f32 to vector<8x128xf32>
    %198 = arith.addf %196, %197 : vector<8x128xf32>
    %199 = vector.extract_strided_slice %182 {offsets = [0, 256], sizes = [8, 128], strides = [1, 1]} : vector<8x512xf32> to vector<8x128xf32>
    %200 = math.tanh %199 : vector<8x128xf32>
    %201 = vector.extract_strided_slice %182 {offsets = [0, 384], sizes = [8, 128], strides = [1, 1]} : vector<8x512xf32> to vector<8x128xf32>
    %cst_77 = arith.constant 5.000000e-01 : f32
    %202 = vector.broadcast %cst_77 : f32 to vector<8x128xf32>
    %203 = arith.mulf %202, %201 : vector<8x128xf32>
    %204 = math.tanh %203 : vector<8x128xf32>
    %cst_78 = arith.constant 5.000000e-01 : f32
    %205 = vector.broadcast %cst_78 : f32 to vector<8x128xf32>
    %206 = arith.mulf %205, %204 : vector<8x128xf32>
    %cst_79 = arith.constant 5.000000e-01 : f32
    %207 = vector.broadcast %cst_79 : f32 to vector<8x128xf32>
    %208 = arith.addf %206, %207 : vector<8x128xf32>
    %209 = arith.mulf %198, %167 : vector<8x128xf32>
    %210 = arith.mulf %190, %200 : vector<8x128xf32>
    %211 = arith.addf %209, %210 : vector<8x128xf32>
    %212 = math.tanh %211 : vector<8x128xf32>
    %213 = arith.mulf %208, %212 : vector<8x128xf32>
    %214 = arith.subf %213, %3 : vector<8x128xf32>
    %215 = vector.broadcast %177 : vector<8x1xf32> to vector<8x128xf32>
    %216 = arith.mulf %215, %214 : vector<8x128xf32>
    %217 = arith.addf %3, %216 : vector<8x128xf32>
    %218 = arith.subf %211, %4 : vector<8x128xf32>
    %219 = vector.broadcast %177 : vector<8x1xf32> to vector<8x128xf32>
    %220 = arith.mulf %219, %218 : vector<8x128xf32>
    %221 = arith.addf %4, %220 : vector<8x128xf32>
    %222 = arith.index_cast %c3_i32 : i32 to index
    %c0_80 = arith.constant 0 : index
    %c0_81 = arith.constant 0 : index
    %223 = vector.load %arg9[%222, %c0_80, %c0_81] : memref<8x8x128xf32, #tpu.memory_space<vmem>>, vector<1x8x128xf32>
    %224 = vector.shape_cast %223 : vector<1x8x128xf32> to vector<8x128xf32>
    %225 = vector.shape_cast %217 : vector<8x128xf32> to vector<1x8x128xf32>
    tpu.vector_store %arg9[%222, %c0_80, %c0_81], %225 {strides = array<i32>} : memref<8x8x128xf32, #tpu.memory_space<vmem>>, vector<1x8x128xf32>,
    %c4_i32 = arith.constant 4 : i32
    %226 = arith.index_cast %c4_i32 : i32 to index
    %c0_82 = arith.constant 0 : index
    %c0_83 = arith.constant 0 : index
    %227 = vector.load %arg2[%226, %c0_82, %c0_83] : memref<8x8x16xf32, #tpu.memory_space<vmem>>, vector<1x8x16xf32>
    %228 = vector.shape_cast %227 : vector<1x8x16xf32> to vector<8x16xf32>
    %229 = arith.index_cast %c4_i32 : i32 to index
    %c0_84 = arith.constant 0 : index
    %c0_85 = arith.constant 0 : index
    %230 = vector.load %arg3[%229, %c0_84, %c0_85] : memref<8x8x1xf32, #tpu.memory_space<vmem>>, vector<1x8x1xf32>
    %231 = vector.shape_cast %230 : vector<1x8x1xf32> to vector<8x1xf32>
    %cst_86 = arith.constant dense<0.000000e+00> : vector<8x512xf32>
    %232 = tpu.matmul %228, %5, %cst_86 {dimension_numbers = #tpu.dot_dimension_numbers<[1], [0], [0], [1], [0, 0, 1, 1], [], []>} : vector<8x16xf32>, vector<16x512xf32>, vector<8x512xf32> -> vector<8x512xf32>
    %233 = vector.broadcast %7 : vector<1x512xf32> to vector<8x512xf32>
    %234 = arith.addf %233, %232 : vector<8x512xf32>
    %cst_87 = arith.constant dense<0.000000e+00> : vector<8x512xf32>
    %235 = tpu.matmul %217, %6, %cst_87 {dimension_numbers = #tpu.dot_dimension_numbers<[1], [0], [0], [1], [0, 0, 1, 1], [], []>} : vector<8x128xf32>, vector<128x512xf32>, vector<8x512xf32> -> vector<8x512xf32>
    %236 = arith.addf %234, %235 : vector<8x512xf32>
    %237 = vector.extract_strided_slice %236 {offsets = [0, 0], sizes = [8, 128], strides = [1, 1]} : vector<8x512xf32> to vector<8x128xf32>
    %cst_88 = arith.constant 5.000000e-01 : f32
    %238 = vector.broadcast %cst_88 : f32 to vector<8x128xf32>
    %239 = arith.mulf %238, %237 : vector<8x128xf32>
    %240 = math.tanh %239 : vector<8x128xf32>
    %cst_89 = arith.constant 5.000000e-01 : f32
    %241 = vector.broadcast %cst_89 : f32 to vector<8x128xf32>
    %242 = arith.mulf %241, %240 : vector<8x128xf32>
    %cst_90 = arith.constant 5.000000e-01 : f32
    %243 = vector.broadcast %cst_90 : f32 to vector<8x128xf32>
    %244 = arith.addf %242, %243 : vector<8x128xf32>
    %245 = vector.extract_strided_slice %236 {offsets = [0, 128], sizes = [8, 128], strides = [1, 1]} : vector<8x512xf32> to vector<8x128xf32>
    %cst_91 = arith.constant 5.000000e-01 : f32
    %246 = vector.broadcast %cst_91 : f32 to vector<8x128xf32>
    %247 = arith.mulf %246, %245 : vector<8x128xf32>
    %248 = math.tanh %247 : vector<8x128xf32>
    %cst_92 = arith.constant 5.000000e-01 : f32
    %249 = vector.broadcast %cst_92 : f32 to vector<8x128xf32>
    %250 = arith.mulf %249, %248 : vector<8x128xf32>
    %cst_93 = arith.constant 5.000000e-01 : f32
    %251 = vector.broadcast %cst_93 : f32 to vector<8x128xf32>
    %252 = arith.addf %250, %251 : vector<8x128xf32>
    %253 = vector.extract_strided_slice %236 {offsets = [0, 256], sizes = [8, 128], strides = [1, 1]} : vector<8x512xf32> to vector<8x128xf32>
    %254 = math.tanh %253 : vector<8x128xf32>
    %255 = vector.extract_strided_slice %236 {offsets = [0, 384], sizes = [8, 128], strides = [1, 1]} : vector<8x512xf32> to vector<8x128xf32>
    %cst_94 = arith.constant 5.000000e-01 : f32
    %256 = vector.broadcast %cst_94 : f32 to vector<8x128xf32>
    %257 = arith.mulf %256, %255 : vector<8x128xf32>
    %258 = math.tanh %257 : vector<8x128xf32>
    %cst_95 = arith.constant 5.000000e-01 : f32
    %259 = vector.broadcast %cst_95 : f32 to vector<8x128xf32>
    %260 = arith.mulf %259, %258 : vector<8x128xf32>
    %cst_96 = arith.constant 5.000000e-01 : f32
    %261 = vector.broadcast %cst_96 : f32 to vector<8x128xf32>
    %262 = arith.addf %260, %261 : vector<8x128xf32>
    %263 = arith.mulf %252, %221 : vector<8x128xf32>
    %264 = arith.mulf %244, %254 : vector<8x128xf32>
    %265 = arith.addf %263, %264 : vector<8x128xf32>
    %266 = math.tanh %265 : vector<8x128xf32>
    %267 = arith.mulf %262, %266 : vector<8x128xf32>
    %268 = arith.subf %267, %3 : vector<8x128xf32>
    %269 = vector.broadcast %231 : vector<8x1xf32> to vector<8x128xf32>
    %270 = arith.mulf %269, %268 : vector<8x128xf32>
    %271 = arith.addf %3, %270 : vector<8x128xf32>
    %272 = arith.subf %265, %4 : vector<8x128xf32>
    %273 = vector.broadcast %231 : vector<8x1xf32> to vector<8x128xf32>
    %274 = arith.mulf %273, %272 : vector<8x128xf32>
    %275 = arith.addf %4, %274 : vector<8x128xf32>
    %276 = arith.index_cast %c4_i32 : i32 to index
    %c0_97 = arith.constant 0 : index
    %c0_98 = arith.constant 0 : index
    %277 = vector.load %arg9[%276, %c0_97, %c0_98] : memref<8x8x128xf32, #tpu.memory_space<vmem>>, vector<1x8x128xf32>
    %278 = vector.shape_cast %277 : vector<1x8x128xf32> to vector<8x128xf32>
    %279 = vector.shape_cast %271 : vector<8x128xf32> to vector<1x8x128xf32>
    tpu.vector_store %arg9[%276, %c0_97, %c0_98], %279 {strides = array<i32>} : memref<8x8x128xf32, #tpu.memory_space<vmem>>, vector<1x8x128xf32>,
    %c5_i32 = arith.constant 5 : i32
    %280 = arith.index_cast %c5_i32 : i32 to index
    %c0_99 = arith.constant 0 : index
    %c0_100 = arith.constant 0 : index
    %281 = vector.load %arg2[%280, %c0_99, %c0_100] : memref<8x8x16xf32, #tpu.memory_space<vmem>>, vector<1x8x16xf32>
    %282 = vector.shape_cast %281 : vector<1x8x16xf32> to vector<8x16xf32>
    %283 = arith.index_cast %c5_i32 : i32 to index
    %c0_101 = arith.constant 0 : index
    %c0_102 = arith.constant 0 : index
    %284 = vector.load %arg3[%283, %c0_101, %c0_102] : memref<8x8x1xf32, #tpu.memory_space<vmem>>, vector<1x8x1xf32>
    %285 = vector.shape_cast %284 : vector<1x8x1xf32> to vector<8x1xf32>
    %cst_103 = arith.constant dense<0.000000e+00> : vector<8x512xf32>
    %286 = tpu.matmul %282, %5, %cst_103 {dimension_numbers = #tpu.dot_dimension_numbers<[1], [0], [0], [1], [0, 0, 1, 1], [], []>} : vector<8x16xf32>, vector<16x512xf32>, vector<8x512xf32> -> vector<8x512xf32>
    %287 = vector.broadcast %7 : vector<1x512xf32> to vector<8x512xf32>
    %288 = arith.addf %287, %286 : vector<8x512xf32>
    %cst_104 = arith.constant dense<0.000000e+00> : vector<8x512xf32>
    %289 = tpu.matmul %271, %6, %cst_104 {dimension_numbers = #tpu.dot_dimension_numbers<[1], [0], [0], [1], [0, 0, 1, 1], [], []>} : vector<8x128xf32>, vector<128x512xf32>, vector<8x512xf32> -> vector<8x512xf32>
    %290 = arith.addf %288, %289 : vector<8x512xf32>
    %291 = vector.extract_strided_slice %290 {offsets = [0, 0], sizes = [8, 128], strides = [1, 1]} : vector<8x512xf32> to vector<8x128xf32>
    %cst_105 = arith.constant 5.000000e-01 : f32
    %292 = vector.broadcast %cst_105 : f32 to vector<8x128xf32>
    %293 = arith.mulf %292, %291 : vector<8x128xf32>
    %294 = math.tanh %293 : vector<8x128xf32>
    %cst_106 = arith.constant 5.000000e-01 : f32
    %295 = vector.broadcast %cst_106 : f32 to vector<8x128xf32>
    %296 = arith.mulf %295, %294 : vector<8x128xf32>
    %cst_107 = arith.constant 5.000000e-01 : f32
    %297 = vector.broadcast %cst_107 : f32 to vector<8x128xf32>
    %298 = arith.addf %296, %297 : vector<8x128xf32>
    %299 = vector.extract_strided_slice %290 {offsets = [0, 128], sizes = [8, 128], strides = [1, 1]} : vector<8x512xf32> to vector<8x128xf32>
    %cst_108 = arith.constant 5.000000e-01 : f32
    %300 = vector.broadcast %cst_108 : f32 to vector<8x128xf32>
    %301 = arith.mulf %300, %299 : vector<8x128xf32>
    %302 = math.tanh %301 : vector<8x128xf32>
    %cst_109 = arith.constant 5.000000e-01 : f32
    %303 = vector.broadcast %cst_109 : f32 to vector<8x128xf32>
    %304 = arith.mulf %303, %302 : vector<8x128xf32>
    %cst_110 = arith.constant 5.000000e-01 : f32
    %305 = vector.broadcast %cst_110 : f32 to vector<8x128xf32>
    %306 = arith.addf %304, %305 : vector<8x128xf32>
    %307 = vector.extract_strided_slice %290 {offsets = [0, 256], sizes = [8, 128], strides = [1, 1]} : vector<8x512xf32> to vector<8x128xf32>
    %308 = math.tanh %307 : vector<8x128xf32>
    %309 = vector.extract_strided_slice %290 {offsets = [0, 384], sizes = [8, 128], strides = [1, 1]} : vector<8x512xf32> to vector<8x128xf32>
    %cst_111 = arith.constant 5.000000e-01 : f32
    %310 = vector.broadcast %cst_111 : f32 to vector<8x128xf32>
    %311 = arith.mulf %310, %309 : vector<8x128xf32>
    %312 = math.tanh %311 : vector<8x128xf32>
    %cst_112 = arith.constant 5.000000e-01 : f32
    %313 = vector.broadcast %cst_112 : f32 to vector<8x128xf32>
    %314 = arith.mulf %313, %312 : vector<8x128xf32>
    %cst_113 = arith.constant 5.000000e-01 : f32
    %315 = vector.broadcast %cst_113 : f32 to vector<8x128xf32>
    %316 = arith.addf %314, %315 : vector<8x128xf32>
    %317 = arith.mulf %306, %275 : vector<8x128xf32>
    %318 = arith.mulf %298, %308 : vector<8x128xf32>
    %319 = arith.addf %317, %318 : vector<8x128xf32>
    %320 = math.tanh %319 : vector<8x128xf32>
    %321 = arith.mulf %316, %320 : vector<8x128xf32>
    %322 = arith.subf %321, %3 : vector<8x128xf32>
    %323 = vector.broadcast %285 : vector<8x1xf32> to vector<8x128xf32>
    %324 = arith.mulf %323, %322 : vector<8x128xf32>
    %325 = arith.addf %3, %324 : vector<8x128xf32>
    %326 = arith.subf %319, %4 : vector<8x128xf32>
    %327 = vector.broadcast %285 : vector<8x1xf32> to vector<8x128xf32>
    %328 = arith.mulf %327, %326 : vector<8x128xf32>
    %329 = arith.addf %4, %328 : vector<8x128xf32>
    %330 = arith.index_cast %c5_i32 : i32 to index
    %c0_114 = arith.constant 0 : index
    %c0_115 = arith.constant 0 : index
    %331 = vector.load %arg9[%330, %c0_114, %c0_115] : memref<8x8x128xf32, #tpu.memory_space<vmem>>, vector<1x8x128xf32>
    %332 = vector.shape_cast %331 : vector<1x8x128xf32> to vector<8x128xf32>
    %333 = vector.shape_cast %325 : vector<8x128xf32> to vector<1x8x128xf32>
    tpu.vector_store %arg9[%330, %c0_114, %c0_115], %333 {strides = array<i32>} : memref<8x8x128xf32, #tpu.memory_space<vmem>>, vector<1x8x128xf32>,
    %c6_i32 = arith.constant 6 : i32
    %334 = arith.index_cast %c6_i32 : i32 to index
    %c0_116 = arith.constant 0 : index
    %c0_117 = arith.constant 0 : index
    %335 = vector.load %arg2[%334, %c0_116, %c0_117] : memref<8x8x16xf32, #tpu.memory_space<vmem>>, vector<1x8x16xf32>
    %336 = vector.shape_cast %335 : vector<1x8x16xf32> to vector<8x16xf32>
    %337 = arith.index_cast %c6_i32 : i32 to index
    %c0_118 = arith.constant 0 : index
    %c0_119 = arith.constant 0 : index
    %338 = vector.load %arg3[%337, %c0_118, %c0_119] : memref<8x8x1xf32, #tpu.memory_space<vmem>>, vector<1x8x1xf32>
    %339 = vector.shape_cast %338 : vector<1x8x1xf32> to vector<8x1xf32>
    %cst_120 = arith.constant dense<0.000000e+00> : vector<8x512xf32>
    %340 = tpu.matmul %336, %5, %cst_120 {dimension_numbers = #tpu.dot_dimension_numbers<[1], [0], [0], [1], [0, 0, 1, 1], [], []>} : vector<8x16xf32>, vector<16x512xf32>, vector<8x512xf32> -> vector<8x512xf32>
    %341 = vector.broadcast %7 : vector<1x512xf32> to vector<8x512xf32>
    %342 = arith.addf %341, %340 : vector<8x512xf32>
    %cst_121 = arith.constant dense<0.000000e+00> : vector<8x512xf32>
    %343 = tpu.matmul %325, %6, %cst_121 {dimension_numbers = #tpu.dot_dimension_numbers<[1], [0], [0], [1], [0, 0, 1, 1], [], []>} : vector<8x128xf32>, vector<128x512xf32>, vector<8x512xf32> -> vector<8x512xf32>
    %344 = arith.addf %342, %343 : vector<8x512xf32>
    %345 = vector.extract_strided_slice %344 {offsets = [0, 0], sizes = [8, 128], strides = [1, 1]} : vector<8x512xf32> to vector<8x128xf32>
    %cst_122 = arith.constant 5.000000e-01 : f32
    %346 = vector.broadcast %cst_122 : f32 to vector<8x128xf32>
    %347 = arith.mulf %346, %345 : vector<8x128xf32>
    %348 = math.tanh %347 : vector<8x128xf32>
    %cst_123 = arith.constant 5.000000e-01 : f32
    %349 = vector.broadcast %cst_123 : f32 to vector<8x128xf32>
    %350 = arith.mulf %349, %348 : vector<8x128xf32>
    %cst_124 = arith.constant 5.000000e-01 : f32
    %351 = vector.broadcast %cst_124 : f32 to vector<8x128xf32>
    %352 = arith.addf %350, %351 : vector<8x128xf32>
    %353 = vector.extract_strided_slice %344 {offsets = [0, 128], sizes = [8, 128], strides = [1, 1]} : vector<8x512xf32> to vector<8x128xf32>
    %cst_125 = arith.constant 5.000000e-01 : f32
    %354 = vector.broadcast %cst_125 : f32 to vector<8x128xf32>
    %355 = arith.mulf %354, %353 : vector<8x128xf32>
    %356 = math.tanh %355 : vector<8x128xf32>
    %cst_126 = arith.constant 5.000000e-01 : f32
    %357 = vector.broadcast %cst_126 : f32 to vector<8x128xf32>
    %358 = arith.mulf %357, %356 : vector<8x128xf32>
    %cst_127 = arith.constant 5.000000e-01 : f32
    %359 = vector.broadcast %cst_127 : f32 to vector<8x128xf32>
    %360 = arith.addf %358, %359 : vector<8x128xf32>
    %361 = vector.extract_strided_slice %344 {offsets = [0, 256], sizes = [8, 128], strides = [1, 1]} : vector<8x512xf32> to vector<8x128xf32>
    %362 = math.tanh %361 : vector<8x128xf32>
    %363 = vector.extract_strided_slice %344 {offsets = [0, 384], sizes = [8, 128], strides = [1, 1]} : vector<8x512xf32> to vector<8x128xf32>
    %cst_128 = arith.constant 5.000000e-01 : f32
    %364 = vector.broadcast %cst_128 : f32 to vector<8x128xf32>
    %365 = arith.mulf %364, %363 : vector<8x128xf32>
    %366 = math.tanh %365 : vector<8x128xf32>
    %cst_129 = arith.constant 5.000000e-01 : f32
    %367 = vector.broadcast %cst_129 : f32 to vector<8x128xf32>
    %368 = arith.mulf %367, %366 : vector<8x128xf32>
    %cst_130 = arith.constant 5.000000e-01 : f32
    %369 = vector.broadcast %cst_130 : f32 to vector<8x128xf32>
    %370 = arith.addf %368, %369 : vector<8x128xf32>
    %371 = arith.mulf %360, %329 : vector<8x128xf32>
    %372 = arith.mulf %352, %362 : vector<8x128xf32>
    %373 = arith.addf %371, %372 : vector<8x128xf32>
    %374 = math.tanh %373 : vector<8x128xf32>
    %375 = arith.mulf %370, %374 : vector<8x128xf32>
    %376 = arith.subf %375, %3 : vector<8x128xf32>
    %377 = vector.broadcast %339 : vector<8x1xf32> to vector<8x128xf32>
    %378 = arith.mulf %377, %376 : vector<8x128xf32>
    %379 = arith.addf %3, %378 : vector<8x128xf32>
    %380 = arith.subf %373, %4 : vector<8x128xf32>
    %381 = vector.broadcast %339 : vector<8x1xf32> to vector<8x128xf32>
    %382 = arith.mulf %381, %380 : vector<8x128xf32>
    %383 = arith.addf %4, %382 : vector<8x128xf32>
    %384 = arith.index_cast %c6_i32 : i32 to index
    %c0_131 = arith.constant 0 : index
    %c0_132 = arith.constant 0 : index
    %385 = vector.load %arg9[%384, %c0_131, %c0_132] : memref<8x8x128xf32, #tpu.memory_space<vmem>>, vector<1x8x128xf32>
    %386 = vector.shape_cast %385 : vector<1x8x128xf32> to vector<8x128xf32>
    %387 = vector.shape_cast %379 : vector<8x128xf32> to vector<1x8x128xf32>
    tpu.vector_store %arg9[%384, %c0_131, %c0_132], %387 {strides = array<i32>} : memref<8x8x128xf32, #tpu.memory_space<vmem>>, vector<1x8x128xf32>,
    %c7_i32 = arith.constant 7 : i32
    %388 = arith.index_cast %c7_i32 : i32 to index
    %c0_133 = arith.constant 0 : index
    %c0_134 = arith.constant 0 : index
    %389 = vector.load %arg2[%388, %c0_133, %c0_134] : memref<8x8x16xf32, #tpu.memory_space<vmem>>, vector<1x8x16xf32>
    %390 = vector.shape_cast %389 : vector<1x8x16xf32> to vector<8x16xf32>
    %391 = arith.index_cast %c7_i32 : i32 to index
    %c0_135 = arith.constant 0 : index
    %c0_136 = arith.constant 0 : index
    %392 = vector.load %arg3[%391, %c0_135, %c0_136] : memref<8x8x1xf32, #tpu.memory_space<vmem>>, vector<1x8x1xf32>
    %393 = vector.shape_cast %392 : vector<1x8x1xf32> to vector<8x1xf32>
    %cst_137 = arith.constant dense<0.000000e+00> : vector<8x512xf32>
    %394 = tpu.matmul %390, %5, %cst_137 {dimension_numbers = #tpu.dot_dimension_numbers<[1], [0], [0], [1], [0, 0, 1, 1], [], []>} : vector<8x16xf32>, vector<16x512xf32>, vector<8x512xf32> -> vector<8x512xf32>
    %395 = vector.broadcast %7 : vector<1x512xf32> to vector<8x512xf32>
    %396 = arith.addf %395, %394 : vector<8x512xf32>
    %cst_138 = arith.constant dense<0.000000e+00> : vector<8x512xf32>
    %397 = tpu.matmul %379, %6, %cst_138 {dimension_numbers = #tpu.dot_dimension_numbers<[1], [0], [0], [1], [0, 0, 1, 1], [], []>} : vector<8x128xf32>, vector<128x512xf32>, vector<8x512xf32> -> vector<8x512xf32>
    %398 = arith.addf %396, %397 : vector<8x512xf32>
    %399 = vector.extract_strided_slice %398 {offsets = [0, 0], sizes = [8, 128], strides = [1, 1]} : vector<8x512xf32> to vector<8x128xf32>
    %cst_139 = arith.constant 5.000000e-01 : f32
    %400 = vector.broadcast %cst_139 : f32 to vector<8x128xf32>
    %401 = arith.mulf %400, %399 : vector<8x128xf32>
    %402 = math.tanh %401 : vector<8x128xf32>
    %cst_140 = arith.constant 5.000000e-01 : f32
    %403 = vector.broadcast %cst_140 : f32 to vector<8x128xf32>
    %404 = arith.mulf %403, %402 : vector<8x128xf32>
    %cst_141 = arith.constant 5.000000e-01 : f32
    %405 = vector.broadcast %cst_141 : f32 to vector<8x128xf32>
    %406 = arith.addf %404, %405 : vector<8x128xf32>
    %407 = vector.extract_strided_slice %398 {offsets = [0, 128], sizes = [8, 128], strides = [1, 1]} : vector<8x512xf32> to vector<8x128xf32>
    %cst_142 = arith.constant 5.000000e-01 : f32
    %408 = vector.broadcast %cst_142 : f32 to vector<8x128xf32>
    %409 = arith.mulf %408, %407 : vector<8x128xf32>
    %410 = math.tanh %409 : vector<8x128xf32>
    %cst_143 = arith.constant 5.000000e-01 : f32
    %411 = vector.broadcast %cst_143 : f32 to vector<8x128xf32>
    %412 = arith.mulf %411, %410 : vector<8x128xf32>
    %cst_144 = arith.constant 5.000000e-01 : f32
    %413 = vector.broadcast %cst_144 : f32 to vector<8x128xf32>
    %414 = arith.addf %412, %413 : vector<8x128xf32>
    %415 = vector.extract_strided_slice %398 {offsets = [0, 256], sizes = [8, 128], strides = [1, 1]} : vector<8x512xf32> to vector<8x128xf32>
    %416 = math.tanh %415 : vector<8x128xf32>
    %417 = vector.extract_strided_slice %398 {offsets = [0, 384], sizes = [8, 128], strides = [1, 1]} : vector<8x512xf32> to vector<8x128xf32>
    %cst_145 = arith.constant 5.000000e-01 : f32
    %418 = vector.broadcast %cst_145 : f32 to vector<8x128xf32>
    %419 = arith.mulf %418, %417 : vector<8x128xf32>
    %420 = math.tanh %419 : vector<8x128xf32>
    %cst_146 = arith.constant 5.000000e-01 : f32
    %421 = vector.broadcast %cst_146 : f32 to vector<8x128xf32>
    %422 = arith.mulf %421, %420 : vector<8x128xf32>
    %cst_147 = arith.constant 5.000000e-01 : f32
    %423 = vector.broadcast %cst_147 : f32 to vector<8x128xf32>
    %424 = arith.addf %422, %423 : vector<8x128xf32>
    %425 = arith.mulf %414, %383 : vector<8x128xf32>
    %426 = arith.mulf %406, %416 : vector<8x128xf32>
    %427 = arith.addf %425, %426 : vector<8x128xf32>
    %428 = math.tanh %427 : vector<8x128xf32>
    %429 = arith.mulf %424, %428 : vector<8x128xf32>
    %430 = arith.subf %429, %3 : vector<8x128xf32>
    %431 = vector.broadcast %393 : vector<8x1xf32> to vector<8x128xf32>
    %432 = arith.mulf %431, %430 : vector<8x128xf32>
    %433 = arith.addf %3, %432 : vector<8x128xf32>
    %434 = arith.subf %427, %4 : vector<8x128xf32>
    %435 = vector.broadcast %393 : vector<8x1xf32> to vector<8x128xf32>
    %436 = arith.mulf %435, %434 : vector<8x128xf32>
    %437 = arith.addf %4, %436 : vector<8x128xf32>
    %438 = arith.index_cast %c7_i32 : i32 to index
    %c0_148 = arith.constant 0 : index
    %c0_149 = arith.constant 0 : index
    %439 = vector.load %arg9[%438, %c0_148, %c0_149] : memref<8x8x128xf32, #tpu.memory_space<vmem>>, vector<1x8x128xf32>
    %440 = vector.shape_cast %439 : vector<1x8x128xf32> to vector<8x128xf32>
    %441 = vector.shape_cast %433 : vector<8x128xf32> to vector<1x8x128xf32>
    tpu.vector_store %arg9[%438, %c0_148, %c0_149], %441 {strides = array<i32>} : memref<8x8x128xf32, #tpu.memory_space<vmem>>, vector<1x8x128xf32>,
    %c8_i32 = arith.constant 8 : i32
    %c0_150 = arith.constant 0 : index
    %c0_151 = arith.constant 0 : index
    %442 = vector.load %arg12[%c0_150, %c0_151] : memref<8x128xf32, #tpu.memory_space<vmem>>, vector<8x128xf32>
    tpu.vector_store %arg12[%c0_150, %c0_151], %433 {strides = array<i32>} : memref<8x128xf32, #tpu.memory_space<vmem>>, vector<8x128xf32>,
    %c0_152 = arith.constant 0 : index
    %c0_153 = arith.constant 0 : index
    %443 = vector.load %arg13[%c0_152, %c0_153] : memref<8x128xf32, #tpu.memory_space<vmem>>, vector<8x128xf32>
    tpu.vector_store %arg13[%c0_152, %c0_153], %437 {strides = array<i32>} : memref<8x128xf32, #tpu.memory_space<vmem>>, vector<8x128xf32>,
    %c0_i32_154 = arith.constant 0 : i32
    %444 = arith.cmpi eq, %arg1, %c0_i32_154 : i32
    %445 = arith.extui %444 : i1 to i32
    %c0_i32_155 = arith.constant 0 : i32
    %446 = arith.cmpi ne, %445, %c0_i32_155 : i32
    scf.if %446 {
      %c0_156 = arith.constant 0 : index
      %c0_157 = arith.constant 0 : index
      %447 = vector.load %arg10[%c0_156, %c0_157] : memref<8x128xf32, #tpu.memory_space<vmem>>, vector<8x128xf32>
      tpu.vector_store %arg10[%c0_156, %c0_157], %433 {strides = array<i32>} : memref<8x128xf32, #tpu.memory_space<vmem>>, vector<8x128xf32>,
      %c0_158 = arith.constant 0 : index
      %c0_159 = arith.constant 0 : index
      %448 = vector.load %arg11[%c0_158, %c0_159] : memref<8x128xf32, #tpu.memory_space<vmem>>, vector<8x128xf32>
      tpu.vector_store %arg11[%c0_158, %c0_159], %437 {strides = array<i32>} : memref<8x128xf32, #tpu.memory_space<vmem>>, vector<8x128xf32>,
    } else {
    }
    return
  }
  func.func @transform_0(%arg0: i32, %arg1: i32) -> (i32, i32, i32) {
    %c0_i32 = arith.constant 0 : i32
    %c0_i32_0 = arith.constant 0 : i32
    return %arg1, %arg0, %c0_i32 : i32, i32, i32
  }
  func.func @transform_1(%arg0: i32, %arg1: i32) -> (i32, i32, i32) {
    %c0_i32 = arith.constant 0 : i32
    %c0_i32_0 = arith.constant 0 : i32
    return %arg1, %arg0, %c0_i32 : i32, i32, i32
  }
  func.func @transform_2(%arg0: i32, %arg1: i32) -> (i32, i32) {
    %c0_i32 = arith.constant 0 : i32
    %c0_i32_0 = arith.constant 0 : i32
    %c0_i32_1 = arith.constant 0 : i32
    return %c0_i32, %c0_i32_0 : i32, i32
  }
  func.func @transform_3(%arg0: i32, %arg1: i32) -> (i32, i32) {
    %c0_i32 = arith.constant 0 : i32
    %c0_i32_0 = arith.constant 0 : i32
    %c0_i32_1 = arith.constant 0 : i32
    return %c0_i32, %c0_i32_0 : i32, i32
  }
  func.func @transform_4(%arg0: i32, %arg1: i32) -> (i32, i32) {
    %c0_i32 = arith.constant 0 : i32
    %c0_i32_0 = arith.constant 0 : i32
    %c0_i32_1 = arith.constant 0 : i32
    return %c0_i32, %c0_i32_0 : i32, i32
  }
  func.func @transform_5(%arg0: i32, %arg1: i32) -> (i32, i32) {
    %c0_i32 = arith.constant 0 : i32
    %c0_i32_0 = arith.constant 0 : i32
    return %arg0, %c0_i32 : i32, i32
  }
  func.func @transform_6(%arg0: i32, %arg1: i32) -> (i32, i32) {
    %c0_i32 = arith.constant 0 : i32
    %c0_i32_0 = arith.constant 0 : i32
    return %arg0, %c0_i32 : i32, i32
  }
  func.func @transform_7(%arg0: i32, %arg1: i32) -> (i32, i32, i32) {
    %c0_i32 = arith.constant 0 : i32
    %c0_i32_0 = arith.constant 0 : i32
    return %arg1, %arg0, %c0_i32 : i32, i32, i32
  }
  func.func @transform_8(%arg0: i32, %arg1: i32) -> (i32, i32) {
    %c0_i32 = arith.constant 0 : i32
    %c0_i32_0 = arith.constant 0 : i32
    return %arg0, %c0_i32 : i32, i32
  }
  func.func @transform_9(%arg0: i32, %arg1: i32) -> (i32, i32) {
    %c0_i32 = arith.constant 0 : i32
    %c0_i32_0 = arith.constant 0 : i32
    return %arg0, %c0_i32 : i32, i32
  }
}

</mosaic_0001>

<llo_original>
// kernel: tpu_custom_call.1
$region0: #{tpu_custom_call.1}
  #allocation0 [shape = 'u32[]', space=smem, size = 0x4, offset = 0x4, fixed_abs, tag = 'smem constant byte address 0x4 - core index']
  #allocation1 [shape = 'u32[72,128]{1,0:T(1,128)}', space=vmem, size = 0x9000, scoped, tag = 'internal scratch']
  #allocation2 [shape = 'f32[8,128]{1,0:T(8,128)}', space=vmem, size = 0x1000, scoped, tag = 'scratch operand']
  #allocation3 [shape = 'f32[8,128]{1,0:T(8,128)}', space=vmem, size = 0x1000, scoped, tag = 'scratch operand']
  %s0 = inlined_call_operand.vmem [shape: f32[8,8,16], index: 0, kind: input, shape index: {}]
  %s1 = inlined_call_operand.vmem [shape: f32[8,8,1], index: 1, kind: input, shape index: {}]
  %s2 = inlined_call_operand.hbm [shape: f32[16,512], index: 2, kind: input, shape index: {}]
  %s3 = inlined_call_operand.hbm [shape: f32[128,512], index: 3, kind: input, shape index: {}]
  %s4 = inlined_call_operand.hbm [shape: f32[1,512], index: 4, kind: input, shape index: {}]
  %s5 = inlined_call_operand.vmem [shape: f32[8,128], index: 5, kind: input, shape index: {}]
  %s6 = inlined_call_operand.hbm [shape: f32[8,128], index: 6, kind: input, shape index: {}]
  %s7 = inlined_call_operand.hbm [shape: f32[8,8,128], index: 7, kind: output, shape index: {0}]
  %s8 = inlined_call_operand.hbm [shape: f32[8,128], index: 8, kind: output, shape index: {1}]
  %s9 = inlined_call_operand.hbm [shape: f32[8,128], index: 9, kind: output, shape index: {2}]
  %10 = xla_tuple %s7, %s8, %s9
  %s11 = sld [smem:[#allocation0]]
  $region78: #{tpu_custom_call.1} parent=0
    _
  %s13 = ssub.s32 1, %s11
  %s14 = scalar_select 0, %s13, %s11
  $region1: #{tpu_custom_call.1} parent=0
    #allocation4 [shape = 'u8[32768]{0}', space=vmem, size = 0x8000, scoped, tag = 'input window, operand 2, single buffered']
    #allocation5 [shape = 's32[1]{0}', space=sflag, size = 0x4, scoped, tag = 'scoped memory for tpu_custom_call.1']
    #allocation6 [shape = 's32[1]{0}', space=sflag, size = 0x4, scoped, tag = 'scoped memory for tpu_custom_call.1']
    #allocation7 [shape = 'u8[262144]{0}', space=vmem, size = 0x40000, scoped, tag = 'input window, operand 3, single buffered']
    #allocation8 [shape = 's32[1]{0}', space=sflag, size = 0x4, scoped, tag = 'scoped memory for tpu_custom_call.1']
    #allocation9 [shape = 'u8[2048]{0}', space=vmem, size = 0x800, scoped, tag = 'input window, operand 4, single buffered']
    #allocation10 [shape = 'u8[4096]{0}', space=vmem, size = 0x1000, scoped, tag = 'input window, operand 6, single buffered']
    #allocation11 [shape = 's32[1]{0}', space=sflag, size = 0x4, scoped, tag = 'scoped memory for tpu_custom_call.1']
    #allocation12 [shape = 'u8[32768]{0}', space=vmem, size = 0x8000, scoped, tag = 'output window, operand 0, single buffered']
    #allocation13 [shape = 'u8[4096]{0}', space=vmem, size = 0x1000, scoped, tag = 'output window, operand 1, single buffered']
    #allocation14 [shape = 's32[1]{0}', space=sflag, size = 0x4, scoped, tag = 'scoped memory for tpu_custom_call.1']
    #allocation15 [shape = 'u8[4096]{0}', space=vmem, size = 0x1000, scoped, tag = 'output window, operand 2, single buffered']
    %15 = vsyncpa [#allocation5], 0
    %16 = vsyncpa [#allocation8], 0
    %17 = vsyncpa [#allocation11], 0
    %18 = vsyncpa [#allocation6], 0
    %19 = vsyncpa [#allocation14], 0
    // Predicated region
    $region2: #{tpu_custom_call.1} parent=1 // pred_check
      _
    $region3: #{tpu_custom_call.1} parent=1 // pred_check_branch
      %21 = sbr.rel (0) target = $region5
    $region4: #{tpu_custom_call.1} parent=1 // pred_region
      _
    $region5: #{tpu_custom_call.1} parent=1 // pred_fallthru
      _
    // Predicated region
    $region6: #{tpu_custom_call.1} parent=1 // pred_check
      _
    $region7: #{tpu_custom_call.1} parent=1 // pred_check_branch
      %23 = sbr.rel (0) target = $region9
    $region8: #{tpu_custom_call.1} parent=1 // pred_region
      _
    $region9: #{tpu_custom_call.1} parent=1 // pred_fallthru
      _
    // Predicated region
    $region10: #{tpu_custom_call.1} parent=1 // pred_check
      _
    $region11: #{tpu_custom_call.1} parent=1 // pred_check_branch
      %25 = sbr.rel (0) target = $region13
    $region12: #{tpu_custom_call.1} parent=1 // pred_region
      %27 = vsyncadd [#allocation5], 0
      %s28 = sshll.u32 %s2, 4
      %s29 = int_to_ptr.hbm [resolvable:$true] %s28
      %s30 = sshll.u32 [#allocation4], 4
      %s31 = int_to_ptr.vmem [resolvable:$true] %s30
      %36 = dma.hbm_to_vmem [thread:$0]  %s29, 1024, %s31, [#allocation5], 512, 512, 32
    $region13: #{tpu_custom_call.1} parent=1 // pred_fallthru
      _
    // Predicated region
    $region14: #{tpu_custom_call.1} parent=1 // pred_check
      _
    $region15: #{tpu_custom_call.1} parent=1 // pred_check_branch
      %38 = sbr.rel (0) target = $region17
    $region16: #{tpu_custom_call.1} parent=1 // pred_region
      %40 = vsyncadd [#allocation8], 0
      %s41 = sshll.u32 %s3, 4
      %s42 = int_to_ptr.hbm [resolvable:$true] %s41
      %s43 = sshll.u32 [#allocation7], 4
      %s44 = int_to_ptr.vmem [resolvable:$true] %s43
      %49 = dma.hbm_to_vmem [thread:$0]  %s42, 8192, %s44, [#allocation8], 512, 512, 32
    $region17: #{tpu_custom_call.1} parent=1 // pred_fallthru
      _
    // Predicated region
    $region18: #{tpu_custom_call.1} parent=1 // pred_check
      _
    $region19: #{tpu_custom_call.1} parent=1 // pred_check_branch
      %51 = sbr.rel (0) target = $region21
    $region20: #{tpu_custom_call.1} parent=1 // pred_region
      %53 = vsyncadd [#allocation8], 0
      %s55 = sshll.u32 %s4, 4
      %s56 = int_to_ptr.hbm [resolvable:$true] %s55
      %s57 = sshll.u32 [#allocation9], 4
      %s58 = int_to_ptr.vmem [resolvable:$true] %s57
      %60 = dma.hbm_to_vmem [thread:$0]  %s56, 64, %s58, [#allocation8]
    $region21: #{tpu_custom_call.1} parent=1 // pred_fallthru
      _
    // Predicated region
    $region22: #{tpu_custom_call.1} parent=1 // pred_check
      _
    $region23: #{tpu_custom_call.1} parent=1 // pred_check_branch
      %62 = sbr.rel (0) target = $region25
    $region24: #{tpu_custom_call.1} parent=1 // pred_region
      _
    $region25: #{tpu_custom_call.1} parent=1 // pred_fallthru
      _
    // Predicated region
    $region26: #{tpu_custom_call.1} parent=1 // pred_check
      _
    $region27: #{tpu_custom_call.1} parent=1 // pred_check_branch
      %64 = sbr.rel (0) target = $region29
    $region28: #{tpu_custom_call.1} parent=1 // pred_region
      %66 = vsyncadd [#allocation11], 0
      %s68 = sshll.u32 %s6, 4
      %s69 = int_to_ptr.hbm [resolvable:$true] %s68
      %s70 = sshll.u32 [#allocation10], 4
      %s71 = int_to_ptr.vmem [resolvable:$true] %s70
      %73 = dma.hbm_to_vmem [thread:$0]  %s69, 128, %s71, [#allocation11]
    $region29: #{tpu_custom_call.1} parent=1 // pred_fallthru
      _
    // Predicated region
    $region30: #{tpu_custom_call.1} parent=1 // pred_check
      _
    $region31: #{tpu_custom_call.1} parent=1 // pred_check_branch
      %75 = sbr.rel (0) target = $region33
    $region32: #{tpu_custom_call.1} parent=1 // pred_region
      %77 = dma.done [#allocation5], 1024
    $region33: #{tpu_custom_call.1} parent=1 // pred_fallthru
      _
    // Predicated region
    $region34: #{tpu_custom_call.1} parent=1 // pred_check
      _
    $region35: #{tpu_custom_call.1} parent=1 // pred_check_branch
      %79 = sbr.rel (0) target = $region37
    $region36: #{tpu_custom_call.1} parent=1 // pred_region
      %81 = dma.done [#allocation8], 8192
    $region37: #{tpu_custom_call.1} parent=1 // pred_fallthru
      _
    // Predicated region
    $region38: #{tpu_custom_call.1} parent=1 // pred_check
      _
    $region39: #{tpu_custom_call.1} parent=1 // pred_check_branch
      %83 = sbr.rel (0) target = $region41
    $region40: #{tpu_custom_call.1} parent=1 // pred_region
      %85 = dma.done [#allocation8], 64
    $region41: #{tpu_custom_call.1} parent=1 // pred_fallthru
      _
    // Predicated region
    $region42: #{tpu_custom_call.1} parent=1 // pred_check
      _
    $region43: #{tpu_custom_call.1} parent=1 // pred_check_branch
      %87 = sbr.rel (0) target = $region45
    $region44: #{tpu_custom_call.1} parent=1 // pred_region
      %89 = dma.done [#allocation11], 128
    $region45: #{tpu_custom_call.1} parent=1 // pred_fallthru
      _
    %p90 = scmp.eq.s32.totalorder 0, 0
    // Predicated region
    $region46: #{tpu_custom_call.1} parent=1 // pred_check
      %p91 = pneg %p90
    $region47: #{tpu_custom_call.1} parent=1 // pred_check_branch
      %93 = sbr.rel (%p91) target = $region49
    $region48: #{tpu_custom_call.1} parent=1 // pred_region
      %v94 = vld [vmem:[%s5] sm:$0xff]
      %95 = vst [vmem:[#allocation2] sm:$0xff] %v94
      %v96 = vld [vmem:[#allocation10] sm:$0xff]
      %97 = vst [vmem:[#allocation3] sm:$0xff] %v96
    $region49: #{tpu_custom_call.1} parent=1 // pred_fallthru
      _
    %v98 = vld [vmem:[%s5] sm:$0xff]
    %v99 = vld [vmem:[#allocation10] sm:$0xff]
    %v100 = vld [vmem:[#allocation4] sm:$0xff]
    %v101 = vld [vmem:[#allocation4 + $0x8] sm:$0xff]
    %v102 = vld [vmem:[#allocation4 + $0x10] sm:$0xff]
    %v103 = vld [vmem:[#allocation4 + $0x18] sm:$0xff]
    %v104 = vld [vmem:[#allocation4 + $0x20] sm:$0xff]
    %v105 = vld [vmem:[#allocation4 + $0x28] sm:$0xff]
    %v106 = vld [vmem:[#allocation4 + $0x30] sm:$0xff]
    %v107 = vld [vmem:[#allocation4 + $0x38] sm:$0xff]
    %v108 = vld [vmem:[#allocation7] sm:$0xff]
    %v109 = vld [vmem:[#allocation7 + $0x8] sm:$0xff]
    %v110 = vld [vmem:[#allocation7 + $0x10] sm:$0xff]
    %v111 = vld [vmem:[#allocation7 + $0x18] sm:$0xff]
    %v112 = vld [vmem:[#allocation7 + $0x20] sm:$0xff]
    %v113 = vld [vmem:[#allocation7 + $0x28] sm:$0xff]
    %v114 = vld [vmem:[#allocation7 + $0x30] sm:$0xff]
    %v115 = vld [vmem:[#allocation7 + $0x38] sm:$0xff]
    %v116 = vld [vmem:[#allocation7 + $0x40] sm:$0xff]
    %v117 = vld [vmem:[#allocation7 + $0x48] sm:$0xff]
    %v118 = vld [vmem:[#allocation7 + $0x50] sm:$0xff]
    %v119 = vld [vmem:[#allocation7 + $0x58] sm:$0xff]
    %v120 = vld [vmem:[#allocation7 + $0x60] sm:$0xff]
    %v121 = vld [vmem:[#allocation7 + $0x68] sm:$0xff]
    %v122 = vld [vmem:[#allocation7 + $0x70] sm:$0xff]
    %v123 = vld [vmem:[#allocation7 + $0x78] sm:$0xff]
    %v124 = vld [vmem:[#allocation7 + $0x80] sm:$0xff]
    %v125 = vld [vmem:[#allocation7 + $0x88] sm:$0xff]
    %v126 = vld [vmem:[#allocation7 + $0x90] sm:$0xff]
    %v127 = vld [vmem:[#allocation7 + $0x98] sm:$0xff]
    %v128 = vld [vmem:[#allocation7 + $0xa0] sm:$0xff]
    %v129 = vld [vmem:[#allocation7 + $0xa8] sm:$0xff]
    %v130 = vld [vmem:[#allocation7 + $0xb0] sm:$0xff]
    %v131 = vld [vmem:[#allocation7 + $0xb8] sm:$0xff]
    %v132 = vld [vmem:[#allocation7 + $0xc0] sm:$0xff]
    %v133 = vld [vmem:[#allocation7 + $0xc8] sm:$0xff]
    %v134 = vld [vmem:[#allocation7 + $0xd0] sm:$0xff]
    %v135 = vld [vmem:[#allocation7 + $0xd8] sm:$0xff]
    %v136 = vld [vmem:[#allocation7 + $0xe0] sm:$0xff]
    %v137 = vld [vmem:[#allocation7 + $0xe8] sm:$0xff]
    %v138 = vld [vmem:[#allocation7 + $0xf0] sm:$0xff]
    %v139 = vld [vmem:[#allocation7 + $0xf8] sm:$0xff]
    %v140 = vld [vmem:[#allocation7 + $0x100] sm:$0xff]
    %v141 = vld [vmem:[#allocation7 + $0x108] sm:$0xff]
    %v142 = vld [vmem:[#allocation7 + $0x110] sm:$0xff]
    %v143 = vld [vmem:[#allocation7 + $0x118] sm:$0xff]
    %v144 = vld [vmem:[#allocation7 + $0x120] sm:$0xff]
    %v145 = vld [vmem:[#allocation7 + $0x128] sm:$0xff]
    %v146 = vld [vmem:[#allocation7 + $0x130] sm:$0xff]
    %v147 = vld [vmem:[#allocation7 + $0x138] sm:$0xff]
    %v148 = vld [vmem:[#allocation7 + $0x140] sm:$0xff]
    %v149 = vld [vmem:[#allocation7 + $0x148] sm:$0xff]
    %v150 = vld [vmem:[#allocation7 + $0x150] sm:$0xff]
    %v151 = vld [vmem:[#allocation7 + $0x158] sm:$0xff]
    %v152 = vld [vmem:[#allocation7 + $0x160] sm:$0xff]
    %v153 = vld [vmem:[#allocation7 + $0x168] sm:$0xff]
    %v154 = vld [vmem:[#allocation7 + $0x170] sm:$0xff]
    %v155 = vld [vmem:[#allocation7 + $0x178] sm:$0xff]
    %v156 = vld [vmem:[#allocation7 + $0x180] sm:$0xff]
    %v157 = vld [vmem:[#allocation7 + $0x188] sm:$0xff]
    %v158 = vld [vmem:[#allocation7 + $0x190] sm:$0xff]
    %v159 = vld [vmem:[#allocation7 + $0x198] sm:$0xff]
    %v160 = vld [vmem:[#allocation7 + $0x1a0] sm:$0xff]
    %v161 = vld [vmem:[#allocation7 + $0x1a8] sm:$0xff]
    %v162 = vld [vmem:[#allocation7 + $0x1b0] sm:$0xff]
    %v163 = vld [vmem:[#allocation7 + $0x1b8] sm:$0xff]
    %v164 = vld [vmem:[#allocation7 + $0x1c0] sm:$0xff]
    %v165 = vld [vmem:[#allocation7 + $0x1c8] sm:$0xff]
    %v166 = vld [vmem:[#allocation7 + $0x1d0] sm:$0xff]
    %v167 = vld [vmem:[#allocation7 + $0x1d8] sm:$0xff]
    %v168 = vld [vmem:[#allocation7 + $0x1e0] sm:$0xff]
    %v169 = vld [vmem:[#allocation7 + $0x1e8] sm:$0xff]
    %v170 = vld [vmem:[#allocation7 + $0x1f0] sm:$0xff]
    %v171 = vld [vmem:[#allocation7 + $0x1f8] sm:$0xff]
    %v172 = vld [vmem:[#allocation9] sm:$0xf]
    %v173 = vld [vmem:[#allocation2] sm:$0xff]
    %v174 = vld [vmem:[#allocation3] sm:$0xff]
    %v175 = vld [vmem:[%s0] sm:$0xff]
    %v176 = vld [vmem:[%s1] sm:$0xff]
    %vm177 = vcmask 130048
    %v179 = vsel %vm177, %v175, 0
    %181 = vmatpush.msra.mxu0 0.0
    %182 = vmatpush.msra.mxu0 0.0
    %183 = vmatpush.msra.mxu0 0.0
    %184 = vmatpush.msra.mxu0 0.0
    %185 = vmatpush.msra.mxu0 0.0
    %186 = vmatpush.msra.mxu0 0.0
    %187 = vmatpush.msra.mxu0 0.0
    %188 = vmatpush.msra.mxu0 0.0
    %189 = vmatpush.msra.mxu0 0.0
    %190 = vmatpush.msra.mxu0 0.0
    %191 = vmatpush.msra.mxu0 0.0
    %192 = vmatpush.msra.mxu0 0.0
    %193 = vmatpush.msra.mxu0 0.0
    %194 = vmatpush.msra.mxu0 0.0
    %195 = vmatpush.msra.mxu0 %v104
    %196 = vmatpush.msra.mxu0 %v100
    %197 = vmatmul.f32.gmra.mxu0 %v179
    %v198 = vpop.f32.mrf.mxu0
    %v199 = vadd.f32 0.0, %v198
    %200 = vdwg.mxu0
    %201 = vmatpush.msra.mxu0 0.0
    %202 = vmatpush.msra.mxu0 0.0
    %203 = vmatpush.msra.mxu0 0.0
    %204 = vmatpush.msra.mxu0 0.0
    %205 = vmatpush.msra.mxu0 0.0
    %206 = vmatpush.msra.mxu0 0.0
    %207 = vmatpush.msra.mxu0 0.0
    %208 = vmatpush.msra.mxu0 0.0
    %209 = vmatpush.msra.mxu0 0.0
    %210 = vmatpush.msra.mxu0 0.0
    %211 = vmatpush.msra.mxu0 0.0
    %212 = vmatpush.msra.mxu0 0.0
    %213 = vmatpush.msra.mxu0 0.0
    %214 = vmatpush.msra.mxu0 0.0
    %215 = vmatpush.msra.mxu0 %v105
    %216 = vmatpush.msra.mxu0 %v101
    %217 = vmatmul.f32.gmra.mxu0 %v179
    %v218 = vpop.f32.mrf.mxu0
    %v219 = vadd.f32 0.0, %v218
    %220 = vdwg.mxu0
    %221 = vmatpush.msra.mxu0 0.0
    %222 = vmatpush.msra.mxu0 0.0
    %223 = vmatpush.msra.mxu0 0.0
    %224 = vmatpush.msra.mxu0 0.0
    %225 = vmatpush.msra.mxu0 0.0
    %226 = vmatpush.msra.mxu0 0.0
    %227 = vmatpush.msra.mxu0 0.0
    %228 = vmatpush.msra.mxu0 0.0
    %229 = vmatpush.msra.mxu0 0.0
    %230 = vmatpush.msra.mxu0 0.0
    %231 = vmatpush.msra.mxu0 0.0
    %232 = vmatpush.msra.mxu0 0.0
    %233 = vmatpush.msra.mxu0 0.0
    %234 = vmatpush.msra.mxu0 0.0
    %235 = vmatpush.msra.mxu0 %v106
    %236 = vmatpush.msra.mxu0 %v102
    %237 = vmatmul.f32.gmra.mxu0 %v179
    %v238 = vpop.f32.mrf.mxu0
    %v239 = vadd.f32 0.0, %v238
    %240 = vdwg.mxu0
    %241 = vmatpush.msra.mxu0 0.0
    %242 = vmatpush.msra.mxu0 0.0
    %243 = vmatpush.msra.mxu0 0.0
    %244 = vmatpush.msra.mxu0 0.0
    %245 = vmatpush.msra.mxu0 0.0
    %246 = vmatpush.msra.mxu0 0.0
    %247 = vmatpush.msra.mxu0 0.0
    %248 = vmatpush.msra.mxu0 0.0
    %249 = vmatpush.msra.mxu0 0.0
    %250 = vmatpush.msra.mxu0 0.0
    %251 = vmatpush.msra.mxu0 0.0
    %252 = vmatpush.msra.mxu0 0.0
    %253 = vmatpush.msra.mxu0 0.0
    %254 = vmatpush.msra.mxu0 0.0
    %255 = vmatpush.msra.mxu0 %v107
    %256 = vmatpush.msra.mxu0 %v103
    %257 = vmatmul.f32.gmra.mxu0 %v179
    %v258 = vpop.f32.mrf.mxu0
    %v259 = vadd.f32 0.0, %v258
    %260 = vdwg.mxu0
    %v262 = vperm.slane %v172, 0
    %v263 = vperm.slane %v172, 1
    %v264 = vperm.slane %v172, 2
    %v265 = vperm.slane %v172, 3
    %v270 = vadd.f32 %v262, %v199
    %v271 = vadd.f32 %v263, %v219
    %v272 = vadd.f32 %v264, %v239
    %v273 = vadd.f32 %v265, %v259
    %274 = vmatpush.msra.mxu0 %v168
    %275 = vmatpush.msra.mxu0 %v164
    %276 = vmatpush.msra.mxu0 %v160
    %277 = vmatpush.msra.mxu0 %v156
    %278 = vmatpush.msra.mxu0 %v152
    %279 = vmatpush.msra.mxu0 %v148
    %280 = vmatpush.msra.mxu0 %v144
    %281 = vmatpush.msra.mxu0 %v140
    %282 = vmatpush.msra.mxu0 %v136
    %283 = vmatpush.msra.mxu0 %v132
    %284 = vmatpush.msra.mxu0 %v128
    %285 = vmatpush.msra.mxu0 %v124
    %286 = vmatpush.msra.mxu0 %v120
    %287 = vmatpush.msra.mxu0 %v116
    %288 = vmatpush.msra.mxu0 %v112
    %289 = vmatpush.msra.mxu0 %v108
    %290 = vmatmul.f32.gmra.mxu0 %v173
    %v291 = vpop.f32.mrf.mxu0
    %v292 = vadd.f32 0.0, %v291
    %293 = vdwg.mxu0
    %294 = vmatpush.msra.mxu0 %v169
    %295 = vmatpush.msra.mxu0 %v165
    %296 = vmatpush.msra.mxu0 %v161
    %297 = vmatpush.msra.mxu0 %v157
    %298 = vmatpush.msra.mxu0 %v153
    %299 = vmatpush.msra.mxu0 %v149
    %300 = vmatpush.msra.mxu0 %v145
    %301 = vmatpush.msra.mxu0 %v141
    %302 = vmatpush.msra.mxu0 %v137
    %303 = vmatpush.msra.mxu0 %v133
    %304 = vmatpush.msra.mxu0 %v129
    %305 = vmatpush.msra.mxu0 %v125
    %306 = vmatpush.msra.mxu0 %v121
    %307 = vmatpush.msra.mxu0 %v117
    %308 = vmatpush.msra.mxu0 %v113
    %309 = vmatpush.msra.mxu0 %v109
    %310 = vmatmul.f32.gmra.mxu0 %v173
    %v311 = vpop.f32.mrf.mxu0
    %v312 = vadd.f32 0.0, %v311
    %313 = vdwg.mxu0
    %314 = vmatpush.msra.mxu0 %v170
    %315 = vmatpush.msra.mxu0 %v166
    %316 = vmatpush.msra.mxu0 %v162
    %317 = vmatpush.msra.mxu0 %v158
    %318 = vmatpush.msra.mxu0 %v154
    %319 = vmatpush.msra.mxu0 %v150
    %320 = vmatpush.msra.mxu0 %v146
    %321 = vmatpush.msra.mxu0 %v142
    %322 = vmatpush.msra.mxu0 %v138
    %323 = vmatpush.msra.mxu0 %v134
    %324 = vmatpush.msra.mxu0 %v130
    %325 = vmatpush.msra.mxu0 %v126
    %326 = vmatpush.msra.mxu0 %v122
    %327 = vmatpush.msra.mxu0 %v118
    %328 = vmatpush.msra.mxu0 %v114
    %329 = vmatpush.msra.mxu0 %v110
    %330 = vmatmul.f32.gmra.mxu0 %v173
    %v331 = vpop.f32.mrf.mxu0
    %v332 = vadd.f32 0.0, %v331
    %333 = vdwg.mxu0
    %334 = vmatpush.msra.mxu0 %v171
    %335 = vmatpush.msra.mxu0 %v167
    %336 = vmatpush.msra.mxu0 %v163
    %337 = vmatpush.msra.mxu0 %v159
    %338 = vmatpush.msra.mxu0 %v155
    %339 = vmatpush.msra.mxu0 %v151
    %340 = vmatpush.msra.mxu0 %v147
    %341 = vmatpush.msra.mxu0 %v143
    %342 = vmatpush.msra.mxu0 %v139
    %343 = vmatpush.msra.mxu0 %v135
    %344 = vmatpush.msra.mxu0 %v131
    %345 = vmatpush.msra.mxu0 %v127
    %346 = vmatpush.msra.mxu0 %v123
    %347 = vmatpush.msra.mxu0 %v119
    %348 = vmatpush.msra.mxu0 %v115
    %349 = vmatpush.msra.mxu0 %v111
    %350 = vmatmul.f32.gmra.mxu0 %v173
    %v351 = vpop.f32.mrf.mxu0
    %v352 = vadd.f32 0.0, %v351
    %353 = vdwg.mxu0
    %v354 = vadd.f32 %v270, %v292
    %v355 = vadd.f32 %v271, %v312
    %v356 = vadd.f32 %v272, %v332
    %v357 = vadd.f32 %v273, %v352
    %v358 = vmul.f32 %v354, 0.5
    %v359 = vtanh.pop %v358
    %v360 = vmul.f32 %v359, 0.5
    %v361 = vadd.f32 %v360, 0.5
    %v362 = vmul.f32 %v355, 0.5
    %v363 = vtanh.pop %v362
    %v364 = vmul.f32 %v363, 0.5
    %v365 = vadd.f32 %v364, 0.5
    %v366 = vtanh.pop %v356
    %v367 = vmul.f32 %v357, 0.5
    %v368 = vtanh.pop %v367
    %v369 = vmul.f32 %v368, 0.5
    %v370 = vadd.f32 %v369, 0.5
    %v371 = vmul.f32 %v365, %v174
    %v372 = vmul.f32 %v361, %v366
    %v373 = vadd.f32 %v371, %v372
    %v374 = vtanh.pop %v373
    %v375 = vmul.f32 %v370, %v374
    %v376 = vsub.f32 %v375, %v98
    %378 = vset.pattern.permute.xlu0 0
    %379 = vperm.xlu0 %378, %v176
    %v380 = vpop.permute.xlu0 %379
    %v382 = vmul.f32 %v380, %v376
    %v383 = vadd.f32 %v98, %v382
    %v384 = vsub.f32 %v373, %v99
    %v385 = vmul.f32 %v380, %v384
    %v386 = vadd.f32 %v99, %v385
    %387 = vst [vmem:[#allocation12] sm:$0xff] %v383
    %s388 = scalar_lea.vmem %s0, 8
    %v389 = vld [vmem:[%s388] sm:$0xff]
    %s390 = scalar_lea.vmem %s1, 8
    %v391 = vld [vmem:[%s390] sm:$0xff]
    %v393 = vsel %vm177, %v389, 0
    %395 = vmatpush.msra.mxu0 0.0
    %396 = vmatpush.msra.mxu0 0.0
    %397 = vmatpush.msra.mxu0 0.0
    %398 = vmatpush.msra.mxu0 0.0
    %399 = vmatpush.msra.mxu0 0.0
    %400 = vmatpush.msra.mxu0 0.0
    %401 = vmatpush.msra.mxu0 0.0
    %402 = vmatpush.msra.mxu0 0.0
    %403 = vmatpush.msra.mxu0 0.0
    %404 = vmatpush.msra.mxu0 0.0
    %405 = vmatpush.msra.mxu0 0.0
    %406 = vmatpush.msra.mxu0 0.0
    %407 = vmatpush.msra.mxu0 0.0
    %408 = vmatpush.msra.mxu0 0.0
    %409 = vmatpush.msra.mxu0 %v104
    %410 = vmatpush.msra.mxu0 %v100
    %411 = vmatmul.f32.gmra.mxu0 %v393
    %v412 = vpop.f32.mrf.mxu0
    %v413 = vadd.f32 0.0, %v412
    %414 = vdwg.mxu0
    %415 = vmatpush.msra.mxu0 0.0
    %416 = vmatpush.msra.mxu0 0.0
    %417 = vmatpush.msra.mxu0 0.0
    %418 = vmatpush.msra.mxu0 0.0
    %419 = vmatpush.msra.mxu0 0.0
    %420 = vmatpush.msra.mxu0 0.0
    %421 = vmatpush.msra.mxu0 0.0
    %422 = vmatpush.msra.mxu0 0.0
    %423 = vmatpush.msra.mxu0 0.0
    %424 = vmatpush.msra.mxu0 0.0
    %425 = vmatpush.msra.mxu0 0.0
    %426 = vmatpush.msra.mxu0 0.0
    %427 = vmatpush.msra.mxu0 0.0
    %428 = vmatpush.msra.mxu0 0.0
    %429 = vmatpush.msra.mxu0 %v105
    %430 = vmatpush.msra.mxu0 %v101
    %431 = vmatmul.f32.gmra.mxu0 %v393
    %v432 = vpop.f32.mrf.mxu0
    %v433 = vadd.f32 0.0, %v432
    %434 = vdwg.mxu0
    %435 = vmatpush.msra.mxu0 0.0
    %436 = vmatpush.msra.mxu0 0.0
    %437 = vmatpush.msra.mxu0 0.0
    %438 = vmatpush.msra.mxu0 0.0
    %439 = vmatpush.msra.mxu0 0.0
    %440 = vmatpush.msra.mxu0 0.0
    %441 = vmatpush.msra.mxu0 0.0
    %442 = vmatpush.msra.mxu0 0.0
    %443 = vmatpush.msra.mxu0 0.0
    %444 = vmatpush.msra.mxu0 0.0
    %445 = vmatpush.msra.mxu0 0.0
    %446 = vmatpush.msra.mxu0 0.0
    %447 = vmatpush.msra.mxu0 0.0
    %448 = vmatpush.msra.mxu0 0.0
    %449 = vmatpush.msra.mxu0 %v106
    %450 = vmatpush.msra.mxu0 %v102
    %451 = vmatmul.f32.gmra.mxu0 %v393
    %v452 = vpop.f32.mrf.mxu0
    %v453 = vadd.f32 0.0, %v452
    %454 = vdwg.mxu0
    %455 = vmatpush.msra.mxu0 0.0
    %456 = vmatpush.msra.mxu0 0.0
    %457 = vmatpush.msra.mxu0 0.0
    %458 = vmatpush.msra.mxu0 0.0
    %459 = vmatpush.msra.mxu0 0.0
    %460 = vmatpush.msra.mxu0 0.0
    %461 = vmatpush.msra.mxu0 0.0
    %462 = vmatpush.msra.mxu0 0.0
    %463 = vmatpush.msra.mxu0 0.0
    %464 = vmatpush.msra.mxu0 0.0
    %465 = vmatpush.msra.mxu0 0.0
    %466 = vmatpush.msra.mxu0 0.0
    %467 = vmatpush.msra.mxu0 0.0
    %468 = vmatpush.msra.mxu0 0.0
    %469 = vmatpush.msra.mxu0 %v107
    %470 = vmatpush.msra.mxu0 %v103
    %471 = vmatmul.f32.gmra.mxu0 %v393
    %v472 = vpop.f32.mrf.mxu0
    %v473 = vadd.f32 0.0, %v472
    %474 = vdwg.mxu0
    %v475 = vadd.f32 %v262, %v413
    %v476 = vadd.f32 %v263, %v433
    %v477 = vadd.f32 %v264, %v453
    %v478 = vadd.f32 %v265, %v473
    %479 = vmatpush.msra.mxu0 %v168
    %480 = vmatpush.msra.mxu0 %v164
    %481 = vmatpush.msra.mxu0 %v160
    %482 = vmatpush.msra.mxu0 %v156
    %483 = vmatpush.msra.mxu0 %v152
    %484 = vmatpush.msra.mxu0 %v148
    %485 = vmatpush.msra.mxu0 %v144
    %486 = vmatpush.msra.mxu0 %v140
    %487 = vmatpush.msra.mxu0 %v136
    %488 = vmatpush.msra.mxu0 %v132
    %489 = vmatpush.msra.mxu0 %v128
    %490 = vmatpush.msra.mxu0 %v124
    %491 = vmatpush.msra.mxu0 %v120
    %492 = vmatpush.msra.mxu0 %v116
    %493 = vmatpush.msra.mxu0 %v112
    %494 = vmatpush.msra.mxu0 %v108
    %495 = vmatmul.f32.gmra.mxu0 %v383
    %v496 = vpop.f32.mrf.mxu0
    %v497 = vadd.f32 0.0, %v496
    %498 = vdwg.mxu0
    %499 = vmatpush.msra.mxu0 %v169
    %500 = vmatpush.msra.mxu0 %v165
    %501 = vmatpush.msra.mxu0 %v161
    %502 = vmatpush.msra.mxu0 %v157
    %503 = vmatpush.msra.mxu0 %v153
    %504 = vmatpush.msra.mxu0 %v149
    %505 = vmatpush.msra.mxu0 %v145
    %506 = vmatpush.msra.mxu0 %v141
    %507 = vmatpush.msra.mxu0 %v137
    %508 = vmatpush.msra.mxu0 %v133
    %509 = vmatpush.msra.mxu0 %v129
    %510 = vmatpush.msra.mxu0 %v125
    %511 = vmatpush.msra.mxu0 %v121
    %512 = vmatpush.msra.mxu0 %v117
    %513 = vmatpush.msra.mxu0 %v113
    %514 = vmatpush.msra.mxu0 %v109
    %515 = vmatmul.f32.gmra.mxu0 %v383
    %v516 = vpop.f32.mrf.mxu0
    %v517 = vadd.f32 0.0, %v516
    %518 = vdwg.mxu0
    %519 = vmatpush.msra.mxu0 %v170
    %520 = vmatpush.msra.mxu0 %v166
    %521 = vmatpush.msra.mxu0 %v162
    %522 = vmatpush.msra.mxu0 %v158
    %523 = vmatpush.msra.mxu0 %v154
    %524 = vmatpush.msra.mxu0 %v150
    %525 = vmatpush.msra.mxu0 %v146
    %526 = vmatpush.msra.mxu0 %v142
    %527 = vmatpush.msra.mxu0 %v138
    %528 = vmatpush.msra.mxu0 %v134
    %529 = vmatpush.msra.mxu0 %v130
    %530 = vmatpush.msra.mxu0 %v126
    %531 = vmatpush.msra.mxu0 %v122
    %532 = vmatpush.msra.mxu0 %v118
    %533 = vmatpush.msra.mxu0 %v114
    %534 = vmatpush.msra.mxu0 %v110
    %535 = vmatmul.f32.gmra.mxu0 %v383
    %v536 = vpop.f32.mrf.mxu0
    %v537 = vadd.f32 0.0, %v536
    %538 = vdwg.mxu0
    %539 = vmatpush.msra.mxu0 %v171
    %540 = vmatpush.msra.mxu0 %v167
    %541 = vmatpush.msra.mxu0 %v163
    %542 = vmatpush.msra.mxu0 %v159
    %543 = vmatpush.msra.mxu0 %v155
    %544 = vmatpush.msra.mxu0 %v151
    %545 = vmatpush.msra.mxu0 %v147
    %546 = vmatpush.msra.mxu0 %v143
    %547 = vmatpush.msra.mxu0 %v139
    %548 = vmatpush.msra.mxu0 %v135
    %549 = vmatpush.msra.mxu0 %v131
    %550 = vmatpush.msra.mxu0 %v127
    %551 = vmatpush.msra.mxu0 %v123
    %552 = vmatpush.msra.mxu0 %v119
    %553 = vmatpush.msra.mxu0 %v115
    %554 = vmatpush.msra.mxu0 %v111
    %555 = vmatmul.f32.gmra.mxu0 %v383
    %v556 = vpop.f32.mrf.mxu0
    %v557 = vadd.f32 0.0, %v556
    %558 = vdwg.mxu0
    %v559 = vadd.f32 %v475, %v497
    %v560 = vadd.f32 %v476, %v517
    %v561 = vadd.f32 %v477, %v537
    %v562 = vadd.f32 %v478, %v557
    %v563 = vmul.f32 %v559, 0.5
    %v564 = vtanh.pop %v563
    %v565 = vmul.f32 %v564, 0.5
    %v566 = vadd.f32 %v565, 0.5
    %v567 = vmul.f32 %v560, 0.5
    %v568 = vtanh.pop %v567
    %v569 = vmul.f32 %v568, 0.5
    %v570 = vadd.f32 %v569, 0.5
    %v571 = vtanh.pop %v561
    %v572 = vmul.f32 %v562, 0.5
    %v573 = vtanh.pop %v572
    %v574 = vmul.f32 %v573, 0.5
    %v575 = vadd.f32 %v574, 0.5
    %v576 = vmul.f32 %v570, %v386
    %v577 = vmul.f32 %v566, %v571
    %v578 = vadd.f32 %v576, %v577
    %v579 = vtanh.pop %v578
    %v580 = vmul.f32 %v575, %v579
    %v581 = vsub.f32 %v580, %v98
    %583 = vset.pattern.permute.xlu0 0
    %584 = vperm.xlu0 %583, %v391
    %v585 = vpop.permute.xlu0 %584
    %v587 = vmul.f32 %v585, %v581
    %v588 = vadd.f32 %v98, %v587
    %v589 = vsub.f32 %v578, %v99
    %v590 = vmul.f32 %v585, %v589
    %v591 = vadd.f32 %v99, %v590
    %s592 = scalar_lea.vmem [#allocation12], 8
    %593 = vst [vmem:[%s592] sm:$0xff] %v588
    %s594 = scalar_lea.vmem %s0, 16
    %v595 = vld [vmem:[%s594] sm:$0xff]
    %s596 = scalar_lea.vmem %s1, 16
    %v597 = vld [vmem:[%s596] sm:$0xff]
    %v599 = vsel %vm177, %v595, 0
    %601 = vmatpush.msra.mxu0 0.0
    %602 = vmatpush.msra.mxu0 0.0
    %603 = vmatpush.msra.mxu0 0.0
    %604 = vmatpush.msra.mxu0 0.0
    %605 = vmatpush.msra.mxu0 0.0
    %606 = vmatpush.msra.mxu0 0.0
    %607 = vmatpush.msra.mxu0 0.0
    %608 = vmatpush.msra.mxu0 0.0
    %609 = vmatpush.msra.mxu0 0.0
    %610 = vmatpush.msra.mxu0 0.0
    %611 = vmatpush.msra.mxu0 0.0
    %612 = vmatpush.msra.mxu0 0.0
    %613 = vmatpush.msra.mxu0 0.0
    %614 = vmatpush.msra.mxu0 0.0
    %615 = vmatpush.msra.mxu0 %v104
    %616 = vmatpush.msra.mxu0 %v100
    %617 = vmatmul.f32.gmra.mxu0 %v599
    %v618 = vpop.f32.mrf.mxu0
    %v619 = vadd.f32 0.0, %v618
    %620 = vdwg.mxu0
    %621 = vmatpush.msra.mxu0 0.0
    %622 = vmatpush.msra.mxu0 0.0
    %623 = vmatpush.msra.mxu0 0.0
    %624 = vmatpush.msra.mxu0 0.0
    %625 = vmatpush.msra.mxu0 0.0
    %626 = vmatpush.msra.mxu0 0.0
    %627 = vmatpush.msra.mxu0 0.0
    %628 = vmatpush.msra.mxu0 0.0
    %629 = vmatpush.msra.mxu0 0.0
    %630 = vmatpush.msra.mxu0 0.0
    %631 = vmatpush.msra.mxu0 0.0
    %632 = vmatpush.msra.mxu0 0.0
    %633 = vmatpush.msra.mxu0 0.0
    %634 = vmatpush.msra.mxu0 0.0
    %635 = vmatpush.msra.mxu0 %v105
    %636 = vmatpush.msra.mxu0 %v101
    %637 = vmatmul.f32.gmra.mxu0 %v599
    %v638 = vpop.f32.mrf.mxu0
    %v639 = vadd.f32 0.0, %v638
    %640 = vdwg.mxu0
    %641 = vmatpush.msra.mxu0 0.0
    %642 = vmatpush.msra.mxu0 0.0
    %643 = vmatpush.msra.mxu0 0.0
    %644 = vmatpush.msra.mxu0 0.0
    %645 = vmatpush.msra.mxu0 0.0
    %646 = vmatpush.msra.mxu0 0.0
    %647 = vmatpush.msra.mxu0 0.0
    %648 = vmatpush.msra.mxu0 0.0
    %649 = vmatpush.msra.mxu0 0.0
    %650 = vmatpush.msra.mxu0 0.0
    %651 = vmatpush.msra.mxu0 0.0
    %652 = vmatpush.msra.mxu0 0.0
    %653 = vmatpush.msra.mxu0 0.0
    %654 = vmatpush.msra.mxu0 0.0
    %655 = vmatpush.msra.mxu0 %v106
    %656 = vmatpush.msra.mxu0 %v102
    %657 = vmatmul.f32.gmra.mxu0 %v599
    %v658 = vpop.f32.mrf.mxu0
    %v659 = vadd.f32 0.0, %v658
    %660 = vdwg.mxu0
    %661 = vmatpush.msra.mxu0 0.0
    %662 = vmatpush.msra.mxu0 0.0
    %663 = vmatpush.msra.mxu0 0.0
    %664 = vmatpush.msra.mxu0 0.0
    %665 = vmatpush.msra.mxu0 0.0
    %666 = vmatpush.msra.mxu0 0.0
    %667 = vmatpush.msra.mxu0 0.0
    %668 = vmatpush.msra.mxu0 0.0
    %669 = vmatpush.msra.mxu0 0.0
    %670 = vmatpush.msra.mxu0 0.0
    %671 = vmatpush.msra.mxu0 0.0
    %672 = vmatpush.msra.mxu0 0.0
    %673 = vmatpush.msra.mxu0 0.0
    %674 = vmatpush.msra.mxu0 0.0
    %675 = vmatpush.msra.mxu0 %v107
    %676 = vmatpush.msra.mxu0 %v103
    %677 = vmatmul.f32.gmra.mxu0 %v599
    %v678 = vpop.f32.mrf.mxu0
    %v679 = vadd.f32 0.0, %v678
    %680 = vdwg.mxu0
    %v681 = vadd.f32 %v262, %v619
    %v682 = vadd.f32 %v263, %v639
    %v683 = vadd.f32 %v264, %v659
    %v684 = vadd.f32 %v265, %v679
    %685 = vmatpush.msra.mxu0 %v168
    %686 = vmatpush.msra.mxu0 %v164
    %687 = vmatpush.msra.mxu0 %v160
    %688 = vmatpush.msra.mxu0 %v156
    %689 = vmatpush.msra.mxu0 %v152
    %690 = vmatpush.msra.mxu0 %v148
    %691 = vmatpush.msra.mxu0 %v144
    %692 = vmatpush.msra.mxu0 %v140
    %693 = vmatpush.msra.mxu0 %v136
    %694 = vmatpush.msra.mxu0 %v132
    %695 = vmatpush.msra.mxu0 %v128
    %696 = vmatpush.msra.mxu0 %v124
    %697 = vmatpush.msra.mxu0 %v120
    %698 = vmatpush.msra.mxu0 %v116
    %699 = vmatpush.msra.mxu0 %v112
    %700 = vmatpush.msra.mxu0 %v108
    %701 = vmatmul.f32.gmra.mxu0 %v588
    %v702 = vpop.f32.mrf.mxu0
    %v703 = vadd.f32 0.0, %v702
    %704 = vdwg.mxu0
    %705 = vmatpush.msra.mxu0 %v169
    %706 = vmatpush.msra.mxu0 %v165
    %707 = vmatpush.msra.mxu0 %v161
    %708 = vmatpush.msra.mxu0 %v157
    %709 = vmatpush.msra.mxu0 %v153
    %710 = vmatpush.msra.mxu0 %v149
    %711 = vmatpush.msra.mxu0 %v145
    %712 = vmatpush.msra.mxu0 %v141
    %713 = vmatpush.msra.mxu0 %v137
    %714 = vmatpush.msra.mxu0 %v133
    %715 = vmatpush.msra.mxu0 %v129
    %716 = vmatpush.msra.mxu0 %v125
    %717 = vmatpush.msra.mxu0 %v121
    %718 = vmatpush.msra.mxu0 %v117
    %719 = vmatpush.msra.mxu0 %v113
    %720 = vmatpush.msra.mxu0 %v109
    %721 = vmatmul.f32.gmra.mxu0 %v588
    %v722 = vpop.f32.mrf.mxu0
    %v723 = vadd.f32 0.0, %v722
    %724 = vdwg.mxu0
    %725 = vmatpush.msra.mxu0 %v170
    %726 = vmatpush.msra.mxu0 %v166
    %727 = vmatpush.msra.mxu0 %v162
    %728 = vmatpush.msra.mxu0 %v158
    %729 = vmatpush.msra.mxu0 %v154
    %730 = vmatpush.msra.mxu0 %v150
    %731 = vmatpush.msra.mxu0 %v146
    %732 = vmatpush.msra.mxu0 %v142
    %733 = vmatpush.msra.mxu0 %v138
    %734 = vmatpush.msra.mxu0 %v134
    %735 = vmatpush.msra.mxu0 %v130
    %736 = vmatpush.msra.mxu0 %v126
    %737 = vmatpush.msra.mxu0 %v122
    %738 = vmatpush.msra.mxu0 %v118
    %739 = vmatpush.msra.mxu0 %v114
    %740 = vmatpush.msra.mxu0 %v110
    %741 = vmatmul.f32.gmra.mxu0 %v588
    %v742 = vpop.f32.mrf.mxu0
    %v743 = vadd.f32 0.0, %v742
    %744 = vdwg.mxu0
    %745 = vmatpush.msra.mxu0 %v171
    %746 = vmatpush.msra.mxu0 %v167
    %747 = vmatpush.msra.mxu0 %v163
    %748 = vmatpush.msra.mxu0 %v159
    %749 = vmatpush.msra.mxu0 %v155
    %750 = vmatpush.msra.mxu0 %v151
    %751 = vmatpush.msra.mxu0 %v147
    %752 = vmatpush.msra.mxu0 %v143
    %753 = vmatpush.msra.mxu0 %v139
    %754 = vmatpush.msra.mxu0 %v135
    %755 = vmatpush.msra.mxu0 %v131
    %756 = vmatpush.msra.mxu0 %v127
    %757 = vmatpush.msra.mxu0 %v123
    %758 = vmatpush.msra.mxu0 %v119
    %759 = vmatpush.msra.mxu0 %v115
    %760 = vmatpush.msra.mxu0 %v111
    %761 = vmatmul.f32.gmra.mxu0 %v588
    %v762 = vpop.f32.mrf.mxu0
    %v763 = vadd.f32 0.0, %v762
    %764 = vdwg.mxu0
    %v765 = vadd.f32 %v681, %v703
    %v766 = vadd.f32 %v682, %v723
    %v767 = vadd.f32 %v683, %v743
    %v768 = vadd.f32 %v684, %v763
    %v769 = vmul.f32 %v765, 0.5
    %v770 = vtanh.pop %v769
    %v771 = vmul.f32 %v770, 0.5
    %v772 = vadd.f32 %v771, 0.5
    %v773 = vmul.f32 %v766, 0.5
    %v774 = vtanh.pop %v773
    %v775 = vmul.f32 %v774, 0.5
    %v776 = vadd.f32 %v775, 0.5
    %v777 = vtanh.pop %v767
    %v778 = vmul.f32 %v768, 0.5
    %v779 = vtanh.pop %v778
    %v780 = vmul.f32 %v779, 0.5
    %v781 = vadd.f32 %v780, 0.5
    %v782 = vmul.f32 %v776, %v591
    %v783 = vmul.f32 %v772, %v777
    %v784 = vadd.f32 %v782, %v783
    %v785 = vtanh.pop %v784
    %v786 = vmul.f32 %v781, %v785
    %v787 = vsub.f32 %v786, %v98
    %789 = vset.pattern.permute.xlu0 0
    %790 = vperm.xlu0 %789, %v597
    %v791 = vpop.permute.xlu0 %790
    %v793 = vmul.f32 %v791, %v787
    %v794 = vadd.f32 %v98, %v793
    %v795 = vsub.f32 %v784, %v99
    %v796 = vmul.f32 %v791, %v795
    %v797 = vadd.f32 %v99, %v796
    %s798 = scalar_lea.vmem [#allocation12], 16
    %799 = vst [vmem:[%s798] sm:$0xff] %v794
    %s800 = scalar_lea.vmem %s0, 24
    %v801 = vld [vmem:[%s800] sm:$0xff]
    %s802 = scalar_lea.vmem %s1, 24
    %v803 = vld [vmem:[%s802] sm:$0xff]
    %v805 = vsel %vm177, %v801, 0
    %807 = vmatpush.msra.mxu0 0.0
    %808 = vmatpush.msra.mxu0 0.0
    %809 = vmatpush.msra.mxu0 0.0
    %810 = vmatpush.msra.mxu0 0.0
    %811 = vmatpush.msra.mxu0 0.0
    %812 = vmatpush.msra.mxu0 0.0
    %813 = vmatpush.msra.mxu0 0.0
    %814 = vmatpush.msra.mxu0 0.0
    %815 = vmatpush.msra.mxu0 0.0
    %816 = vmatpush.msra.mxu0 0.0
    %817 = vmatpush.msra.mxu0 0.0
    %818 = vmatpush.msra.mxu0 0.0
    %819 = vmatpush.msra.mxu0 0.0
    %820 = vmatpush.msra.mxu0 0.0
    %821 = vmatpush.msra.mxu0 %v104
    %822 = vmatpush.msra.mxu0 %v100
    %823 = vmatmul.f32.gmra.mxu0 %v805
    %v824 = vpop.f32.mrf.mxu0
    %v825 = vadd.f32 0.0, %v824
    %826 = vdwg.mxu0
    %827 = vmatpush.msra.mxu0 0.0
    %828 = vmatpush.msra.mxu0 0.0
    %829 = vmatpush.msra.mxu0 0.0
    %830 = vmatpush.msra.mxu0 0.0
    %831 = vmatpush.msra.mxu0 0.0
    %832 = vmatpush.msra.mxu0 0.0
    %833 = vmatpush.msra.mxu0 0.0
    %834 = vmatpush.msra.mxu0 0.0
    %835 = vmatpush.msra.mxu0 0.0
    %836 = vmatpush.msra.mxu0 0.0
    %837 = vmatpush.msra.mxu0 0.0
    %838 = vmatpush.msra.mxu0 0.0
    %839 = vmatpush.msra.mxu0 0.0
    %840 = vmatpush.msra.mxu0 0.0
    %841 = vmatpush.msra.mxu0 %v105
    %842 = vmatpush.msra.mxu0 %v101
    %843 = vmatmul.f32.gmra.mxu0 %v805
    %v844 = vpop.f32.mrf.mxu0
    %v845 = vadd.f32 0.0, %v844
    %846 = vdwg.mxu0
    %847 = vmatpush.msra.mxu0 0.0
    %848 = vmatpush.msra.mxu0 0.0
    %849 = vmatpush.msra.mxu0 0.0
    %850 = vmatpush.msra.mxu0 0.0
    %851 = vmatpush.msra.mxu0 0.0
    %852 = vmatpush.msra.mxu0 0.0
    %853 = vmatpush.msra.mxu0 0.0
    %854 = vmatpush.msra.mxu0 0.0
    %855 = vmatpush.msra.mxu0 0.0
    %856 = vmatpush.msra.mxu0 0.0
    %857 = vmatpush.msra.mxu0 0.0
    %858 = vmatpush.msra.mxu0 0.0
    %859 = vmatpush.msra.mxu0 0.0
    %860 = vmatpush.msra.mxu0 0.0
    %861 = vmatpush.msra.mxu0 %v106
    %862 = vmatpush.msra.mxu0 %v102
    %863 = vmatmul.f32.gmra.mxu0 %v805
    %v864 = vpop.f32.mrf.mxu0
    %v865 = vadd.f32 0.0, %v864
    %866 = vdwg.mxu0
    %867 = vmatpush.msra.mxu0 0.0
    %868 = vmatpush.msra.mxu0 0.0
    %869 = vmatpush.msra.mxu0 0.0
    %870 = vmatpush.msra.mxu0 0.0
    %871 = vmatpush.msra.mxu0 0.0
    %872 = vmatpush.msra.mxu0 0.0
    %873 = vmatpush.msra.mxu0 0.0
    %874 = vmatpush.msra.mxu0 0.0
    %875 = vmatpush.msra.mxu0 0.0
    %876 = vmatpush.msra.mxu0 0.0
    %877 = vmatpush.msra.mxu0 0.0
    %878 = vmatpush.msra.mxu0 0.0
    %879 = vmatpush.msra.mxu0 0.0
    %880 = vmatpush.msra.mxu0 0.0
    %881 = vmatpush.msra.mxu0 %v107
    %882 = vmatpush.msra.mxu0 %v103
    %883 = vmatmul.f32.gmra.mxu0 %v805
    %v884 = vpop.f32.mrf.mxu0
    %v885 = vadd.f32 0.0, %v884
    %886 = vdwg.mxu0
    %v887 = vadd.f32 %v262, %v825
    %v888 = vadd.f32 %v263, %v845
    %v889 = vadd.f32 %v264, %v865
    %v890 = vadd.f32 %v265, %v885
    %891 = vmatpush.msra.mxu0 %v168
    %892 = vmatpush.msra.mxu0 %v164
    %893 = vmatpush.msra.mxu0 %v160
    %894 = vmatpush.msra.mxu0 %v156
    %895 = vmatpush.msra.mxu0 %v152
    %896 = vmatpush.msra.mxu0 %v148
    %897 = vmatpush.msra.mxu0 %v144
    %898 = vmatpush.msra.mxu0 %v140
    %899 = vmatpush.msra.mxu0 %v136
    %900 = vmatpush.msra.mxu0 %v132
    %901 = vmatpush.msra.mxu0 %v128
    %902 = vmatpush.msra.mxu0 %v124
    %903 = vmatpush.msra.mxu0 %v120
    %904 = vmatpush.msra.mxu0 %v116
    %905 = vmatpush.msra.mxu0 %v112
    %906 = vmatpush.msra.mxu0 %v108
    %907 = vmatmul.f32.gmra.mxu0 %v794
    %v908 = vpop.f32.mrf.mxu0
    %v909 = vadd.f32 0.0, %v908
    %910 = vdwg.mxu0
    %911 = vmatpush.msra.mxu0 %v169
    %912 = vmatpush.msra.mxu0 %v165
    %913 = vmatpush.msra.mxu0 %v161
    %914 = vmatpush.msra.mxu0 %v157
    %915 = vmatpush.msra.mxu0 %v153
    %916 = vmatpush.msra.mxu0 %v149
    %917 = vmatpush.msra.mxu0 %v145
    %918 = vmatpush.msra.mxu0 %v141
    %919 = vmatpush.msra.mxu0 %v137
    %920 = vmatpush.msra.mxu0 %v133
    %921 = vmatpush.msra.mxu0 %v129
    %922 = vmatpush.msra.mxu0 %v125
    %923 = vmatpush.msra.mxu0 %v121
    %924 = vmatpush.msra.mxu0 %v117
    %925 = vmatpush.msra.mxu0 %v113
    %926 = vmatpush.msra.mxu0 %v109
    %927 = vmatmul.f32.gmra.mxu0 %v794
    %v928 = vpop.f32.mrf.mxu0
    %v929 = vadd.f32 0.0, %v928
    %930 = vdwg.mxu0
    %931 = vmatpush.msra.mxu0 %v170
    %932 = vmatpush.msra.mxu0 %v166
    %933 = vmatpush.msra.mxu0 %v162
    %934 = vmatpush.msra.mxu0 %v158
    %935 = vmatpush.msra.mxu0 %v154
    %936 = vmatpush.msra.mxu0 %v150
    %937 = vmatpush.msra.mxu0 %v146
    %938 = vmatpush.msra.mxu0 %v142
    %939 = vmatpush.msra.mxu0 %v138
    %940 = vmatpush.msra.mxu0 %v134
    %941 = vmatpush.msra.mxu0 %v130
    %942 = vmatpush.msra.mxu0 %v126
    %943 = vmatpush.msra.mxu0 %v122
    %944 = vmatpush.msra.mxu0 %v118
    %945 = vmatpush.msra.mxu0 %v114
    %946 = vmatpush.msra.mxu0 %v110
    %947 = vmatmul.f32.gmra.mxu0 %v794
    %v948 = vpop.f32.mrf.mxu0
    %v949 = vadd.f32 0.0, %v948
    %950 = vdwg.mxu0
    %951 = vmatpush.msra.mxu0 %v171
    %952 = vmatpush.msra.mxu0 %v167
    %953 = vmatpush.msra.mxu0 %v163
    %954 = vmatpush.msra.mxu0 %v159
    %955 = vmatpush.msra.mxu0 %v155
    %956 = vmatpush.msra.mxu0 %v151
    %957 = vmatpush.msra.mxu0 %v147
    %958 = vmatpush.msra.mxu0 %v143
    %959 = vmatpush.msra.mxu0 %v139
    %960 = vmatpush.msra.mxu0 %v135
    %961 = vmatpush.msra.mxu0 %v131
    %962 = vmatpush.msra.mxu0 %v127
    %963 = vmatpush.msra.mxu0 %v123
    %964 = vmatpush.msra.mxu0 %v119
    %965 = vmatpush.msra.mxu0 %v115
    %966 = vmatpush.msra.mxu0 %v111
    %967 = vmatmul.f32.gmra.mxu0 %v794
    %v968 = vpop.f32.mrf.mxu0
    %v969 = vadd.f32 0.0, %v968
    %970 = vdwg.mxu0
    %v971 = vadd.f32 %v887, %v909
    %v972 = vadd.f32 %v888, %v929
    %v973 = vadd.f32 %v889, %v949
    %v974 = vadd.f32 %v890, %v969
    %v975 = vmul.f32 %v971, 0.5
    %v976 = vtanh.pop %v975
    %v977 = vmul.f32 %v976, 0.5
    %v978 = vadd.f32 %v977, 0.5
    %v979 = vmul.f32 %v972, 0.5
    %v980 = vtanh.pop %v979
    %v981 = vmul.f32 %v980, 0.5
    %v982 = vadd.f32 %v981, 0.5
    %v983 = vtanh.pop %v973
    %v984 = vmul.f32 %v974, 0.5
    %v985 = vtanh.pop %v984
    %v986 = vmul.f32 %v985, 0.5
    %v987 = vadd.f32 %v986, 0.5
    %v988 = vmul.f32 %v982, %v797
    %v989 = vmul.f32 %v978, %v983
    %v990 = vadd.f32 %v988, %v989
    %v991 = vtanh.pop %v990
    %v992 = vmul.f32 %v987, %v991
    %v993 = vsub.f32 %v992, %v98
    %995 = vset.pattern.permute.xlu0 0
    %996 = vperm.xlu0 %995, %v803
    %v997 = vpop.permute.xlu0 %996
    %v999 = vmul.f32 %v997, %v993
    %v1000 = vadd.f32 %v98, %v999
    %v1001 = vsub.f32 %v990, %v99
    %v1002 = vmul.f32 %v997, %v1001
    %v1003 = vadd.f32 %v99, %v1002
    %s1004 = scalar_lea.vmem [#allocation12], 24
    %1005 = vst [vmem:[%s1004] sm:$0xff] %v1000
    %s1006 = scalar_lea.vmem %s0, 32
    %v1007 = vld [vmem:[%s1006] sm:$0xff]
    %s1008 = scalar_lea.vmem %s1, 32
    %v1009 = vld [vmem:[%s1008] sm:$0xff]
    %v1011 = vsel %vm177, %v1007, 0
    %1013 = vmatpush.msra.mxu0 0.0
    %1014 = vmatpush.msra.mxu0 0.0
    %1015 = vmatpush.msra.mxu0 0.0
    %1016 = vmatpush.msra.mxu0 0.0
    %1017 = vmatpush.msra.mxu0 0.0
    %1018 = vmatpush.msra.mxu0 0.0
    %1019 = vmatpush.msra.mxu0 0.0
    %1020 = vmatpush.msra.mxu0 0.0
    %1021 = vmatpush.msra.mxu0 0.0
    %1022 = vmatpush.msra.mxu0 0.0
    %1023 = vmatpush.msra.mxu0 0.0
    %1024 = vmatpush.msra.mxu0 0.0
    %1025 = vmatpush.msra.mxu0 0.0
    %1026 = vmatpush.msra.mxu0 0.0
    %1027 = vmatpush.msra.mxu0 %v104
    %1028 = vmatpush.msra.mxu0 %v100
    %1029 = vmatmul.f32.gmra.mxu0 %v1011
    %v1030 = vpop.f32.mrf.mxu0
    %v1031 = vadd.f32 0.0, %v1030
    %1032 = vdwg.mxu0
    %1033 = vmatpush.msra.mxu0 0.0
    %1034 = vmatpush.msra.mxu0 0.0
    %1035 = vmatpush.msra.mxu0 0.0
    %1036 = vmatpush.msra.mxu0 0.0
    %1037 = vmatpush.msra.mxu0 0.0
    %1038 = vmatpush.msra.mxu0 0.0
    %1039 = vmatpush.msra.mxu0 0.0
    %1040 = vmatpush.msra.mxu0 0.0
    %1041 = vmatpush.msra.mxu0 0.0
    %1042 = vmatpush.msra.mxu0 0.0
    %1043 = vmatpush.msra.mxu0 0.0
    %1044 = vmatpush.msra.mxu0 0.0
    %1045 = vmatpush.msra.mxu0 0.0
    %1046 = vmatpush.msra.mxu0 0.0
    %1047 = vmatpush.msra.mxu0 %v105
    %1048 = vmatpush.msra.mxu0 %v101
    %1049 = vmatmul.f32.gmra.mxu0 %v1011
    %v1050 = vpop.f32.mrf.mxu0
    %v1051 = vadd.f32 0.0, %v1050
    %1052 = vdwg.mxu0
    %1053 = vmatpush.msra.mxu0 0.0
    %1054 = vmatpush.msra.mxu0 0.0
    %1055 = vmatpush.msra.mxu0 0.0
    %1056 = vmatpush.msra.mxu0 0.0
    %1057 = vmatpush.msra.mxu0 0.0
    %1058 = vmatpush.msra.mxu0 0.0
    %1059 = vmatpush.msra.mxu0 0.0
    %1060 = vmatpush.msra.mxu0 0.0
    %1061 = vmatpush.msra.mxu0 0.0
    %1062 = vmatpush.msra.mxu0 0.0
    %1063 = vmatpush.msra.mxu0 0.0
    %1064 = vmatpush.msra.mxu0 0.0
    %1065 = vmatpush.msra.mxu0 0.0
    %1066 = vmatpush.msra.mxu0 0.0
    %1067 = vmatpush.msra.mxu0 %v106
    %1068 = vmatpush.msra.mxu0 %v102
    %1069 = vmatmul.f32.gmra.mxu0 %v1011
    %v1070 = vpop.f32.mrf.mxu0
    %v1071 = vadd.f32 0.0, %v1070
    %1072 = vdwg.mxu0
    %1073 = vmatpush.msra.mxu0 0.0
    %1074 = vmatpush.msra.mxu0 0.0
    %1075 = vmatpush.msra.mxu0 0.0
    %1076 = vmatpush.msra.mxu0 0.0
    %1077 = vmatpush.msra.mxu0 0.0
    %1078 = vmatpush.msra.mxu0 0.0
    %1079 = vmatpush.msra.mxu0 0.0
    %1080 = vmatpush.msra.mxu0 0.0
    %1081 = vmatpush.msra.mxu0 0.0
    %1082 = vmatpush.msra.mxu0 0.0
    %1083 = vmatpush.msra.mxu0 0.0
    %1084 = vmatpush.msra.mxu0 0.0
    %1085 = vmatpush.msra.mxu0 0.0
    %1086 = vmatpush.msra.mxu0 0.0
    %1087 = vmatpush.msra.mxu0 %v107
    %1088 = vmatpush.msra.mxu0 %v103
    %1089 = vmatmul.f32.gmra.mxu0 %v1011
    %v1090 = vpop.f32.mrf.mxu0
    %v1091 = vadd.f32 0.0, %v1090
    %1092 = vdwg.mxu0
    %v1093 = vadd.f32 %v262, %v1031
    %v1094 = vadd.f32 %v263, %v1051
    %v1095 = vadd.f32 %v264, %v1071
    %v1096 = vadd.f32 %v265, %v1091
    %1097 = vmatpush.msra.mxu0 %v168
    %1098 = vmatpush.msra.mxu0 %v164
    %1099 = vmatpush.msra.mxu0 %v160
    %1100 = vmatpush.msra.mxu0 %v156
    %1101 = vmatpush.msra.mxu0 %v152
    %1102 = vmatpush.msra.mxu0 %v148
    %1103 = vmatpush.msra.mxu0 %v144
    %1104 = vmatpush.msra.mxu0 %v140
    %1105 = vmatpush.msra.mxu0 %v136
    %1106 = vmatpush.msra.mxu0 %v132
    %1107 = vmatpush.msra.mxu0 %v128
    %1108 = vmatpush.msra.mxu0 %v124
    %1109 = vmatpush.msra.mxu0 %v120
    %1110 = vmatpush.msra.mxu0 %v116
    %1111 = vmatpush.msra.mxu0 %v112
    %1112 = vmatpush.msra.mxu0 %v108
    %1113 = vmatmul.f32.gmra.mxu0 %v1000
    %v1114 = vpop.f32.mrf.mxu0
    %v1115 = vadd.f32 0.0, %v1114
    %1116 = vdwg.mxu0
    %1117 = vmatpush.msra.mxu0 %v169
    %1118 = vmatpush.msra.mxu0 %v165
    %1119 = vmatpush.msra.mxu0 %v161
    %1120 = vmatpush.msra.mxu0 %v157
    %1121 = vmatpush.msra.mxu0 %v153
    %1122 = vmatpush.msra.mxu0 %v149
    %1123 = vmatpush.msra.mxu0 %v145
    %1124 = vmatpush.msra.mxu0 %v141
    %1125 = vmatpush.msra.mxu0 %v137
    %1126 = vmatpush.msra.mxu0 %v133
    %1127 = vmatpush.msra.mxu0 %v129
    %1128 = vmatpush.msra.mxu0 %v125
    %1129 = vmatpush.msra.mxu0 %v121
    %1130 = vmatpush.msra.mxu0 %v117
    %1131 = vmatpush.msra.mxu0 %v113
    %1132 = vmatpush.msra.mxu0 %v109
    %1133 = vmatmul.f32.gmra.mxu0 %v1000
    %v1134 = vpop.f32.mrf.mxu0
    %v1135 = vadd.f32 0.0, %v1134
    %1136 = vdwg.mxu0
    %1137 = vmatpush.msra.mxu0 %v170
    %1138 = vmatpush.msra.mxu0 %v166
    %1139 = vmatpush.msra.mxu0 %v162
    %1140 = vmatpush.msra.mxu0 %v158
    %1141 = vmatpush.msra.mxu0 %v154
    %1142 = vmatpush.msra.mxu0 %v150
    %1143 = vmatpush.msra.mxu0 %v146
    %1144 = vmatpush.msra.mxu0 %v142
    %1145 = vmatpush.msra.mxu0 %v138
    %1146 = vmatpush.msra.mxu0 %v134
    %1147 = vmatpush.msra.mxu0 %v130
    %1148 = vmatpush.msra.mxu0 %v126
    %1149 = vmatpush.msra.mxu0 %v122
    %1150 = vmatpush.msra.mxu0 %v118
    %1151 = vmatpush.msra.mxu0 %v114
    %1152 = vmatpush.msra.mxu0 %v110
    %1153 = vmatmul.f32.gmra.mxu0 %v1000
    %v1154 = vpop.f32.mrf.mxu0
    %v1155 = vadd.f32 0.0, %v1154
    %1156 = vdwg.mxu0
    %1157 = vmatpush.msra.mxu0 %v171
    %1158 = vmatpush.msra.mxu0 %v167
    %1159 = vmatpush.msra.mxu0 %v163
    %1160 = vmatpush.msra.mxu0 %v159
    %1161 = vmatpush.msra.mxu0 %v155
    %1162 = vmatpush.msra.mxu0 %v151
    %1163 = vmatpush.msra.mxu0 %v147
    %1164 = vmatpush.msra.mxu0 %v143
    %1165 = vmatpush.msra.mxu0 %v139
    %1166 = vmatpush.msra.mxu0 %v135
    %1167 = vmatpush.msra.mxu0 %v131
    %1168 = vmatpush.msra.mxu0 %v127
    %1169 = vmatpush.msra.mxu0 %v123
    %1170 = vmatpush.msra.mxu0 %v119
    %1171 = vmatpush.msra.mxu0 %v115
    %1172 = vmatpush.msra.mxu0 %v111
    %1173 = vmatmul.f32.gmra.mxu0 %v1000
    %v1174 = vpop.f32.mrf.mxu0
    %v1175 = vadd.f32 0.0, %v1174
    %1176 = vdwg.mxu0
    %v1177 = vadd.f32 %v1093, %v1115
    %v1178 = vadd.f32 %v1094, %v1135
    %v1179 = vadd.f32 %v1095, %v1155
    %v1180 = vadd.f32 %v1096, %v1175
    %v1181 = vmul.f32 %v1177, 0.5
    %v1182 = vtanh.pop %v1181
    %v1183 = vmul.f32 %v1182, 0.5
    %v1184 = vadd.f32 %v1183, 0.5
    %v1185 = vmul.f32 %v1178, 0.5
    %v1186 = vtanh.pop %v1185
    %v1187 = vmul.f32 %v1186, 0.5
    %v1188 = vadd.f32 %v1187, 0.5
    %v1189 = vtanh.pop %v1179
    %v1190 = vmul.f32 %v1180, 0.5
    %v1191 = vtanh.pop %v1190
    %v1192 = vmul.f32 %v1191, 0.5
    %v1193 = vadd.f32 %v1192, 0.5
    %v1194 = vmul.f32 %v1188, %v1003
    %v1195 = vmul.f32 %v1184, %v1189
    %v1196 = vadd.f32 %v1194, %v1195
    %v1197 = vtanh.pop %v1196
    %v1198 = vmul.f32 %v1193, %v1197
    %v1199 = vsub.f32 %v1198, %v98
    %1201 = vset.pattern.permute.xlu0 0
    %1202 = vperm.xlu0 %1201, %v1009
    %v1203 = vpop.permute.xlu0 %1202
    %v1205 = vmul.f32 %v1203, %v1199
    %v1206 = vadd.f32 %v98, %v1205
    %v1207 = vsub.f32 %v1196, %v99
    %v1208 = vmul.f32 %v1203, %v1207
    %v1209 = vadd.f32 %v99, %v1208
    %s1210 = scalar_lea.vmem [#allocation12], 32
    %1211 = vst [vmem:[%s1210] sm:$0xff] %v1206
    %s1212 = scalar_lea.vmem %s0, 40
    %v1213 = vld [vmem:[%s1212] sm:$0xff]
    %s1214 = scalar_lea.vmem %s1, 40
    %v1215 = vld [vmem:[%s1214] sm:$0xff]
    %v1217 = vsel %vm177, %v1213, 0
    %1219 = vmatpush.msra.mxu0 0.0
    %1220 = vmatpush.msra.mxu0 0.0
    %1221 = vmatpush.msra.mxu0 0.0
    %1222 = vmatpush.msra.mxu0 0.0
    %1223 = vmatpush.msra.mxu0 0.0
    %1224 = vmatpush.msra.mxu0 0.0
    %1225 = vmatpush.msra.mxu0 0.0
    %1226 = vmatpush.msra.mxu0 0.0
    %1227 = vmatpush.msra.mxu0 0.0
    %1228 = vmatpush.msra.mxu0 0.0
    %1229 = vmatpush.msra.mxu0 0.0
    %1230 = vmatpush.msra.mxu0 0.0
    %1231 = vmatpush.msra.mxu0 0.0
    %1232 = vmatpush.msra.mxu0 0.0
    %1233 = vmatpush.msra.mxu0 %v104
    %1234 = vmatpush.msra.mxu0 %v100
    %1235 = vmatmul.f32.gmra.mxu0 %v1217
    %v1236 = vpop.f32.mrf.mxu0
    %v1237 = vadd.f32 0.0, %v1236
    %1238 = vdwg.mxu0
    %1239 = vmatpush.msra.mxu0 0.0
    %1240 = vmatpush.msra.mxu0 0.0
    %1241 = vmatpush.msra.mxu0 0.0
    %1242 = vmatpush.msra.mxu0 0.0
    %1243 = vmatpush.msra.mxu0 0.0
    %1244 = vmatpush.msra.mxu0 0.0
    %1245 = vmatpush.msra.mxu0 0.0
    %1246 = vmatpush.msra.mxu0 0.0
    %1247 = vmatpush.msra.mxu0 0.0
    %1248 = vmatpush.msra.mxu0 0.0
    %1249 = vmatpush.msra.mxu0 0.0
    %1250 = vmatpush.msra.mxu0 0.0
    %1251 = vmatpush.msra.mxu0 0.0
    %1252 = vmatpush.msra.mxu0 0.0
    %1253 = vmatpush.msra.mxu0 %v105
    %1254 = vmatpush.msra.mxu0 %v101
    %1255 = vmatmul.f32.gmra.mxu0 %v1217
    %v1256 = vpop.f32.mrf.mxu0
    %v1257 = vadd.f32 0.0, %v1256
    %1258 = vdwg.mxu0
    %1259 = vmatpush.msra.mxu0 0.0
    %1260 = vmatpush.msra.mxu0 0.0
    %1261 = vmatpush.msra.mxu0 0.0
    %1262 = vmatpush.msra.mxu0 0.0
    %1263 = vmatpush.msra.mxu0 0.0
    %1264 = vmatpush.msra.mxu0 0.0
    %1265 = vmatpush.msra.mxu0 0.0
    %1266 = vmatpush.msra.mxu0 0.0
    %1267 = vmatpush.msra.mxu0 0.0
    %1268 = vmatpush.msra.mxu0 0.0
    %1269 = vmatpush.msra.mxu0 0.0
    %1270 = vmatpush.msra.mxu0 0.0
    %1271 = vmatpush.msra.mxu0 0.0
    %1272 = vmatpush.msra.mxu0 0.0
    %1273 = vmatpush.msra.mxu0 %v106
    %1274 = vmatpush.msra.mxu0 %v102
    %1275 = vmatmul.f32.gmra.mxu0 %v1217
    %v1276 = vpop.f32.mrf.mxu0
    %v1277 = vadd.f32 0.0, %v1276
    %1278 = vdwg.mxu0
    %1279 = vmatpush.msra.mxu0 0.0
    %1280 = vmatpush.msra.mxu0 0.0
    %1281 = vmatpush.msra.mxu0 0.0
    %1282 = vmatpush.msra.mxu0 0.0
    %1283 = vmatpush.msra.mxu0 0.0
    %1284 = vmatpush.msra.mxu0 0.0
    %1285 = vmatpush.msra.mxu0 0.0
    %1286 = vmatpush.msra.mxu0 0.0
    %1287 = vmatpush.msra.mxu0 0.0
    %1288 = vmatpush.msra.mxu0 0.0
    %1289 = vmatpush.msra.mxu0 0.0
    %1290 = vmatpush.msra.mxu0 0.0
    %1291 = vmatpush.msra.mxu0 0.0
    %1292 = vmatpush.msra.mxu0 0.0
    %1293 = vmatpush.msra.mxu0 %v107
    %1294 = vmatpush.msra.mxu0 %v103
    %1295 = vmatmul.f32.gmra.mxu0 %v1217
    %v1296 = vpop.f32.mrf.mxu0
    %v1297 = vadd.f32 0.0, %v1296
    %1298 = vdwg.mxu0
    %v1299 = vadd.f32 %v262, %v1237
    %v1300 = vadd.f32 %v263, %v1257
    %v1301 = vadd.f32 %v264, %v1277
    %v1302 = vadd.f32 %v265, %v1297
    %1303 = vmatpush.msra.mxu0 %v168
    %1304 = vmatpush.msra.mxu0 %v164
    %1305 = vmatpush.msra.mxu0 %v160
    %1306 = vmatpush.msra.mxu0 %v156
    %1307 = vmatpush.msra.mxu0 %v152
    %1308 = vmatpush.msra.mxu0 %v148
    %1309 = vmatpush.msra.mxu0 %v144
    %1310 = vmatpush.msra.mxu0 %v140
    %1311 = vmatpush.msra.mxu0 %v136
    %1312 = vmatpush.msra.mxu0 %v132
    %1313 = vmatpush.msra.mxu0 %v128
    %1314 = vmatpush.msra.mxu0 %v124
    %1315 = vmatpush.msra.mxu0 %v120
    %1316 = vmatpush.msra.mxu0 %v116
    %1317 = vmatpush.msra.mxu0 %v112
    %1318 = vmatpush.msra.mxu0 %v108
    %1319 = vmatmul.f32.gmra.mxu0 %v1206
    %v1320 = vpop.f32.mrf.mxu0
    %v1321 = vadd.f32 0.0, %v1320
    %1322 = vdwg.mxu0
    %1323 = vmatpush.msra.mxu0 %v169
    %1324 = vmatpush.msra.mxu0 %v165
    %1325 = vmatpush.msra.mxu0 %v161
    %1326 = vmatpush.msra.mxu0 %v157
    %1327 = vmatpush.msra.mxu0 %v153
    %1328 = vmatpush.msra.mxu0 %v149
    %1329 = vmatpush.msra.mxu0 %v145
    %1330 = vmatpush.msra.mxu0 %v141
    %1331 = vmatpush.msra.mxu0 %v137
    %1332 = vmatpush.msra.mxu0 %v133
    %1333 = vmatpush.msra.mxu0 %v129
    %1334 = vmatpush.msra.mxu0 %v125
    %1335 = vmatpush.msra.mxu0 %v121
    %1336 = vmatpush.msra.mxu0 %v117
    %1337 = vmatpush.msra.mxu0 %v113
    %1338 = vmatpush.msra.mxu0 %v109
    %1339 = vmatmul.f32.gmra.mxu0 %v1206
    %v1340 = vpop.f32.mrf.mxu0
    %v1341 = vadd.f32 0.0, %v1340
    %1342 = vdwg.mxu0
    %1343 = vmatpush.msra.mxu0 %v170
    %1344 = vmatpush.msra.mxu0 %v166
    %1345 = vmatpush.msra.mxu0 %v162
    %1346 = vmatpush.msra.mxu0 %v158
    %1347 = vmatpush.msra.mxu0 %v154
    %1348 = vmatpush.msra.mxu0 %v150
    %1349 = vmatpush.msra.mxu0 %v146
    %1350 = vmatpush.msra.mxu0 %v142
    %1351 = vmatpush.msra.mxu0 %v138
    %1352 = vmatpush.msra.mxu0 %v134
    %1353 = vmatpush.msra.mxu0 %v130
    %1354 = vmatpush.msra.mxu0 %v126
    %1355 = vmatpush.msra.mxu0 %v122
    %1356 = vmatpush.msra.mxu0 %v118
    %1357 = vmatpush.msra.mxu0 %v114
    %1358 = vmatpush.msra.mxu0 %v110
    %1359 = vmatmul.f32.gmra.mxu0 %v1206
    %v1360 = vpop.f32.mrf.mxu0
    %v1361 = vadd.f32 0.0, %v1360
    %1362 = vdwg.mxu0
    %1363 = vmatpush.msra.mxu0 %v171
    %1364 = vmatpush.msra.mxu0 %v167
    %1365 = vmatpush.msra.mxu0 %v163
    %1366 = vmatpush.msra.mxu0 %v159
    %1367 = vmatpush.msra.mxu0 %v155
    %1368 = vmatpush.msra.mxu0 %v151
    %1369 = vmatpush.msra.mxu0 %v147
    %1370 = vmatpush.msra.mxu0 %v143
    %1371 = vmatpush.msra.mxu0 %v139
    %1372 = vmatpush.msra.mxu0 %v135
    %1373 = vmatpush.msra.mxu0 %v131
    %1374 = vmatpush.msra.mxu0 %v127
    %1375 = vmatpush.msra.mxu0 %v123
    %1376 = vmatpush.msra.mxu0 %v119
    %1377 = vmatpush.msra.mxu0 %v115
    %1378 = vmatpush.msra.mxu0 %v111
    %1379 = vmatmul.f32.gmra.mxu0 %v1206
    %v1380 = vpop.f32.mrf.mxu0
    %v1381 = vadd.f32 0.0, %v1380
    %1382 = vdwg.mxu0
    %v1383 = vadd.f32 %v1299, %v1321
    %v1384 = vadd.f32 %v1300, %v1341
    %v1385 = vadd.f32 %v1301, %v1361
    %v1386 = vadd.f32 %v1302, %v1381
    %v1387 = vmul.f32 %v1383, 0.5
    %v1388 = vtanh.pop %v1387
    %v1389 = vmul.f32 %v1388, 0.5
    %v1390 = vadd.f32 %v1389, 0.5
    %v1391 = vmul.f32 %v1384, 0.5
    %v1392 = vtanh.pop %v1391
    %v1393 = vmul.f32 %v1392, 0.5
    %v1394 = vadd.f32 %v1393, 0.5
    %v1395 = vtanh.pop %v1385
    %v1396 = vmul.f32 %v1386, 0.5
    %v1397 = vtanh.pop %v1396
    %v1398 = vmul.f32 %v1397, 0.5
    %v1399 = vadd.f32 %v1398, 0.5
    %v1400 = vmul.f32 %v1394, %v1209
    %v1401 = vmul.f32 %v1390, %v1395
    %v1402 = vadd.f32 %v1400, %v1401
    %v1403 = vtanh.pop %v1402
    %v1404 = vmul.f32 %v1399, %v1403
    %v1405 = vsub.f32 %v1404, %v98
    %1407 = vset.pattern.permute.xlu0 0
    %1408 = vperm.xlu0 %1407, %v1215
    %v1409 = vpop.permute.xlu0 %1408
    %v1411 = vmul.f32 %v1409, %v1405
    %v1412 = vadd.f32 %v98, %v1411
    %v1413 = vsub.f32 %v1402, %v99
    %v1414 = vmul.f32 %v1409, %v1413
    %v1415 = vadd.f32 %v99, %v1414
    %s1416 = scalar_lea.vmem [#allocation12], 40
    %1417 = vst [vmem:[%s1416] sm:$0xff] %v1412
    %s1418 = scalar_lea.vmem %s0, 48
    %v1419 = vld [vmem:[%s1418] sm:$0xff]
    %s1420 = scalar_lea.vmem %s1, 48
    %v1421 = vld [vmem:[%s1420] sm:$0xff]
    %v1423 = vsel %vm177, %v1419, 0
    %1425 = vmatpush.msra.mxu0 0.0
    %1426 = vmatpush.msra.mxu0 0.0
    %1427 = vmatpush.msra.mxu0 0.0
    %1428 = vmatpush.msra.mxu0 0.0
    %1429 = vmatpush.msra.mxu0 0.0
    %1430 = vmatpush.msra.mxu0 0.0
    %1431 = vmatpush.msra.mxu0 0.0
    %1432 = vmatpush.msra.mxu0 0.0
    %1433 = vmatpush.msra.mxu0 0.0
    %1434 = vmatpush.msra.mxu0 0.0
    %1435 = vmatpush.msra.mxu0 0.0
    %1436 = vmatpush.msra.mxu0 0.0
    %1437 = vmatpush.msra.mxu0 0.0
    %1438 = vmatpush.msra.mxu0 0.0
    %1439 = vmatpush.msra.mxu0 %v104
    %1440 = vmatpush.msra.mxu0 %v100
    %1441 = vmatmul.f32.gmra.mxu0 %v1423
    %v1442 = vpop.f32.mrf.mxu0
    %v1443 = vadd.f32 0.0, %v1442
    %1444 = vdwg.mxu0
    %1445 = vmatpush.msra.mxu0 0.0
    %1446 = vmatpush.msra.mxu0 0.0
    %1447 = vmatpush.msra.mxu0 0.0
    %1448 = vmatpush.msra.mxu0 0.0
    %1449 = vmatpush.msra.mxu0 0.0
    %1450 = vmatpush.msra.mxu0 0.0
    %1451 = vmatpush.msra.mxu0 0.0
    %1452 = vmatpush.msra.mxu0 0.0
    %1453 = vmatpush.msra.mxu0 0.0
    %1454 = vmatpush.msra.mxu0 0.0
    %1455 = vmatpush.msra.mxu0 0.0
    %1456 = vmatpush.msra.mxu0 0.0
    %1457 = vmatpush.msra.mxu0 0.0
    %1458 = vmatpush.msra.mxu0 0.0
    %1459 = vmatpush.msra.mxu0 %v105
    %1460 = vmatpush.msra.mxu0 %v101
    %1461 = vmatmul.f32.gmra.mxu0 %v1423
    %v1462 = vpop.f32.mrf.mxu0
    %v1463 = vadd.f32 0.0, %v1462
    %1464 = vdwg.mxu0
    %1465 = vmatpush.msra.mxu0 0.0
    %1466 = vmatpush.msra.mxu0 0.0
    %1467 = vmatpush.msra.mxu0 0.0
    %1468 = vmatpush.msra.mxu0 0.0
    %1469 = vmatpush.msra.mxu0 0.0
    %1470 = vmatpush.msra.mxu0 0.0
    %1471 = vmatpush.msra.mxu0 0.0
    %1472 = vmatpush.msra.mxu0 0.0
    %1473 = vmatpush.msra.mxu0 0.0
    %1474 = vmatpush.msra.mxu0 0.0
    %1475 = vmatpush.msra.mxu0 0.0
    %1476 = vmatpush.msra.mxu0 0.0
    %1477 = vmatpush.msra.mxu0 0.0
    %1478 = vmatpush.msra.mxu0 0.0
    %1479 = vmatpush.msra.mxu0 %v106
    %1480 = vmatpush.msra.mxu0 %v102
    %1481 = vmatmul.f32.gmra.mxu0 %v1423
    %v1482 = vpop.f32.mrf.mxu0
    %v1483 = vadd.f32 0.0, %v1482
    %1484 = vdwg.mxu0
    %1485 = vmatpush.msra.mxu0 0.0
    %1486 = vmatpush.msra.mxu0 0.0
    %1487 = vmatpush.msra.mxu0 0.0
    %1488 = vmatpush.msra.mxu0 0.0
    %1489 = vmatpush.msra.mxu0 0.0
    %1490 = vmatpush.msra.mxu0 0.0
    %1491 = vmatpush.msra.mxu0 0.0
    %1492 = vmatpush.msra.mxu0 0.0
    %1493 = vmatpush.msra.mxu0 0.0
    %1494 = vmatpush.msra.mxu0 0.0
    %1495 = vmatpush.msra.mxu0 0.0
    %1496 = vmatpush.msra.mxu0 0.0
    %1497 = vmatpush.msra.mxu0 0.0
    %1498 = vmatpush.msra.mxu0 0.0
    %1499 = vmatpush.msra.mxu0 %v107
    %1500 = vmatpush.msra.mxu0 %v103
    %1501 = vmatmul.f32.gmra.mxu0 %v1423
    %v1502 = vpop.f32.mrf.mxu0
    %v1503 = vadd.f32 0.0, %v1502
    %1504 = vdwg.mxu0
    %v1505 = vadd.f32 %v262, %v1443
    %v1506 = vadd.f32 %v263, %v1463
    %v1507 = vadd.f32 %v264, %v1483
    %v1508 = vadd.f32 %v265, %v1503
    %1509 = vmatpush.msra.mxu0 %v168
    %1510 = vmatpush.msra.mxu0 %v164
    %1511 = vmatpush.msra.mxu0 %v160
    %1512 = vmatpush.msra.mxu0 %v156
    %1513 = vmatpush.msra.mxu0 %v152
    %1514 = vmatpush.msra.mxu0 %v148
    %1515 = vmatpush.msra.mxu0 %v144
    %1516 = vmatpush.msra.mxu0 %v140
    %1517 = vmatpush.msra.mxu0 %v136
    %1518 = vmatpush.msra.mxu0 %v132
    %1519 = vmatpush.msra.mxu0 %v128
    %1520 = vmatpush.msra.mxu0 %v124
    %1521 = vmatpush.msra.mxu0 %v120
    %1522 = vmatpush.msra.mxu0 %v116
    %1523 = vmatpush.msra.mxu0 %v112
    %1524 = vmatpush.msra.mxu0 %v108
    %1525 = vmatmul.f32.gmra.mxu0 %v1412
    %v1526 = vpop.f32.mrf.mxu0
    %v1527 = vadd.f32 0.0, %v1526
    %1528 = vdwg.mxu0
    %1529 = vmatpush.msra.mxu0 %v169
    %1530 = vmatpush.msra.mxu0 %v165
    %1531 = vmatpush.msra.mxu0 %v161
    %1532 = vmatpush.msra.mxu0 %v157
    %1533 = vmatpush.msra.mxu0 %v153
    %1534 = vmatpush.msra.mxu0 %v149
    %1535 = vmatpush.msra.mxu0 %v145
    %1536 = vmatpush.msra.mxu0 %v141
    %1537 = vmatpush.msra.mxu0 %v137
    %1538 = vmatpush.msra.mxu0 %v133
    %1539 = vmatpush.msra.mxu0 %v129
    %1540 = vmatpush.msra.mxu0 %v125
    %1541 = vmatpush.msra.mxu0 %v121
    %1542 = vmatpush.msra.mxu0 %v117
    %1543 = vmatpush.msra.mxu0 %v113
    %1544 = vmatpush.msra.mxu0 %v109
    %1545 = vmatmul.f32.gmra.mxu0 %v1412
    %v1546 = vpop.f32.mrf.mxu0
    %v1547 = vadd.f32 0.0, %v1546
    %1548 = vdwg.mxu0
    %1549 = vmatpush.msra.mxu0 %v170
    %1550 = vmatpush.msra.mxu0 %v166
    %1551 = vmatpush.msra.mxu0 %v162
    %1552 = vmatpush.msra.mxu0 %v158
    %1553 = vmatpush.msra.mxu0 %v154
    %1554 = vmatpush.msra.mxu0 %v150
    %1555 = vmatpush.msra.mxu0 %v146
    %1556 = vmatpush.msra.mxu0 %v142
    %1557 = vmatpush.msra.mxu0 %v138
    %1558 = vmatpush.msra.mxu0 %v134
    %1559 = vmatpush.msra.mxu0 %v130
    %1560 = vmatpush.msra.mxu0 %v126
    %1561 = vmatpush.msra.mxu0 %v122
    %1562 = vmatpush.msra.mxu0 %v118
    %1563 = vmatpush.msra.mxu0 %v114
    %1564 = vmatpush.msra.mxu0 %v110
    %1565 = vmatmul.f32.gmra.mxu0 %v1412
    %v1566 = vpop.f32.mrf.mxu0
    %v1567 = vadd.f32 0.0, %v1566
    %1568 = vdwg.mxu0
    %1569 = vmatpush.msra.mxu0 %v171
    %1570 = vmatpush.msra.mxu0 %v167
    %1571 = vmatpush.msra.mxu0 %v163
    %1572 = vmatpush.msra.mxu0 %v159
    %1573 = vmatpush.msra.mxu0 %v155
    %1574 = vmatpush.msra.mxu0 %v151
    %1575 = vmatpush.msra.mxu0 %v147
    %1576 = vmatpush.msra.mxu0 %v143
    %1577 = vmatpush.msra.mxu0 %v139
    %1578 = vmatpush.msra.mxu0 %v135
    %1579 = vmatpush.msra.mxu0 %v131
    %1580 = vmatpush.msra.mxu0 %v127
    %1581 = vmatpush.msra.mxu0 %v123
    %1582 = vmatpush.msra.mxu0 %v119
    %1583 = vmatpush.msra.mxu0 %v115
    %1584 = vmatpush.msra.mxu0 %v111
    %1585 = vmatmul.f32.gmra.mxu0 %v1412
    %v1586 = vpop.f32.mrf.mxu0
    %v1587 = vadd.f32 0.0, %v1586
    %1588 = vdwg.mxu0
    %v1589 = vadd.f32 %v1505, %v1527
    %v1590 = vadd.f32 %v1506, %v1547
    %v1591 = vadd.f32 %v1507, %v1567
    %v1592 = vadd.f32 %v1508, %v1587
    %v1593 = vmul.f32 %v1589, 0.5
    %v1594 = vtanh.pop %v1593
    %v1595 = vmul.f32 %v1594, 0.5
    %v1596 = vadd.f32 %v1595, 0.5
    %v1597 = vmul.f32 %v1590, 0.5
    %v1598 = vtanh.pop %v1597
    %v1599 = vmul.f32 %v1598, 0.5
    %v1600 = vadd.f32 %v1599, 0.5
    %v1601 = vtanh.pop %v1591
    %v1602 = vmul.f32 %v1592, 0.5
    %v1603 = vtanh.pop %v1602
    %v1604 = vmul.f32 %v1603, 0.5
    %v1605 = vadd.f32 %v1604, 0.5
    %v1606 = vmul.f32 %v1600, %v1415
    %v1607 = vmul.f32 %v1596, %v1601
    %v1608 = vadd.f32 %v1606, %v1607
    %v1609 = vtanh.pop %v1608
    %v1610 = vmul.f32 %v1605, %v1609
    %v1611 = vsub.f32 %v1610, %v98
    %1613 = vset.pattern.permute.xlu0 0
    %1614 = vperm.xlu0 %1613, %v1421
    %v1615 = vpop.permute.xlu0 %1614
    %v1617 = vmul.f32 %v1615, %v1611
    %v1618 = vadd.f32 %v98, %v1617
    %v1619 = vsub.f32 %v1608, %v99
    %v1620 = vmul.f32 %v1615, %v1619
    %v1621 = vadd.f32 %v99, %v1620
    %s1622 = scalar_lea.vmem [#allocation12], 48
    %1623 = vst [vmem:[%s1622] sm:$0xff] %v1618
    %s1624 = scalar_lea.vmem %s0, 56
    %v1625 = vld [vmem:[%s1624] sm:$0xff]
    %s1626 = scalar_lea.vmem %s1, 56
    %v1627 = vld [vmem:[%s1626] sm:$0xff]
    %v1629 = vsel %vm177, %v1625, 0
    %1631 = vmatpush.msra.mxu0 0.0
    %1632 = vmatpush.msra.mxu0 0.0
    %1633 = vmatpush.msra.mxu0 0.0
    %1634 = vmatpush.msra.mxu0 0.0
    %1635 = vmatpush.msra.mxu0 0.0
    %1636 = vmatpush.msra.mxu0 0.0
    %1637 = vmatpush.msra.mxu0 0.0
    %1638 = vmatpush.msra.mxu0 0.0
    %1639 = vmatpush.msra.mxu0 0.0
    %1640 = vmatpush.msra.mxu0 0.0
    %1641 = vmatpush.msra.mxu0 0.0
    %1642 = vmatpush.msra.mxu0 0.0
    %1643 = vmatpush.msra.mxu0 0.0
    %1644 = vmatpush.msra.mxu0 0.0
    %1645 = vmatpush.msra.mxu0 %v104
    %1646 = vmatpush.msra.mxu0 %v100
    %1647 = vmatmul.f32.gmra.mxu0 %v1629
    %v1648 = vpop.f32.mrf.mxu0
    %v1649 = vadd.f32 0.0, %v1648
    %1650 = vdwg.mxu0
    %1651 = vmatpush.msra.mxu0 0.0
    %1652 = vmatpush.msra.mxu0 0.0
    %1653 = vmatpush.msra.mxu0 0.0
    %1654 = vmatpush.msra.mxu0 0.0
    %1655 = vmatpush.msra.mxu0 0.0
    %1656 = vmatpush.msra.mxu0 0.0
    %1657 = vmatpush.msra.mxu0 0.0
    %1658 = vmatpush.msra.mxu0 0.0
    %1659 = vmatpush.msra.mxu0 0.0
    %1660 = vmatpush.msra.mxu0 0.0
    %1661 = vmatpush.msra.mxu0 0.0
    %1662 = vmatpush.msra.mxu0 0.0
    %1663 = vmatpush.msra.mxu0 0.0
    %1664 = vmatpush.msra.mxu0 0.0
    %1665 = vmatpush.msra.mxu0 %v105
    %1666 = vmatpush.msra.mxu0 %v101
    %1667 = vmatmul.f32.gmra.mxu0 %v1629
    %v1668 = vpop.f32.mrf.mxu0
    %v1669 = vadd.f32 0.0, %v1668
    %1670 = vdwg.mxu0
    %1671 = vmatpush.msra.mxu0 0.0
    %1672 = vmatpush.msra.mxu0 0.0
    %1673 = vmatpush.msra.mxu0 0.0
    %1674 = vmatpush.msra.mxu0 0.0
    %1675 = vmatpush.msra.mxu0 0.0
    %1676 = vmatpush.msra.mxu0 0.0
    %1677 = vmatpush.msra.mxu0 0.0
    %1678 = vmatpush.msra.mxu0 0.0
    %1679 = vmatpush.msra.mxu0 0.0
    %1680 = vmatpush.msra.mxu0 0.0
    %1681 = vmatpush.msra.mxu0 0.0
    %1682 = vmatpush.msra.mxu0 0.0
    %1683 = vmatpush.msra.mxu0 0.0
    %1684 = vmatpush.msra.mxu0 0.0
    %1685 = vmatpush.msra.mxu0 %v106
    %1686 = vmatpush.msra.mxu0 %v102
    %1687 = vmatmul.f32.gmra.mxu0 %v1629
    %v1688 = vpop.f32.mrf.mxu0
    %v1689 = vadd.f32 0.0, %v1688
    %1690 = vdwg.mxu0
    %1691 = vmatpush.msra.mxu0 0.0
    %1692 = vmatpush.msra.mxu0 0.0
    %1693 = vmatpush.msra.mxu0 0.0
    %1694 = vmatpush.msra.mxu0 0.0
    %1695 = vmatpush.msra.mxu0 0.0
    %1696 = vmatpush.msra.mxu0 0.0
    %1697 = vmatpush.msra.mxu0 0.0
    %1698 = vmatpush.msra.mxu0 0.0
    %1699 = vmatpush.msra.mxu0 0.0
    %1700 = vmatpush.msra.mxu0 0.0
    %1701 = vmatpush.msra.mxu0 0.0
    %1702 = vmatpush.msra.mxu0 0.0
    %1703 = vmatpush.msra.mxu0 0.0
    %1704 = vmatpush.msra.mxu0 0.0
    %1705 = vmatpush.msra.mxu0 %v107
    %1706 = vmatpush.msra.mxu0 %v103
    %1707 = vmatmul.f32.gmra.mxu0 %v1629
    %v1708 = vpop.f32.mrf.mxu0
    %v1709 = vadd.f32 0.0, %v1708
    %1710 = vdwg.mxu0
    %v1711 = vadd.f32 %v262, %v1649
    %v1712 = vadd.f32 %v263, %v1669
    %v1713 = vadd.f32 %v264, %v1689
    %v1714 = vadd.f32 %v265, %v1709
    %1715 = vmatpush.msra.mxu0 %v168
    %1716 = vmatpush.msra.mxu0 %v164
    %1717 = vmatpush.msra.mxu0 %v160
    %1718 = vmatpush.msra.mxu0 %v156
    %1719 = vmatpush.msra.mxu0 %v152
    %1720 = vmatpush.msra.mxu0 %v148
    %1721 = vmatpush.msra.mxu0 %v144
    %1722 = vmatpush.msra.mxu0 %v140
    %1723 = vmatpush.msra.mxu0 %v136
    %1724 = vmatpush.msra.mxu0 %v132
    %1725 = vmatpush.msra.mxu0 %v128
    %1726 = vmatpush.msra.mxu0 %v124
    %1727 = vmatpush.msra.mxu0 %v120
    %1728 = vmatpush.msra.mxu0 %v116
    %1729 = vmatpush.msra.mxu0 %v112
    %1730 = vmatpush.msra.mxu0 %v108
    %1731 = vmatmul.f32.gmra.mxu0 %v1618
    %v1732 = vpop.f32.mrf.mxu0
    %v1733 = vadd.f32 0.0, %v1732
    %1734 = vdwg.mxu0
    %1735 = vmatpush.msra.mxu0 %v169
    %1736 = vmatpush.msra.mxu0 %v165
    %1737 = vmatpush.msra.mxu0 %v161
    %1738 = vmatpush.msra.mxu0 %v157
    %1739 = vmatpush.msra.mxu0 %v153
    %1740 = vmatpush.msra.mxu0 %v149
    %1741 = vmatpush.msra.mxu0 %v145
    %1742 = vmatpush.msra.mxu0 %v141
    %1743 = vmatpush.msra.mxu0 %v137
    %1744 = vmatpush.msra.mxu0 %v133
    %1745 = vmatpush.msra.mxu0 %v129
    %1746 = vmatpush.msra.mxu0 %v125
    %1747 = vmatpush.msra.mxu0 %v121
    %1748 = vmatpush.msra.mxu0 %v117
    %1749 = vmatpush.msra.mxu0 %v113
    %1750 = vmatpush.msra.mxu0 %v109
    %1751 = vmatmul.f32.gmra.mxu0 %v1618
    %v1752 = vpop.f32.mrf.mxu0
    %v1753 = vadd.f32 0.0, %v1752
    %1754 = vdwg.mxu0
    %1755 = vmatpush.msra.mxu0 %v170
    %1756 = vmatpush.msra.mxu0 %v166
    %1757 = vmatpush.msra.mxu0 %v162
    %1758 = vmatpush.msra.mxu0 %v158
    %1759 = vmatpush.msra.mxu0 %v154
    %1760 = vmatpush.msra.mxu0 %v150
    %1761 = vmatpush.msra.mxu0 %v146
    %1762 = vmatpush.msra.mxu0 %v142
    %1763 = vmatpush.msra.mxu0 %v138
    %1764 = vmatpush.msra.mxu0 %v134
    %1765 = vmatpush.msra.mxu0 %v130
    %1766 = vmatpush.msra.mxu0 %v126
    %1767 = vmatpush.msra.mxu0 %v122
    %1768 = vmatpush.msra.mxu0 %v118
    %1769 = vmatpush.msra.mxu0 %v114
    %1770 = vmatpush.msra.mxu0 %v110
    %1771 = vmatmul.f32.gmra.mxu0 %v1618
    %v1772 = vpop.f32.mrf.mxu0
    %v1773 = vadd.f32 0.0, %v1772
    %1774 = vdwg.mxu0
    %1775 = vmatpush.msra.mxu0 %v171
    %1776 = vmatpush.msra.mxu0 %v167
    %1777 = vmatpush.msra.mxu0 %v163
    %1778 = vmatpush.msra.mxu0 %v159
    %1779 = vmatpush.msra.mxu0 %v155
    %1780 = vmatpush.msra.mxu0 %v151
    %1781 = vmatpush.msra.mxu0 %v147
    %1782 = vmatpush.msra.mxu0 %v143
    %1783 = vmatpush.msra.mxu0 %v139
    %1784 = vmatpush.msra.mxu0 %v135
    %1785 = vmatpush.msra.mxu0 %v131
    %1786 = vmatpush.msra.mxu0 %v127
    %1787 = vmatpush.msra.mxu0 %v123
    %1788 = vmatpush.msra.mxu0 %v119
    %1789 = vmatpush.msra.mxu0 %v115
    %1790 = vmatpush.msra.mxu0 %v111
    %1791 = vmatmul.f32.gmra.mxu0 %v1618
    %v1792 = vpop.f32.mrf.mxu0
    %v1793 = vadd.f32 0.0, %v1792
    %1794 = vdwg.mxu0
    %v1795 = vadd.f32 %v1711, %v1733
    %v1796 = vadd.f32 %v1712, %v1753
    %v1797 = vadd.f32 %v1713, %v1773
    %v1798 = vadd.f32 %v1714, %v1793
    %v1799 = vmul.f32 %v1795, 0.5
    %v1800 = vtanh.pop %v1799
    %v1801 = vmul.f32 %v1800, 0.5
    %v1802 = vadd.f32 %v1801, 0.5
    %v1803 = vmul.f32 %v1796, 0.5
    %v1804 = vtanh.pop %v1803
    %v1805 = vmul.f32 %v1804, 0.5
    %v1806 = vadd.f32 %v1805, 0.5
    %v1807 = vtanh.pop %v1797
    %v1808 = vmul.f32 %v1798, 0.5
    %v1809 = vtanh.pop %v1808
    %v1810 = vmul.f32 %v1809, 0.5
    %v1811 = vadd.f32 %v1810, 0.5
    %v1812 = vmul.f32 %v1806, %v1621
    %v1813 = vmul.f32 %v1802, %v1807
    %v1814 = vadd.f32 %v1812, %v1813
    %v1815 = vtanh.pop %v1814
    %v1816 = vmul.f32 %v1811, %v1815
    %v1817 = vsub.f32 %v1816, %v98
    %1819 = vset.pattern.permute.xlu0 0
    %1820 = vperm.xlu0 %1819, %v1627
    %v1821 = vpop.permute.xlu0 %1820
    %v1823 = vmul.f32 %v1821, %v1817
    %v1824 = vadd.f32 %v98, %v1823
    %v1825 = vsub.f32 %v1814, %v99
    %v1826 = vmul.f32 %v1821, %v1825
    %v1827 = vadd.f32 %v99, %v1826
    %s1828 = scalar_lea.vmem [#allocation12], 56
    %1829 = vst [vmem:[%s1828] sm:$0xff] %v1824
    %1830 = vst [vmem:[#allocation2] sm:$0xff] %v1824
    %1831 = vst [vmem:[#allocation3] sm:$0xff] %v1827
    // Predicated region
    $region50: #{tpu_custom_call.1} parent=1 // pred_check
      %p1832 = pneg %p90
    $region51: #{tpu_custom_call.1} parent=1 // pred_check_branch
      %1834 = sbr.rel (%p1832) target = $region53
    $region52: #{tpu_custom_call.1} parent=1 // pred_region
      %1835 = vst [vmem:[#allocation13] sm:$0xff] %v1824
      %1836 = vst [vmem:[#allocation15] sm:$0xff] %v1827
    $region53: #{tpu_custom_call.1} parent=1 // pred_fallthru
      _
    // Predicated region
    $region54: #{tpu_custom_call.1} parent=1 // pred_check
      _
    $region55: #{tpu_custom_call.1} parent=1 // pred_check_branch
      %1838 = sbr.rel (0) target = $region57
    $region56: #{tpu_custom_call.1} parent=1 // pred_region
      %1840 = vsyncadd [#allocation6], 0
      %s1841 = sshll.u32 [#allocation12], 4
      %s1842 = int_to_ptr.vmem [resolvable:$true] %s1841
      %s1843 = sshll.u32 %s7, 4
      %s1844 = int_to_ptr.hbm [resolvable:$true] %s1843
      %1849 = dma.vmem_to_hbm [thread:$0]  %s1842, 1024, %s1844, [#allocation6], 128, 128, 8
    $region57: #{tpu_custom_call.1} parent=1 // pred_fallthru
      _
    // Predicated region
    $region58: #{tpu_custom_call.1} parent=1 // pred_check
      _
    $region59: #{tpu_custom_call.1} parent=1 // pred_check_branch
      %1851 = sbr.rel (0) target = $region61
    $region60: #{tpu_custom_call.1} parent=1 // pred_region
      %1853 = vsyncadd [#allocation14], 0
      %s1855 = sshll.u32 [#allocation13], 4
      %s1856 = int_to_ptr.vmem [resolvable:$true] %s1855
      %s1857 = sshll.u32 %s8, 4
      %s1858 = int_to_ptr.hbm [resolvable:$true] %s1857
      %1860 = dma.vmem_to_hbm [thread:$0]  %s1856, 128, %s1858, [#allocation14]
    $region61: #{tpu_custom_call.1} parent=1 // pred_fallthru
      _
    // Predicated region
    $region62: #{tpu_custom_call.1} parent=1 // pred_check
      _
    $region63: #{tpu_custom_call.1} parent=1 // pred_check_branch
      %1862 = sbr.rel (0) target = $region65
    $region64: #{tpu_custom_call.1} parent=1 // pred_region
      %1864 = vsyncadd [#allocation14], 0
      %s1866 = sshll.u32 [#allocation15], 4
      %s1867 = int_to_ptr.vmem [resolvable:$true] %s1866
      %s1868 = sshll.u32 %s9, 4
      %s1869 = int_to_ptr.hbm [resolvable:$true] %s1868
      %1871 = dma.vmem_to_hbm [thread:$0]  %s1867, 128, %s1869, [#allocation14]
    $region65: #{tpu_custom_call.1} parent=1 // pred_fallthru
      _
    // Predicated region
    $region66: #{tpu_custom_call.1} parent=1 // pred_check
      _
    $region67: #{tpu_custom_call.1} parent=1 // pred_check_branch
      %1873 = sbr.rel (0) target = $region69
    $region68: #{tpu_custom_call.1} parent=1 // pred_region
      %1875 = dma.done [#allocation6], 1024
    $region69: #{tpu_custom_call.1} parent=1 // pred_fallthru
      _
    // Predicated region
    $region70: #{tpu_custom_call.1} parent=1 // pred_check
      _
    $region71: #{tpu_custom_call.1} parent=1 // pred_check_branch
      %1877 = sbr.rel (0) target = $region73
    $region72: #{tpu_custom_call.1} parent=1 // pred_region
      %1879 = dma.done [#allocation14], 128
    $region73: #{tpu_custom_call.1} parent=1 // pred_fallthru
      _
    // Predicated region
    $region74: #{tpu_custom_call.1} parent=1 // pred_check
      _
    $region75: #{tpu_custom_call.1} parent=1 // pred_check_branch
      %1881 = sbr.rel (0) target = $region77
    $region76: #{tpu_custom_call.1} parent=1 // pred_region
      %1883 = dma.done [#allocation14], 128
    $region77: #{tpu_custom_call.1} parent=1 // pred_fallthru
      _
    %1884 = vsyncpa [#allocation5], 1
    %1885 = vsyncpa [#allocation8], 1
    %1886 = vsyncpa [#allocation11], 1
    %1887 = vsyncpa [#allocation6], 1
    %1888 = vsyncpa [#allocation14], 1

// kernel: tpu_custom_call.1
$region0: #{tpu_custom_call.1}
  #allocation0 [shape = 'u32[]', space=smem, size = 0x4, offset = 0x4, fixed_abs, tag = 'smem constant byte address 0x4 - core index']
  #allocation1 [shape = 'u32[72,128]{1,0:T(1,128)}', space=vmem, size = 0x9000, scoped, tag = 'internal scratch']
  #allocation2 [shape = 'f32[8,128]{1,0:T(8,128)}', space=vmem, size = 0x1000, scoped, tag = 'scratch operand']
  #allocation3 [shape = 'f32[8,128]{1,0:T(8,128)}', space=vmem, size = 0x1000, scoped, tag = 'scratch operand']
  %s0 = inlined_call_operand.vmem [shape: f32[8,8,16], index: 0, kind: input, shape index: {}]
  %s1 = inlined_call_operand.vmem [shape: f32[8,8,1], index: 1, kind: input, shape index: {}]
  %s2 = inlined_call_operand.hbm [shape: f32[16,512], index: 2, kind: input, shape index: {}]
  %s3 = inlined_call_operand.hbm [shape: f32[128,512], index: 3, kind: input, shape index: {}]
  %s4 = inlined_call_operand.hbm [shape: f32[1,512], index: 4, kind: input, shape index: {}]
  %s5 = inlined_call_operand.vmem [shape: f32[8,128], index: 5, kind: input, shape index: {}]
  %s6 = inlined_call_operand.hbm [shape: f32[8,128], index: 6, kind: input, shape index: {}]
  %s7 = inlined_call_operand.hbm [shape: f32[8,8,128], index: 7, kind: output, shape index: {0}]
  %s8 = inlined_call_operand.hbm [shape: f32[8,128], index: 8, kind: output, shape index: {1}]
  %s9 = inlined_call_operand.hbm [shape: f32[8,128], index: 9, kind: output, shape index: {2}]
  %10 = xla_tuple %s7, %s8, %s9
  %s11 = sld [smem:[#allocation0]]
  $region78: #{tpu_custom_call.1} parent=0
    _
  %s13 = ssub.s32 1, %s11
  %s14 = scalar_select 0, %s13, %s11
  $region1: #{tpu_custom_call.1} parent=0
    #allocation4 [shape = 'u8[32768]{0}', space=vmem, size = 0x8000, scoped, tag = 'input window, operand 2, single buffered']
    #allocation5 [shape = 's32[1]{0}', space=sflag, size = 0x4, scoped, tag = 'scoped memory for tpu_custom_call.1']
    #allocation6 [shape = 's32[1]{0}', space=sflag, size = 0x4, scoped, tag = 'scoped memory for tpu_custom_call.1']
    #allocation7 [shape = 'u8[262144]{0}', space=vmem, size = 0x40000, scoped, tag = 'input window, operand 3, single buffered']
    #allocation8 [shape = 's32[1]{0}', space=sflag, size = 0x4, scoped, tag = 'scoped memory for tpu_custom_call.1']
    #allocation9 [shape = 'u8[2048]{0}', space=vmem, size = 0x800, scoped, tag = 'input window, operand 4, single buffered']
    #allocation10 [shape = 'u8[4096]{0}', space=vmem, size = 0x1000, scoped, tag = 'input window, operand 6, single buffered']
    #allocation11 [shape = 's32[1]{0}', space=sflag, size = 0x4, scoped, tag = 'scoped memory for tpu_custom_call.1']
    #allocation12 [shape = 'u8[32768]{0}', space=vmem, size = 0x8000, scoped, tag = 'output window, operand 0, single buffered']
    #allocation13 [shape = 'u8[4096]{0}', space=vmem, size = 0x1000, scoped, tag = 'output window, operand 1, single buffered']
    #allocation14 [shape = 's32[1]{0}', space=sflag, size = 0x4, scoped, tag = 'scoped memory for tpu_custom_call.1']
    #allocation15 [shape = 'u8[4096]{0}', space=vmem, size = 0x1000, scoped, tag = 'output window, operand 2, single buffered']
    %15 = vsyncpa [#allocation5], 0
    %16 = vsyncpa [#allocation8], 0
    %17 = vsyncpa [#allocation11], 0
    %18 = vsyncpa [#allocation6], 0
    %19 = vsyncpa [#allocation14], 0
    // Predicated region
    $region2: #{tpu_custom_call.1} parent=1 // pred_check
      _
    $region3: #{tpu_custom_call.1} parent=1 // pred_check_branch
      %21 = sbr.rel (0) target = $region5
    $region4: #{tpu_custom_call.1} parent=1 // pred_region
      _
    $region5: #{tpu_custom_call.1} parent=1 // pred_fallthru
      _
    // Predicated region
    $region6: #{tpu_custom_call.1} parent=1 // pred_check
      _
    $region7: #{tpu_custom_call.1} parent=1 // pred_check_branch
      %23 = sbr.rel (0) target = $region9
    $region8: #{tpu_custom_call.1} parent=1 // pred_region
      _
    $region9: #{tpu_custom_call.1} parent=1 // pred_fallthru
      _
    // Predicated region
    $region10: #{tpu_custom_call.1} parent=1 // pred_check
      _
    $region11: #{tpu_custom_call.1} parent=1 // pred_check_branch
      %25 = sbr.rel (0) target = $region13
    $region12: #{tpu_custom_call.1} parent=1 // pred_region
      %27 = vsyncadd [#allocation5], 0
      %s28 = sshll.u32 %s2, 4
      %s29 = int_to_ptr.hbm [resolvable:$true] %s28
      %s30 = sshll.u32 [#allocation4], 4
      %s31 = int_to_ptr.vmem [resolvable:$true] %s30
      %36 = dma.hbm_to_vmem [thread:$0]  %s29, 1024, %s31, [#allocation5], 512, 512, 32
    $region13: #{tpu_custom_call.1} parent=1 // pred_fallthru
      _
    // Predicated region
    $region14: #{tpu_custom_call.1} parent=1 // pred_check
      _
    $region15: #{tpu_custom_call.1} parent=1 // pred_check_branch
      %38 = sbr.rel (0) target = $region17
    $region16: #{tpu_custom_call.1} parent=1 // pred_region
      %40 = vsyncadd [#allocation8], 0
      %s41 = sshll.u32 %s3, 4
      %s42 = int_to_ptr.hbm [resolvable:$true] %s41
      %s43 = sshll.u32 [#allocation7], 4
      %s44 = int_to_ptr.vmem [resolvable:$true] %s43
      %49 = dma.hbm_to_vmem [thread:$0]  %s42, 8192, %s44, [#allocation8], 512, 512, 32
    $region17: #{tpu_custom_call.1} parent=1 // pred_fallthru
      _
    // Predicated region
    $region18: #{tpu_custom_call.1} parent=1 // pred_check
      _
    $region19: #{tpu_custom_call.1} parent=1 // pred_check_branch
      %51 = sbr.rel (0) target = $region21
    $region20: #{tpu_custom_call.1} parent=1 // pred_region
      %53 = vsyncadd [#allocation8], 0
      %s55 = sshll.u32 %s4, 4
      %s56 = int_to_ptr.hbm [resolvable:$true] %s55
      %s57 = sshll.u32 [#allocation9], 4
      %s58 = int_to_ptr.vmem [resolvable:$true] %s57
      %60 = dma.hbm_to_vmem [thread:$0]  %s56, 64, %s58, [#allocation8]
    $region21: #{tpu_custom_call.1} parent=1 // pred_fallthru
      _
    // Predicated region
    $region22: #{tpu_custom_call.1} parent=1 // pred_check
      _
    $region23: #{tpu_custom_call.1} parent=1 // pred_check_branch
      %62 = sbr.rel (0) target = $region25
    $region24: #{tpu_custom_call.1} parent=1 // pred_region
      _
    $region25: #{tpu_custom_call.1} parent=1 // pred_fallthru
      _
    // Predicated region
    $region26: #{tpu_custom_call.1} parent=1 // pred_check
      _
    $region27: #{tpu_custom_call.1} parent=1 // pred_check_branch
      %64 = sbr.rel (0) target = $region29
    $region28: #{tpu_custom_call.1} parent=1 // pred_region
      %66 = vsyncadd [#allocation11], 0
      %s68 = sshll.u32 %s6, 4
      %s69 = int_to_ptr.hbm [resolvable:$true] %s68
      %s70 = sshll.u32 [#allocation10], 4
      %s71 = int_to_ptr.vmem [resolvable:$true] %s70
      %73 = dma.hbm_to_vmem [thread:$0]  %s69, 128, %s71, [#allocation11]
    $region29: #{tpu_custom_call.1} parent=1 // pred_fallthru
      _
    // Predicated region
    $region30: #{tpu_custom_call.1} parent=1 // pred_check
      _
    $region31: #{tpu_custom_call.1} parent=1 // pred_check_branch
      %75 = sbr.rel (0) target = $region33
    $region32: #{tpu_custom_call.1} parent=1 // pred_region
      %77 = dma.done [#allocation5], 1024
    $region33: #{tpu_custom_call.1} parent=1 // pred_fallthru
      _
    // Predicated region
    $region34: #{tpu_custom_call.1} parent=1 // pred_check
      _
    $region35: #{tpu_custom_call.1} parent=1 // pred_check_branch
      %79 = sbr.rel (0) target = $region37
    $region36: #{tpu_custom_call.1} parent=1 // pred_region
      %81 = dma.done [#allocation8], 8192
    $region37: #{tpu_custom_call.1} parent=1 // pred_fallthru
      _
    // Predicated region
    $region38: #{tpu_custom_call.1} parent=1 // pred_check
      _
    $region39: #{tpu_custom_call.1} parent=1 // pred_check_branch
      %83 = sbr.rel (0) target = $region41
    $region40: #{tpu_custom_call.1} parent=1 // pred_region
      %85 = dma.done [#allocation8], 64
    $region41: #{tpu_custom_call.1} parent=1 // pred_fallthru
      _
    // Predicated region
    $region42: #{tpu_custom_call.1} parent=1 // pred_check
      _
    $region43: #{tpu_custom_call.1} parent=1 // pred_check_branch
      %87 = sbr.rel (0) target = $region45
    $region44: #{tpu_custom_call.1} parent=1 // pred_region
      %89 = dma.done [#allocation11], 128
    $region45: #{tpu_custom_call.1} parent=1 // pred_fallthru
      _
    %p90 = scmp.eq.s32.totalorder 0, 0
    // Predicated region
    $region46: #{tpu_custom_call.1} parent=1 // pred_check
      %p91 = pneg %p90
    $region47: #{tpu_custom_call.1} parent=1 // pred_check_branch
      %93 = sbr.rel (%p91) target = $region49
    $region48: #{tpu_custom_call.1} parent=1 // pred_region
      %v94 = vld [vmem:[%s5] sm:$0xff]
      %95 = vst [vmem:[#allocation2] sm:$0xff] %v94
      %v96 = vld [vmem:[#allocation10] sm:$0xff]
      %97 = vst [vmem:[#allocation3] sm:$0xff] %v96
    $region49: #{tpu_custom_call.1} parent=1 // pred_fallthru
      _
    %v98 = vld [vmem:[%s5] sm:$0xff]
    %v99 = vld [vmem:[#allocation10] sm:$0xff]
    %v100 = vld [vmem:[#allocation4] sm:$0xff]
    %v101 = vld [vmem:[#allocation4 + $0x8] sm:$0xff]
    %v102 = vld [vmem:[#allocation4 + $0x10] sm:$0xff]
    %v103 = vld [vmem:[#allocation4 + $0x18] sm:$0xff]
    %v104 = vld [vmem:[#allocation4 + $0x20] sm:$0xff]
    %v105 = vld [vmem:[#allocation4 + $0x28] sm:$0xff]
    %v106 = vld [vmem:[#allocation4 + $0x30] sm:$0xff]
    %v107 = vld [vmem:[#allocation4 + $0x38] sm:$0xff]
    %v108 = vld [vmem:[#allocation7] sm:$0xff]
    %v109 = vld [vmem:[#allocation7 + $0x8] sm:$0xff]
    %v110 = vld [vmem:[#allocation7 + $0x10] sm:$0xff]
    %v111 = vld [vmem:[#allocation7 + $0x18] sm:$0xff]
    %v112 = vld [vmem:[#allocation7 + $0x20] sm:$0xff]
    %v113 = vld [vmem:[#allocation7 + $0x28] sm:$0xff]
    %v114 = vld [vmem:[#allocation7 + $0x30] sm:$0xff]
    %v115 = vld [vmem:[#allocation7 + $0x38] sm:$0xff]
    %v116 = vld [vmem:[#allocation7 + $0x40] sm:$0xff]
    %v117 = vld [vmem:[#allocation7 + $0x48] sm:$0xff]
    %v118 = vld [vmem:[#allocation7 + $0x50] sm:$0xff]
    %v119 = vld [vmem:[#allocation7 + $0x58] sm:$0xff]
    %v120 = vld [vmem:[#allocation7 + $0x60] sm:$0xff]
    %v121 = vld [vmem:[#allocation7 + $0x68] sm:$0xff]
    %v122 = vld [vmem:[#allocation7 + $0x70] sm:$0xff]
    %v123 = vld [vmem:[#allocation7 + $0x78] sm:$0xff]
    %v124 = vld [vmem:[#allocation7 + $0x80] sm:$0xff]
    %v125 = vld [vmem:[#allocation7 + $0x88] sm:$0xff]
    %v126 = vld [vmem:[#allocation7 + $0x90] sm:$0xff]
    %v127 = vld [vmem:[#allocation7 + $0x98] sm:$0xff]
    %v128 = vld [vmem:[#allocation7 + $0xa0] sm:$0xff]
    %v129 = vld [vmem:[#allocation7 + $0xa8] sm:$0xff]
    %v130 = vld [vmem:[#allocation7 + $0xb0] sm:$0xff]
    %v131 = vld [vmem:[#allocation7 + $0xb8] sm:$0xff]
    %v132 = vld [vmem:[#allocation7 + $0xc0] sm:$0xff]
    %v133 = vld [vmem:[#allocation7 + $0xc8] sm:$0xff]
    %v134 = vld [vmem:[#allocation7 + $0xd0] sm:$0xff]
    %v135 = vld [vmem:[#allocation7 + $0xd8] sm:$0xff]
    %v136 = vld [vmem:[#allocation7 + $0xe0] sm:$0xff]
    %v137 = vld [vmem:[#allocation7 + $0xe8] sm:$0xff]
    %v138 = vld [vmem:[#allocation7 + $0xf0] sm:$0xff]
    %v139 = vld [vmem:[#allocation7 + $0xf8] sm:$0xff]
    %v140 = vld [vmem:[#allocation7 + $0x100] sm:$0xff]
    %v141 = vld [vmem:[#allocation7 + $0x108] sm:$0xff]
    %v142 = vld [vmem:[#allocation7 + $0x110] sm:$0xff]
    %v143 = vld [vmem:[#allocation7 + $0x118] sm:$0xff]
    %v144 = vld [vmem:[#allocation7 + $0x120] sm:$0xff]
    %v145 = vld [vmem:[#allocation7 + $0x128] sm:$0xff]
    %v146 = vld [vmem:[#allocation7 + $0x130] sm:$0xff]
    %v147 = vld [vmem:[#allocation7 + $0x138] sm:$0xff]
    %v148 = vld [vmem:[#allocation7 + $0x140] sm:$0xff]
    %v149 = vld [vmem:[#allocation7 + $0x148] sm:$0xff]
    %v150 = vld [vmem:[#allocation7 + $0x150] sm:$0xff]
    %v151 = vld [vmem:[#allocation7 + $0x158] sm:$0xff]
    %v152 = vld [vmem:[#allocation7 + $0x160] sm:$0xff]
    %v153 = vld [vmem:[#allocation7 + $0x168] sm:$0xff]
    %v154 = vld [vmem:[#allocation7 + $0x170] sm:$0xff]
    %v155 = vld [vmem:[#allocation7 + $0x178] sm:$0xff]
    %v156 = vld [vmem:[#allocation7 + $0x180] sm:$0xff]
    %v157 = vld [vmem:[#allocation7 + $0x188] sm:$0xff]
    %v158 = vld [vmem:[#allocation7 + $0x190] sm:$0xff]
    %v159 = vld [vmem:[#allocation7 + $0x198] sm:$0xff]
    %v160 = vld [vmem:[#allocation7 + $0x1a0] sm:$0xff]
    %v161 = vld [vmem:[#allocation7 + $0x1a8] sm:$0xff]
    %v162 = vld [vmem:[#allocation7 + $0x1b0] sm:$0xff]
    %v163 = vld [vmem:[#allocation7 + $0x1b8] sm:$0xff]
    %v164 = vld [vmem:[#allocation7 + $0x1c0] sm:$0xff]
    %v165 = vld [vmem:[#allocation7 + $0x1c8] sm:$0xff]
    %v166 = vld [vmem:[#allocation7 + $0x1d0] sm:$0xff]
    %v167 = vld [vmem:[#allocation7 + $0x1d8] sm:$0xff]
    %v168 = vld [vmem:[#allocation7 + $0x1e0] sm:$0xff]
    %v169 = vld [vmem:[#allocation7 + $0x1e8] sm:$0xff]
    %v170 = vld [vmem:[#allocation7 + $0x1f0] sm:$0xff]
    %v171 = vld [vmem:[#allocation7 + $0x1f8] sm:$0xff]
    %v172 = vld [vmem:[#allocation9] sm:$0xf]
    %v173 = vld [vmem:[#allocation2] sm:$0xff]
    %v174 = vld [vmem:[#allocation3] sm:$0xff]
    %v175 = vld [vmem:[%s0] sm:$0xff]
    %v176 = vld [vmem:[%s1] sm:$0xff]
    %vm177 = vcmask 130048
    %v179 = vsel %vm177, %v175, 0
    %181 = vmatpush.msra.mxu0 0.0
    %182 = vmatpush.msra.mxu0 0.0
    %183 = vmatpush.msra.mxu0 0.0
    %184 = vmatpush.msra.mxu0 0.0
    %185 = vmatpush.msra.mxu0 0.0
    %186 = vmatpush.msra.mxu0 0.0
    %187 = vmatpush.msra.mxu0 0.0
    %188 = vmatpush.msra.mxu0 0.0
    %189 = vmatpush.msra.mxu0 0.0
    %190 = vmatpush.msra.mxu0 0.0
    %191 = vmatpush.msra.mxu0 0.0
    %192 = vmatpush.msra.mxu0 0.0
    %193 = vmatpush.msra.mxu0 0.0
    %194 = vmatpush.msra.mxu0 0.0
    %195 = vmatpush.msra.mxu0 %v104
    %196 = vmatpush.msra.mxu0 %v100
    %197 = vmatmul.f32.gmra.mxu0 %v179
    %v198 = vpop.f32.mrf.mxu0
    %v199 = vadd.f32 0.0, %v198
    %200 = vdwg.mxu0
    %201 = vmatpush.msra.mxu0 0.0
    %202 = vmatpush.msra.mxu0 0.0
    %203 = vmatpush.msra.mxu0 0.0
    %204 = vmatpush.msra.mxu0 0.0
    %205 = vmatpush.msra.mxu0 0.0
    %206 = vmatpush.msra.mxu0 0.0
    %207 = vmatpush.msra.mxu0 0.0
    %208 = vmatpush.msra.mxu0 0.0
    %209 = vmatpush.msra.mxu0 0.0
    %210 = vmatpush.msra.mxu0 0.0
    %211 = vmatpush.msra.mxu0 0.0
    %212 = vmatpush.msra.mxu0 0.0
    %213 = vmatpush.msra.mxu0 0.0
    %214 = vmatpush.msra.mxu0 0.0
    %215 = vmatpush.msra.mxu0 %v105
    %216 = vmatpush.msra.mxu0 %v101
    %217 = vmatmul.f32.gmra.mxu0 %v179
    %v218 = vpop.f32.mrf.mxu0
    %v219 = vadd.f32 0.0, %v218
    %220 = vdwg.mxu0
    %221 = vmatpush.msra.mxu0 0.0
    %222 = vmatpush.msra.mxu0 0.0
    %223 = vmatpush.msra.mxu0 0.0
    %224 = vmatpush.msra.mxu0 0.0
    %225 = vmatpush.msra.mxu0 0.0
    %226 = vmatpush.msra.mxu0 0.0
    %227 = vmatpush.msra.mxu0 0.0
    %228 = vmatpush.msra.mxu0 0.0
    %229 = vmatpush.msra.mxu0 0.0
    %230 = vmatpush.msra.mxu0 0.0
    %231 = vmatpush.msra.mxu0 0.0
    %232 = vmatpush.msra.mxu0 0.0
    %233 = vmatpush.msra.mxu0 0.0
    %234 = vmatpush.msra.mxu0 0.0
    %235 = vmatpush.msra.mxu0 %v106
    %236 = vmatpush.msra.mxu0 %v102
    %237 = vmatmul.f32.gmra.mxu0 %v179
    %v238 = vpop.f32.mrf.mxu0
    %v239 = vadd.f32 0.0, %v238
    %240 = vdwg.mxu0
    %241 = vmatpush.msra.mxu0 0.0
    %242 = vmatpush.msra.mxu0 0.0
    %243 = vmatpush.msra.mxu0 0.0
    %244 = vmatpush.msra.mxu0 0.0
    %245 = vmatpush.msra.mxu0 0.0
    %246 = vmatpush.msra.mxu0 0.0
    %247 = vmatpush.msra.mxu0 0.0
    %248 = vmatpush.msra.mxu0 0.0
    %249 = vmatpush.msra.mxu0 0.0
    %250 = vmatpush.msra.mxu0 0.0
    %251 = vmatpush.msra.mxu0 0.0
    %252 = vmatpush.msra.mxu0 0.0
    %253 = vmatpush.msra.mxu0 0.0
    %254 = vmatpush.msra.mxu0 0.0
    %255 = vmatpush.msra.mxu0 %v107
    %256 = vmatpush.msra.mxu0 %v103
    %257 = vmatmul.f32.gmra.mxu0 %v179
    %v258 = vpop.f32.mrf.mxu0
    %v259 = vadd.f32 0.0, %v258
    %260 = vdwg.mxu0
    %v262 = vperm.slane %v172, 0
    %v263 = vperm.slane %v172, 1
    %v264 = vperm.slane %v172, 2
    %v265 = vperm.slane %v172, 3
    %v270 = vadd.f32 %v262, %v199
    %v271 = vadd.f32 %v263, %v219
    %v272 = vadd.f32 %v264, %v239
    %v273 = vadd.f32 %v265, %v259
    %274 = vmatpush.msra.mxu0 %v168
    %275 = vmatpush.msra.mxu0 %v164
    %276 = vmatpush.msra.mxu0 %v160
    %277 = vmatpush.msra.mxu0 %v156
    %278 = vmatpush.msra.mxu0 %v152
    %279 = vmatpush.msra.mxu0 %v148
    %280 = vmatpush.msra.mxu0 %v144
    %281 = vmatpush.msra.mxu0 %v140
    %282 = vmatpush.msra.mxu0 %v136
    %283 = vmatpush.msra.mxu0 %v132
    %284 = vmatpush.msra.mxu0 %v128
    %285 = vmatpush.msra.mxu0 %v124
    %286 = vmatpush.msra.mxu0 %v120
    %287 = vmatpush.msra.mxu0 %v116
    %288 = vmatpush.msra.mxu0 %v112
    %289 = vmatpush.msra.mxu0 %v108
    %290 = vmatmul.f32.gmra.mxu0 %v173
    %v291 = vpop.f32.mrf.mxu0
    %v292 = vadd.f32 0.0, %v291
    %293 = vdwg.mxu0
    %294 = vmatpush.msra.mxu0 %v169
    %295 = vmatpush.msra.mxu0 %v165
    %296 = vmatpush.msra.mxu0 %v161
    %297 = vmatpush.msra.mxu0 %v157
    %298 = vmatpush.msra.mxu0 %v153
    %299 = vmatpush.msra.mxu0 %v149
    %300 = vmatpush.msra.mxu0 %v145
    %301 = vmatpush.msra.mxu0 %v141
    %302 = vmatpush.msra.mxu0 %v137
    %303 = vmatpush.msra.mxu0 %v133
    %304 = vmatpush.msra.mxu0 %v129
    %305 = vmatpush.msra.mxu0 %v125
    %306 = vmatpush.msra.mxu0 %v121
    %307 = vmatpush.msra.mxu0 %v117
    %308 = vmatpush.msra.mxu0 %v113
    %309 = vmatpush.msra.mxu0 %v109
    %310 = vmatmul.f32.gmra.mxu0 %v173
    %v311 = vpop.f32.mrf.mxu0
    %v312 = vadd.f32 0.0, %v311
    %313 = vdwg.mxu0
    %314 = vmatpush.msra.mxu0 %v170
    %315 = vmatpush.msra.mxu0 %v166
    %316 = vmatpush.msra.mxu0 %v162
    %317 = vmatpush.msra.mxu0 %v158
    %318 = vmatpush.msra.mxu0 %v154
    %319 = vmatpush.msra.mxu0 %v150
    %320 = vmatpush.msra.mxu0 %v146
    %321 = vmatpush.msra.mxu0 %v142
    %322 = vmatpush.msra.mxu0 %v138
    %323 = vmatpush.msra.mxu0 %v134
    %324 = vmatpush.msra.mxu0 %v130
    %325 = vmatpush.msra.mxu0 %v126
    %326 = vmatpush.msra.mxu0 %v122
    %327 = vmatpush.msra.mxu0 %v118
    %328 = vmatpush.msra.mxu0 %v114
    %329 = vmatpush.msra.mxu0 %v110
    %330 = vmatmul.f32.gmra.mxu0 %v173
    %v331 = vpop.f32.mrf.mxu0
    %v332 = vadd.f32 0.0, %v331
    %333 = vdwg.mxu0
    %334 = vmatpush.msra.mxu0 %v171
    %335 = vmatpush.msra.mxu0 %v167
    %336 = vmatpush.msra.mxu0 %v163
    %337 = vmatpush.msra.mxu0 %v159
    %338 = vmatpush.msra.mxu0 %v155
    %339 = vmatpush.msra.mxu0 %v151
    %340 = vmatpush.msra.mxu0 %v147
    %341 = vmatpush.msra.mxu0 %v143
    %342 = vmatpush.msra.mxu0 %v139
    %343 = vmatpush.msra.mxu0 %v135
    %344 = vmatpush.msra.mxu0 %v131
    %345 = vmatpush.msra.mxu0 %v127
    %346 = vmatpush.msra.mxu0 %v123
    %347 = vmatpush.msra.mxu0 %v119
    %348 = vmatpush.msra.mxu0 %v115
    %349 = vmatpush.msra.mxu0 %v111
    %350 = vmatmul.f32.gmra.mxu0 %v173
    %v351 = vpop.f32.mrf.mxu0
    %v352 = vadd.f32 0.0, %v351
    %353 = vdwg.mxu0
    %v354 = vadd.f32 %v270, %v292
    %v355 = vadd.f32 %v271, %v312
    %v356 = vadd.f32 %v272, %v332
    %v357 = vadd.f32 %v273, %v352
    %v358 = vmul.f32 %v354, 0.5
    %v359 = vtanh.pop %v358
    %v360 = vmul.f32 %v359, 0.5
    %v361 = vadd.f32 %v360, 0.5
    %v362 = vmul.f32 %v355, 0.5
    %v363 = vtanh.pop %v362
    %v364 = vmul.f32 %v363, 0.5
    %v365 = vadd.f32 %v364, 0.5
    %v366 = vtanh.pop %v356
    %v367 = vmul.f32 %v357, 0.5
    %v368 = vtanh.pop %v367
    %v369 = vmul.f32 %v368, 0.5
    %v370 = vadd.f32 %v369, 0.5
    %v371 = vmul.f32 %v365, %v174
    %v372 = vmul.f32 %v361, %v366
    %v373 = vadd.f32 %v371, %v372
    %v374 = vtanh.pop %v373
    %v375 = vmul.f32 %v370, %v374
    %v376 = vsub.f32 %v375, %v98
    %378 = vset.pattern.permute.xlu0 0
    %379 = vperm.xlu0 %378, %v176
    %v380 = vpop.permute.xlu0 %379
    %v382 = vmul.f32 %v380, %v376
    %v383 = vadd.f32 %v98, %v382
    %v384 = vsub.f32 %v373, %v99
    %v385 = vmul.f32 %v380, %v384
    %v386 = vadd.f32 %v99, %v385
    %387 = vst [vmem:[#allocation12] sm:$0xff] %v383
    %s388 = scalar_lea.vmem %s0, 8
    %v389 = vld [vmem:[%s388] sm:$0xff]
    %s390 = scalar_lea.vmem %s1, 8
    %v391 = vld [vmem:[%s390] sm:$0xff]
    %v393 = vsel %vm177, %v389, 0
    %395 = vmatpush.msra.mxu0 0.0
    %396 = vmatpush.msra.mxu0 0.0
    %397 = vmatpush.msra.mxu0 0.0
    %398 = vmatpush.msra.mxu0 0.0
    %399 = vmatpush.msra.mxu0 0.0
    %400 = vmatpush.msra.mxu0 0.0
    %401 = vmatpush.msra.mxu0 0.0
    %402 = vmatpush.msra.mxu0 0.0
    %403 = vmatpush.msra.mxu0 0.0
    %404 = vmatpush.msra.mxu0 0.0
    %405 = vmatpush.msra.mxu0 0.0
    %406 = vmatpush.msra.mxu0 0.0
    %407 = vmatpush.msra.mxu0 0.0
    %408 = vmatpush.msra.mxu0 0.0
    %409 = vmatpush.msra.mxu0 %v104
    %410 = vmatpush.msra.mxu0 %v100
    %411 = vmatmul.f32.gmra.mxu0 %v393
    %v412 = vpop.f32.mrf.mxu0
    %v413 = vadd.f32 0.0, %v412
    %414 = vdwg.mxu0
    %415 = vmatpush.msra.mxu0 0.0
    %416 = vmatpush.msra.mxu0 0.0
    %417 = vmatpush.msra.mxu0 0.0
    %418 = vmatpush.msra.mxu0 0.0
    %419 = vmatpush.msra.mxu0 0.0
    %420 = vmatpush.msra.mxu0 0.0
    %421 = vmatpush.msra.mxu0 0.0
    %422 = vmatpush.msra.mxu0 0.0
    %423 = vmatpush.msra.mxu0 0.0
    %424 = vmatpush.msra.mxu0 0.0
    %425 = vmatpush.msra.mxu0 0.0
    %426 = vmatpush.msra.mxu0 0.0
    %427 = vmatpush.msra.mxu0 0.0
    %428 = vmatpush.msra.mxu0 0.0
    %429 = vmatpush.msra.mxu0 %v105
    %430 = vmatpush.msra.mxu0 %v101
    %431 = vmatmul.f32.gmra.mxu0 %v393
    %v432 = vpop.f32.mrf.mxu0
    %v433 = vadd.f32 0.0, %v432
    %434 = vdwg.mxu0
    %435 = vmatpush.msra.mxu0 0.0
    %436 = vmatpush.msra.mxu0 0.0
    %437 = vmatpush.msra.mxu0 0.0
    %438 = vmatpush.msra.mxu0 0.0
    %439 = vmatpush.msra.mxu0 0.0
    %440 = vmatpush.msra.mxu0 0.0
    %441 = vmatpush.msra.mxu0 0.0
    %442 = vmatpush.msra.mxu0 0.0
    %443 = vmatpush.msra.mxu0 0.0
    %444 = vmatpush.msra.mxu0 0.0
    %445 = vmatpush.msra.mxu0 0.0
    %446 = vmatpush.msra.mxu0 0.0
    %447 = vmatpush.msra.mxu0 0.0
    %448 = vmatpush.msra.mxu0 0.0
    %449 = vmatpush.msra.mxu0 %v106
    %450 = vmatpush.msra.mxu0 %v102
    %451 = vmatmul.f32.gmra.mxu0 %v393
    %v452 = vpop.f32.mrf.mxu0
    %v453 = vadd.f32 0.0, %v452
    %454 = vdwg.mxu0
    %455 = vmatpush.msra.mxu0 0.0
    %456 = vmatpush.msra.mxu0 0.0
    %457 = vmatpush.msra.mxu0 0.0
    %458 = vmatpush.msra.mxu0 0.0
    %459 = vmatpush.msra.mxu0 0.0
    %460 = vmatpush.msra.mxu0 0.0
    %461 = vmatpush.msra.mxu0 0.0
    %462 = vmatpush.msra.mxu0 0.0
    %463 = vmatpush.msra.mxu0 0.0
    %464 = vmatpush.msra.mxu0 0.0
    %465 = vmatpush.msra.mxu0 0.0
    %466 = vmatpush.msra.mxu0 0.0
    %467 = vmatpush.msra.mxu0 0.0
    %468 = vmatpush.msra.mxu0 0.0
    %469 = vmatpush.msra.mxu0 %v107
    %470 = vmatpush.msra.mxu0 %v103
    %471 = vmatmul.f32.gmra.mxu0 %v393
    %v472 = vpop.f32.mrf.mxu0
    %v473 = vadd.f32 0.0, %v472
    %474 = vdwg.mxu0
    %v475 = vadd.f32 %v262, %v413
    %v476 = vadd.f32 %v263, %v433
    %v477 = vadd.f32 %v264, %v453
    %v478 = vadd.f32 %v265, %v473
    %479 = vmatpush.msra.mxu0 %v168
    %480 = vmatpush.msra.mxu0 %v164
    %481 = vmatpush.msra.mxu0 %v160
    %482 = vmatpush.msra.mxu0 %v156
    %483 = vmatpush.msra.mxu0 %v152
    %484 = vmatpush.msra.mxu0 %v148
    %485 = vmatpush.msra.mxu0 %v144
    %486 = vmatpush.msra.mxu0 %v140
    %487 = vmatpush.msra.mxu0 %v136
    %488 = vmatpush.msra.mxu0 %v132
    %489 = vmatpush.msra.mxu0 %v128
    %490 = vmatpush.msra.mxu0 %v124
    %491 = vmatpush.msra.mxu0 %v120
    %492 = vmatpush.msra.mxu0 %v116
    %493 = vmatpush.msra.mxu0 %v112
    %494 = vmatpush.msra.mxu0 %v108
    %495 = vmatmul.f32.gmra.mxu0 %v383
    %v496 = vpop.f32.mrf.mxu0
    %v497 = vadd.f32 0.0, %v496
    %498 = vdwg.mxu0
    %499 = vmatpush.msra.mxu0 %v169
    %500 = vmatpush.msra.mxu0 %v165
    %501 = vmatpush.msra.mxu0 %v161
    %502 = vmatpush.msra.mxu0 %v157
    %503 = vmatpush.msra.mxu0 %v153
    %504 = vmatpush.msra.mxu0 %v149
    %505 = vmatpush.msra.mxu0 %v145
    %506 = vmatpush.msra.mxu0 %v141
    %507 = vmatpush.msra.mxu0 %v137
    %508 = vmatpush.msra.mxu0 %v133
    %509 = vmatpush.msra.mxu0 %v129
    %510 = vmatpush.msra.mxu0 %v125
    %511 = vmatpush.msra.mxu0 %v121
    %512 = vmatpush.msra.mxu0 %v117
    %513 = vmatpush.msra.mxu0 %v113
    %514 = vmatpush.msra.mxu0 %v109
    %515 = vmatmul.f32.gmra.mxu0 %v383
    %v516 = vpop.f32.mrf.mxu0
    %v517 = vadd.f32 0.0, %v516
    %518 = vdwg.mxu0
    %519 = vmatpush.msra.mxu0 %v170
    %520 = vmatpush.msra.mxu0 %v166
    %521 = vmatpush.msra.mxu0 %v162
    %522 = vmatpush.msra.mxu0 %v158
    %523 = vmatpush.msra.mxu0 %v154
    %524 = vmatpush.msra.mxu0 %v150
    %525 = vmatpush.msra.mxu0 %v146
    %526 = vmatpush.msra.mxu0 %v142
    %527 = vmatpush.msra.mxu0 %v138
    %528 = vmatpush.msra.mxu0 %v134
    %529 = vmatpush.msra.mxu0 %v130
    %530 = vmatpush.msra.mxu0 %v126
    %531 = vmatpush.msra.mxu0 %v122
    %532 = vmatpush.msra.mxu0 %v118
    %533 = vmatpush.msra.mxu0 %v114
    %534 = vmatpush.msra.mxu0 %v110
    %535 = vmatmul.f32.gmra.mxu0 %v383
    %v536 = vpop.f32.mrf.mxu0
    %v537 = vadd.f32 0.0, %v536
    %538 = vdwg.mxu0
    %539 = vmatpush.msra.mxu0 %v171
    %540 = vmatpush.msra.mxu0 %v167
    %541 = vmatpush.msra.mxu0 %v163
    %542 = vmatpush.msra.mxu0 %v159
    %543 = vmatpush.msra.mxu0 %v155
    %544 = vmatpush.msra.mxu0 %v151
    %545 = vmatpush.msra.mxu0 %v147
    %546 = vmatpush.msra.mxu0 %v143
    %547 = vmatpush.msra.mxu0 %v139
    %548 = vmatpush.msra.mxu0 %v135
    %549 = vmatpush.msra.mxu0 %v131
    %550 = vmatpush.msra.mxu0 %v127
    %551 = vmatpush.msra.mxu0 %v123
    %552 = vmatpush.msra.mxu0 %v119
    %553 = vmatpush.msra.mxu0 %v115
    %554 = vmatpush.msra.mxu0 %v111
    %555 = vmatmul.f32.gmra.mxu0 %v383
    %v556 = vpop.f32.mrf.mxu0
    %v557 = vadd.f32 0.0, %v556
    %558 = vdwg.mxu0
    %v559 = vadd.f32 %v475, %v497
    %v560 = vadd.f32 %v476, %v517
    %v561 = vadd.f32 %v477, %v537
    %v562 = vadd.f32 %v478, %v557
    %v563 = vmul.f32 %v559, 0.5
    %v564 = vtanh.pop %v563
    %v565 = vmul.f32 %v564, 0.5
    %v566 = vadd.f32 %v565, 0.5
    %v567 = vmul.f32 %v560, 0.5
    %v568 = vtanh.pop %v567
    %v569 = vmul.f32 %v568, 0.5
    %v570 = vadd.f32 %v569, 0.5
    %v571 = vtanh.pop %v561
    %v572 = vmul.f32 %v562, 0.5
    %v573 = vtanh.pop %v572
    %v574 = vmul.f32 %v573, 0.5
    %v575 = vadd.f32 %v574, 0.5
    %v576 = vmul.f32 %v570, %v386
    %v577 = vmul.f32 %v566, %v571
    %v578 = vadd.f32 %v576, %v577
    %v579 = vtanh.pop %v578
    %v580 = vmul.f32 %v575, %v579
    %v581 = vsub.f32 %v580, %v98
    %583 = vset.pattern.permute.xlu0 0
    %584 = vperm.xlu0 %583, %v391
    %v585 = vpop.permute.xlu0 %584
    %v587 = vmul.f32 %v585, %v581
    %v588 = vadd.f32 %v98, %v587
    %v589 = vsub.f32 %v578, %v99
    %v590 = vmul.f32 %v585, %v589
    %v591 = vadd.f32 %v99, %v590
    %s592 = scalar_lea.vmem [#allocation12], 8
    %593 = vst [vmem:[%s592] sm:$0xff] %v588
    %s594 = scalar_lea.vmem %s0, 16
    %v595 = vld [vmem:[%s594] sm:$0xff]
    %s596 = scalar_lea.vmem %s1, 16
    %v597 = vld [vmem:[%s596] sm:$0xff]
    %v599 = vsel %vm177, %v595, 0
    %601 = vmatpush.msra.mxu0 0.0
    %602 = vmatpush.msra.mxu0 0.0
    %603 = vmatpush.msra.mxu0 0.0
    %604 = vmatpush.msra.mxu0 0.0
    %605 = vmatpush.msra.mxu0 0.0
    %606 = vmatpush.msra.mxu0 0.0
    %607 = vmatpush.msra.mxu0 0.0
    %608 = vmatpush.msra.mxu0 0.0
    %609 = vmatpush.msra.mxu0 0.0
    %610 = vmatpush.msra.mxu0 0.0
    %611 = vmatpush.msra.mxu0 0.0
    %612 = vmatpush.msra.mxu0 0.0
    %613 = vmatpush.msra.mxu0 0.0
    %614 = vmatpush.msra.mxu0 0.0
    %615 = vmatpush.msra.mxu0 %v104
    %616 = vmatpush.msra.mxu0 %v100
    %617 = vmatmul.f32.gmra.mxu0 %v599
    %v618 = vpop.f32.mrf.mxu0
    %v619 = vadd.f32 0.0, %v618
    %620 = vdwg.mxu0
    %621 = vmatpush.msra.mxu0 0.0
    %622 = vmatpush.msra.mxu0 0.0
    %623 = vmatpush.msra.mxu0 0.0
    %624 = vmatpush.msra.mxu0 0.0
    %625 = vmatpush.msra.mxu0 0.0
    %626 = vmatpush.msra.mxu0 0.0
    %627 = vmatpush.msra.mxu0 0.0
    %628 = vmatpush.msra.mxu0 0.0
    %629 = vmatpush.msra.mxu0 0.0
    %630 = vmatpush.msra.mxu0 0.0
    %631 = vmatpush.msra.mxu0 0.0
    %632 = vmatpush.msra.mxu0 0.0
    %633 = vmatpush.msra.mxu0 0.0
    %634 = vmatpush.msra.mxu0 0.0
    %635 = vmatpush.msra.mxu0 %v105
    %636 = vmatpush.msra.mxu0 %v101
    %637 = vmatmul.f32.gmra.mxu0 %v599
    %v638 = vpop.f32.mrf.mxu0
    %v639 = vadd.f32 0.0, %v638
    %640 = vdwg.mxu0
    %641 = vmatpush.msra.mxu0 0.0
    %642 = vmatpush.msra.mxu0 0.0
    %643 = vmatpush.msra.mxu0 0.0
    %644 = vmatpush.msra.mxu0 0.0
    %645 = vmatpush.msra.mxu0 0.0
    %646 = vmatpush.msra.mxu0 0.0
    %647 = vmatpush.msra.mxu0 0.0
    %648 = vmatpush.msra.mxu0 0.0
    %649 = vmatpush.msra.mxu0 0.0
    %650 = vmatpush.msra.mxu0 0.0
    %651 = vmatpush.msra.mxu0 0.0
    %652 = vmatpush.msra.mxu0 0.0
    %653 = vmatpush.msra.mxu0 0.0
    %654 = vmatpush.msra.mxu0 0.0
    %655 = vmatpush.msra.mxu0 %v106
    %656 = vmatpush.msra.mxu0 %v102
    %657 = vmatmul.f32.gmra.mxu0 %v599
    %v658 = vpop.f32.mrf.mxu0
    %v659 = vadd.f32 0.0, %v658
    %660 = vdwg.mxu0
    %661 = vmatpush.msra.mxu0 0.0
    %662 = vmatpush.msra.mxu0 0.0
    %663 = vmatpush.msra.mxu0 0.0
    %664 = vmatpush.msra.mxu0 0.0
    %665 = vmatpush.msra.mxu0 0.0
    %666 = vmatpush.msra.mxu0 0.0
    %667 = vmatpush.msra.mxu0 0.0
    %668 = vmatpush.msra.mxu0 0.0
    %669 = vmatpush.msra.mxu0 0.0
    %670 = vmatpush.msra.mxu0 0.0
    %671 = vmatpush.msra.mxu0 0.0
    %672 = vmatpush.msra.mxu0 0.0
    %673 = vmatpush.msra.mxu0 0.0
    %674 = vmatpush.msra.mxu0 0.0
    %675 = vmatpush.msra.mxu0 %v107
    %676 = vmatpush.msra.mxu0 %v103
    %677 = vmatmul.f32.gmra.mxu0 %v599
    %v678 = vpop.f32.mrf.mxu0
    %v679 = vadd.f32 0.0, %v678
    %680 = vdwg.mxu0
    %v681 = vadd.f32 %v262, %v619
    %v682 = vadd.f32 %v263, %v639
    %v683 = vadd.f32 %v264, %v659
    %v684 = vadd.f32 %v265, %v679
    %685 = vmatpush.msra.mxu0 %v168
    %686 = vmatpush.msra.mxu0 %v164
    %687 = vmatpush.msra.mxu0 %v160
    %688 = vmatpush.msra.mxu0 %v156
    %689 = vmatpush.msra.mxu0 %v152
    %690 = vmatpush.msra.mxu0 %v148
    %691 = vmatpush.msra.mxu0 %v144
    %692 = vmatpush.msra.mxu0 %v140
    %693 = vmatpush.msra.mxu0 %v136
    %694 = vmatpush.msra.mxu0 %v132
    %695 = vmatpush.msra.mxu0 %v128
    %696 = vmatpush.msra.mxu0 %v124
    %697 = vmatpush.msra.mxu0 %v120
    %698 = vmatpush.msra.mxu0 %v116
    %699 = vmatpush.msra.mxu0 %v112
    %700 = vmatpush.msra.mxu0 %v108
    %701 = vmatmul.f32.gmra.mxu0 %v588
    %v702 = vpop.f32.mrf.mxu0
    %v703 = vadd.f32 0.0, %v702
    %704 = vdwg.mxu0
    %705 = vmatpush.msra.mxu0 %v169
    %706 = vmatpush.msra.mxu0 %v165
    %707 = vmatpush.msra.mxu0 %v161
    %708 = vmatpush.msra.mxu0 %v157
    %709 = vmatpush.msra.mxu0 %v153
    %710 = vmatpush.msra.mxu0 %v149
    %711 = vmatpush.msra.mxu0 %v145
    %712 = vmatpush.msra.mxu0 %v141
    %713 = vmatpush.msra.mxu0 %v137
    %714 = vmatpush.msra.mxu0 %v133
    %715 = vmatpush.msra.mxu0 %v129
    %716 = vmatpush.msra.mxu0 %v125
    %717 = vmatpush.msra.mxu0 %v121
    %718 = vmatpush.msra.mxu0 %v117
    %719 = vmatpush.msra.mxu0 %v113
    %720 = vmatpush.msra.mxu0 %v109
    %721 = vmatmul.f32.gmra.mxu0 %v588
    %v722 = vpop.f32.mrf.mxu0
    %v723 = vadd.f32 0.0, %v722
    %724 = vdwg.mxu0
    %725 = vmatpush.msra.mxu0 %v170
    %726 = vmatpush.msra.mxu0 %v166
    %727 = vmatpush.msra.mxu0 %v162
    %728 = vmatpush.msra.mxu0 %v158
    %729 = vmatpush.msra.mxu0 %v154
    %730 = vmatpush.msra.mxu0 %v150
    %731 = vmatpush.msra.mxu0 %v146
    %732 = vmatpush.msra.mxu0 %v142
    %733 = vmatpush.msra.mxu0 %v138
    %734 = vmatpush.msra.mxu0 %v134
    %735 = vmatpush.msra.mxu0 %v130
    %736 = vmatpush.msra.mxu0 %v126
    %737 = vmatpush.msra.mxu0 %v122
    %738 = vmatpush.msra.mxu0 %v118
    %739 = vmatpush.msra.mxu0 %v114
    %740 = vmatpush.msra.mxu0 %v110
    %741 = vmatmul.f32.gmra.mxu0 %v588
    %v742 = vpop.f32.mrf.mxu0
    %v743 = vadd.f32 0.0, %v742
    %744 = vdwg.mxu0
    %745 = vmatpush.msra.mxu0 %v171
    %746 = vmatpush.msra.mxu0 %v167
    %747 = vmatpush.msra.mxu0 %v163
    %748 = vmatpush.msra.mxu0 %v159
    %749 = vmatpush.msra.mxu0 %v155
    %750 = vmatpush.msra.mxu0 %v151
    %751 = vmatpush.msra.mxu0 %v147
    %752 = vmatpush.msra.mxu0 %v143
    %753 = vmatpush.msra.mxu0 %v139
    %754 = vmatpush.msra.mxu0 %v135
    %755 = vmatpush.msra.mxu0 %v131
    %756 = vmatpush.msra.mxu0 %v127
    %757 = vmatpush.msra.mxu0 %v123
    %758 = vmatpush.msra.mxu0 %v119
    %759 = vmatpush.msra.mxu0 %v115
    %760 = vmatpush.msra.mxu0 %v111
    %761 = vmatmul.f32.gmra.mxu0 %v588
    %v762 = vpop.f32.mrf.mxu0
    %v763 = vadd.f32 0.0, %v762
    %764 = vdwg.mxu0
    %v765 = vadd.f32 %v681, %v703
    %v766 = vadd.f32 %v682, %v723
    %v767 = vadd.f32 %v683, %v743
    %v768 = vadd.f32 %v684, %v763
    %v769 = vmul.f32 %v765, 0.5
    %v770 = vtanh.pop %v769
    %v771 = vmul.f32 %v770, 0.5
    %v772 = vadd.f32 %v771, 0.5
    %v773 = vmul.f32 %v766, 0.5
    %v774 = vtanh.pop %v773
    %v775 = vmul.f32 %v774, 0.5
    %v776 = vadd.f32 %v775, 0.5
    %v777 = vtanh.pop %v767
    %v778 = vmul.f32 %v768, 0.5
    %v779 = vtanh.pop %v778
    %v780 = vmul.f32 %v779, 0.5
    %v781 = vadd.f32 %v780, 0.5
    %v782 = vmul.f32 %v776, %v591
    %v783 = vmul.f32 %v772, %v777
    %v784 = vadd.f32 %v782, %v783
    %v785 = vtanh.pop %v784
    %v786 = vmul.f32 %v781, %v785
    %v787 = vsub.f32 %v786, %v98
    %789 = vset.pattern.permute.xlu0 0
    %790 = vperm.xlu0 %789, %v597
    %v791 = vpop.permute.xlu0 %790
    %v793 = vmul.f32 %v791, %v787
    %v794 = vadd.f32 %v98, %v793
    %v795 = vsub.f32 %v784, %v99
    %v796 = vmul.f32 %v791, %v795
    %v797 = vadd.f32 %v99, %v796
    %s798 = scalar_lea.vmem [#allocation12], 16
    %799 = vst [vmem:[%s798] sm:$0xff] %v794
    %s800 = scalar_lea.vmem %s0, 24
    %v801 = vld [vmem:[%s800] sm:$0xff]
    %s802 = scalar_lea.vmem %s1, 24
    %v803 = vld [vmem:[%s802] sm:$0xff]
    %v805 = vsel %vm177, %v801, 0
    %807 = vmatpush.msra.mxu0 0.0
    %808 = vmatpush.msra.mxu0 0.0
    %809 = vmatpush.msra.mxu0 0.0
    %810 = vmatpush.msra.mxu0 0.0
    %811 = vmatpush.msra.mxu0 0.0
    %812 = vmatpush.msra.mxu0 0.0
    %813 = vmatpush.msra.mxu0 0.0
    %814 = vmatpush.msra.mxu0 0.0
    %815 = vmatpush.msra.mxu0 0.0
    %816 = vmatpush.msra.mxu0 0.0
    %817 = vmatpush.msra.mxu0 0.0
    %818 = vmatpush.msra.mxu0 0.0
    %819 = vmatpush.msra.mxu0 0.0
    %820 = vmatpush.msra.mxu0 0.0
    %821 = vmatpush.msra.mxu0 %v104
    %822 = vmatpush.msra.mxu0 %v100
    %823 = vmatmul.f32.gmra.mxu0 %v805
    %v824 = vpop.f32.mrf.mxu0
    %v825 = vadd.f32 0.0, %v824
    %826 = vdwg.mxu0
    %827 = vmatpush.msra.mxu0 0.0
    %828 = vmatpush.msra.mxu0 0.0
    %829 = vmatpush.msra.mxu0 0.0
    %830 = vmatpush.msra.mxu0 0.0
    %831 = vmatpush.msra.mxu0 0.0
    %832 = vmatpush.msra.mxu0 0.0
    %833 = vmatpush.msra.mxu0 0.0
    %834 = vmatpush.msra.mxu0 0.0
    %835 = vmatpush.msra.mxu0 0.0
    %836 = vmatpush.msra.mxu0 0.0
    %837 = vmatpush.msra.mxu0 0.0
    %838 = vmatpush.msra.mxu0 0.0
    %839 = vmatpush.msra.mxu0 0.0
    %840 = vmatpush.msra.mxu0 0.0
    %841 = vmatpush.msra.mxu0 %v105
    %842 = vmatpush.msra.mxu0 %v101
    %843 = vmatmul.f32.gmra.mxu0 %v805
    %v844 = vpop.f32.mrf.mxu0
    %v845 = vadd.f32 0.0, %v844
    %846 = vdwg.mxu0
    %847 = vmatpush.msra.mxu0 0.0
    %848 = vmatpush.msra.mxu0 0.0
    %849 = vmatpush.msra.mxu0 0.0
    %850 = vmatpush.msra.mxu0 0.0
    %851 = vmatpush.msra.mxu0 0.0
    %852 = vmatpush.msra.mxu0 0.0
    %853 = vmatpush.msra.mxu0 0.0
    %854 = vmatpush.msra.mxu0 0.0
    %855 = vmatpush.msra.mxu0 0.0
    %856 = vmatpush.msra.mxu0 0.0
    %857 = vmatpush.msra.mxu0 0.0
    %858 = vmatpush.msra.mxu0 0.0
    %859 = vmatpush.msra.mxu0 0.0
    %860 = vmatpush.msra.mxu0 0.0
    %861 = vmatpush.msra.mxu0 %v106
    %862 = vmatpush.msra.mxu0 %v102
    %863 = vmatmul.f32.gmra.mxu0 %v805
    %v864 = vpop.f32.mrf.mxu0
    %v865 = vadd.f32 0.0, %v864
    %866 = vdwg.mxu0
    %867 = vmatpush.msra.mxu0 0.0
    %868 = vmatpush.msra.mxu0 0.0
    %869 = vmatpush.msra.mxu0 0.0
    %870 = vmatpush.msra.mxu0 0.0
    %871 = vmatpush.msra.mxu0 0.0
    %872 = vmatpush.msra.mxu0 0.0
    %873 = vmatpush.msra.mxu0 0.0
    %874 = vmatpush.msra.mxu0 0.0
    %875 = vmatpush.msra.mxu0 0.0
    %876 = vmatpush.msra.mxu0 0.0
    %877 = vmatpush.msra.mxu0 0.0
    %878 = vmatpush.msra.mxu0 0.0
    %879 = vmatpush.msra.mxu0 0.0
    %880 = vmatpush.msra.mxu0 0.0
    %881 = vmatpush.msra.mxu0 %v107
    %882 = vmatpush.msra.mxu0 %v103
    %883 = vmatmul.f32.gmra.mxu0 %v805
    %v884 = vpop.f32.mrf.mxu0
    %v885 = vadd.f32 0.0, %v884
    %886 = vdwg.mxu0
    %v887 = vadd.f32 %v262, %v825
    %v888 = vadd.f32 %v263, %v845
    %v889 = vadd.f32 %v264, %v865
    %v890 = vadd.f32 %v265, %v885
    %891 = vmatpush.msra.mxu0 %v168
    %892 = vmatpush.msra.mxu0 %v164
    %893 = vmatpush.msra.mxu0 %v160
    %894 = vmatpush.msra.mxu0 %v156
    %895 = vmatpush.msra.mxu0 %v152
    %896 = vmatpush.msra.mxu0 %v148
    %897 = vmatpush.msra.mxu0 %v144
    %898 = vmatpush.msra.mxu0 %v140
    %899 = vmatpush.msra.mxu0 %v136
    %900 = vmatpush.msra.mxu0 %v132
    %901 = vmatpush.msra.mxu0 %v128
    %902 = vmatpush.msra.mxu0 %v124
    %903 = vmatpush.msra.mxu0 %v120
    %904 = vmatpush.msra.mxu0 %v116
    %905 = vmatpush.msra.mxu0 %v112
    %906 = vmatpush.msra.mxu0 %v108
    %907 = vmatmul.f32.gmra.mxu0 %v794
    %v908 = vpop.f32.mrf.mxu0
    %v909 = vadd.f32 0.0, %v908
    %910 = vdwg.mxu0
    %911 = vmatpush.msra.mxu0 %v169
    %912 = vmatpush.msra.mxu0 %v165
    %913 = vmatpush.msra.mxu0 %v161
    %914 = vmatpush.msra.mxu0 %v157
    %915 = vmatpush.msra.mxu0 %v153
    %916 = vmatpush.msra.mxu0 %v149
    %917 = vmatpush.msra.mxu0 %v145
    %918 = vmatpush.msra.mxu0 %v141
    %919 = vmatpush.msra.mxu0 %v137
    %920 = vmatpush.msra.mxu0 %v133
    %921 = vmatpush.msra.mxu0 %v129
    %922 = vmatpush.msra.mxu0 %v125
    %923 = vmatpush.msra.mxu0 %v121
    %924 = vmatpush.msra.mxu0 %v117
    %925 = vmatpush.msra.mxu0 %v113
    %926 = vmatpush.msra.mxu0 %v109
    %927 = vmatmul.f32.gmra.mxu0 %v794
    %v928 = vpop.f32.mrf.mxu0
    %v929 = vadd.f32 0.0, %v928
    %930 = vdwg.mxu0
    %931 = vmatpush.msra.mxu0 %v170
    %932 = vmatpush.msra.mxu0 %v166
    %933 = vmatpush.msra.mxu0 %v162
    %934 = vmatpush.msra.mxu0 %v158
    %935 = vmatpush.msra.mxu0 %v154
    %936 = vmatpush.msra.mxu0 %v150
    %937 = vmatpush.msra.mxu0 %v146
    %938 = vmatpush.msra.mxu0 %v142
    %939 = vmatpush.msra.mxu0 %v138
    %940 = vmatpush.msra.mxu0 %v134
    %941 = vmatpush.msra.mxu0 %v130
    %942 = vmatpush.msra.mxu0 %v126
    %943 = vmatpush.msra.mxu0 %v122
    %944 = vmatpush.msra.mxu0 %v118
    %945 = vmatpush.msra.mxu0 %v114
    %946 = vmatpush.msra.mxu0 %v110
    %947 = vmatmul.f32.gmra.mxu0 %v794
    %v948 = vpop.f32.mrf.mxu0
    %v949 = vadd.f32 0.0, %v948
    %950 = vdwg.mxu0
    %951 = vmatpush.msra.mxu0 %v171
    %952 = vmatpush.msra.mxu0 %v167
    %953 = vmatpush.msra.mxu0 %v163
    %954 = vmatpush.msra.mxu0 %v159
    %955 = vmatpush.msra.mxu0 %v155
    %956 = vmatpush.msra.mxu0 %v151
    %957 = vmatpush.msra.mxu0 %v147
    %958 = vmatpush.msra.mxu0 %v143
    %959 = vmatpush.msra.mxu0 %v139
    %960 = vmatpush.msra.mxu0 %v135
    %961 = vmatpush.msra.mxu0 %v131
    %962 = vmatpush.msra.mxu0 %v127
    %963 = vmatpush.msra.mxu0 %v123
    %964 = vmatpush.msra.mxu0 %v119
    %965 = vmatpush.msra.mxu0 %v115
    %966 = vmatpush.msra.mxu0 %v111
    %967 = vmatmul.f32.gmra.mxu0 %v794
    %v968 = vpop.f32.mrf.mxu0
    %v969 = vadd.f32 0.0, %v968
    %970 = vdwg.mxu0
    %v971 = vadd.f32 %v887, %v909
    %v972 = vadd.f32 %v888, %v929
    %v973 = vadd.f32 %v889, %v949
    %v974 = vadd.f32 %v890, %v969
    %v975 = vmul.f32 %v971, 0.5
    %v976 = vtanh.pop %v975
    %v977 = vmul.f32 %v976, 0.5
    %v978 = vadd.f32 %v977, 0.5
    %v979 = vmul.f32 %v972, 0.5
    %v980 = vtanh.pop %v979
    %v981 = vmul.f32 %v980, 0.5
    %v982 = vadd.f32 %v981, 0.5
    %v983 = vtanh.pop %v973
    %v984 = vmul.f32 %v974, 0.5
    %v985 = vtanh.pop %v984
    %v986 = vmul.f32 %v985, 0.5
    %v987 = vadd.f32 %v986, 0.5
    %v988 = vmul.f32 %v982, %v797
    %v989 = vmul.f32 %v978, %v983
    %v990 = vadd.f32 %v988, %v989
    %v991 = vtanh.pop %v990
    %v992 = vmul.f32 %v987, %v991
    %v993 = vsub.f32 %v992, %v98
    %995 = vset.pattern.permute.xlu0 0
    %996 = vperm.xlu0 %995, %v803
    %v997 = vpop.permute.xlu0 %996
    %v999 = vmul.f32 %v997, %v993
    %v1000 = vadd.f32 %v98, %v999
    %v1001 = vsub.f32 %v990, %v99
    %v1002 = vmul.f32 %v997, %v1001
    %v1003 = vadd.f32 %v99, %v1002
    %s1004 = scalar_lea.vmem [#allocation12], 24
    %1005 = vst [vmem:[%s1004] sm:$0xff] %v1000
    %s1006 = scalar_lea.vmem %s0, 32
    %v1007 = vld [vmem:[%s1006] sm:$0xff]
    %s1008 = scalar_lea.vmem %s1, 32
    %v1009 = vld [vmem:[%s1008] sm:$0xff]
    %v1011 = vsel %vm177, %v1007, 0
    %1013 = vmatpush.msra.mxu0 0.0
    %1014 = vmatpush.msra.mxu0 0.0
    %1015 = vmatpush.msra.mxu0 0.0
    %1016 = vmatpush.msra.mxu0 0.0
    %1017 = vmatpush.msra.mxu0 0.0
    %1018 = vmatpush.msra.mxu0 0.0
    %1019 = vmatpush.msra.mxu0 0.0
    %1020 = vmatpush.msra.mxu0 0.0
    %1021 = vmatpush.msra.mxu0 0.0
    %1022 = vmatpush.msra.mxu0 0.0
    %1023 = vmatpush.msra.mxu0 0.0
    %1024 = vmatpush.msra.mxu0 0.0
    %1025 = vmatpush.msra.mxu0 0.0
    %1026 = vmatpush.msra.mxu0 0.0
    %1027 = vmatpush.msra.mxu0 %v104
    %1028 = vmatpush.msra.mxu0 %v100
    %1029 = vmatmul.f32.gmra.mxu0 %v1011
    %v1030 = vpop.f32.mrf.mxu0
    %v1031 = vadd.f32 0.0, %v1030
    %1032 = vdwg.mxu0
    %1033 = vmatpush.msra.mxu0 0.0
    %1034 = vmatpush.msra.mxu0 0.0
    %1035 = vmatpush.msra.mxu0 0.0
    %1036 = vmatpush.msra.mxu0 0.0
    %1037 = vmatpush.msra.mxu0 0.0
    %1038 = vmatpush.msra.mxu0 0.0
    %1039 = vmatpush.msra.mxu0 0.0
    %1040 = vmatpush.msra.mxu0 0.0
    %1041 = vmatpush.msra.mxu0 0.0
    %1042 = vmatpush.msra.mxu0 0.0
    %1043 = vmatpush.msra.mxu0 0.0
    %1044 = vmatpush.msra.mxu0 0.0
    %1045 = vmatpush.msra.mxu0 0.0
    %1046 = vmatpush.msra.mxu0 0.0
    %1047 = vmatpush.msra.mxu0 %v105
    %1048 = vmatpush.msra.mxu0 %v101
    %1049 = vmatmul.f32.gmra.mxu0 %v1011
    %v1050 = vpop.f32.mrf.mxu0
    %v1051 = vadd.f32 0.0, %v1050
    %1052 = vdwg.mxu0
    %1053 = vmatpush.msra.mxu0 0.0
    %1054 = vmatpush.msra.mxu0 0.0
    %1055 = vmatpush.msra.mxu0 0.0
    %1056 = vmatpush.msra.mxu0 0.0
    %1057 = vmatpush.msra.mxu0 0.0
    %1058 = vmatpush.msra.mxu0 0.0
    %1059 = vmatpush.msra.mxu0 0.0
    %1060 = vmatpush.msra.mxu0 0.0
    %1061 = vmatpush.msra.mxu0 0.0
    %1062 = vmatpush.msra.mxu0 0.0
    %1063 = vmatpush.msra.mxu0 0.0
    %1064 = vmatpush.msra.mxu0 0.0
    %1065 = vmatpush.msra.mxu0 0.0
    %1066 = vmatpush.msra.mxu0 0.0
    %1067 = vmatpush.msra.mxu0 %v106
    %1068 = vmatpush.msra.mxu0 %v102
    %1069 = vmatmul.f32.gmra.mxu0 %v1011
    %v1070 = vpop.f32.mrf.mxu0
    %v1071 = vadd.f32 0.0, %v1070
    %1072 = vdwg.mxu0
    %1073 = vmatpush.msra.mxu0 0.0
    %1074 = vmatpush.msra.mxu0 0.0
    %1075 = vmatpush.msra.mxu0 0.0
    %1076 = vmatpush.msra.mxu0 0.0
    %1077 = vmatpush.msra.mxu0 0.0
    %1078 = vmatpush.msra.mxu0 0.0
    %1079 = vmatpush.msra.mxu0 0.0
    %1080 = vmatpush.msra.mxu0 0.0
    %1081 = vmatpush.msra.mxu0 0.0
    %1082 = vmatpush.msra.mxu0 0.0
    %1083 = vmatpush.msra.mxu0 0.0
    %1084 = vmatpush.msra.mxu0 0.0
    %1085 = vmatpush.msra.mxu0 0.0
    %1086 = vmatpush.msra.mxu0 0.0
    %1087 = vmatpush.msra.mxu0 %v107
    %1088 = vmatpush.msra.mxu0 %v103
    %1089 = vmatmul.f32.gmra.mxu0 %v1011
    %v1090 = vpop.f32.mrf.mxu0
    %v1091 = vadd.f32 0.0, %v1090
    %1092 = vdwg.mxu0
    %v1093 = vadd.f32 %v262, %v1031
    %v1094 = vadd.f32 %v263, %v1051
    %v1095 = vadd.f32 %v264, %v1071
    %v1096 = vadd.f32 %v265, %v1091
    %1097 = vmatpush.msra.mxu0 %v168
    %1098 = vmatpush.msra.mxu0 %v164
    %1099 = vmatpush.msra.mxu0 %v160
    %1100 = vmatpush.msra.mxu0 %v156
    %1101 = vmatpush.msra.mxu0 %v152
    %1102 = vmatpush.msra.mxu0 %v148
    %1103 = vmatpush.msra.mxu0 %v144
    %1104 = vmatpush.msra.mxu0 %v140
    %1105 = vmatpush.msra.mxu0 %v136
    %1106 = vmatpush.msra.mxu0 %v132
    %1107 = vmatpush.msra.mxu0 %v128
    %1108 = vmatpush.msra.mxu0 %v124
    %1109 = vmatpush.msra.mxu0 %v120
    %1110 = vmatpush.msra.mxu0 %v116
    %1111 = vmatpush.msra.mxu0 %v112
    %1112 = vmatpush.msra.mxu0 %v108
    %1113 = vmatmul.f32.gmra.mxu0 %v1000
    %v1114 = vpop.f32.mrf.mxu0
    %v1115 = vadd.f32 0.0, %v1114
    %1116 = vdwg.mxu0
    %1117 = vmatpush.msra.mxu0 %v169
    %1118 = vmatpush.msra.mxu0 %v165
    %1119 = vmatpush.msra.mxu0 %v161
    %1120 = vmatpush.msra.mxu0 %v157
    %1121 = vmatpush.msra.mxu0 %v153
    %1122 = vmatpush.msra.mxu0 %v149
    %1123 = vmatpush.msra.mxu0 %v145
    %1124 = vmatpush.msra.mxu0 %v141
    %1125 = vmatpush.msra.mxu0 %v137
    %1126 = vmatpush.msra.mxu0 %v133
    %1127 = vmatpush.msra.mxu0 %v129
    %1128 = vmatpush.msra.mxu0 %v125
    %1129 = vmatpush.msra.mxu0 %v121
    %1130 = vmatpush.msra.mxu0 %v117
    %1131 = vmatpush.msra.mxu0 %v113
    %1132 = vmatpush.msra.mxu0 %v109
    %1133 = vmatmul.f32.gmra.mxu0 %v1000
    %v1134 = vpop.f32.mrf.mxu0
    %v1135 = vadd.f32 0.0, %v1134
    %1136 = vdwg.mxu0
    %1137 = vmatpush.msra.mxu0 %v170
    %1138 = vmatpush.msra.mxu0 %v166
    %1139 = vmatpush.msra.mxu0 %v162
    %1140 = vmatpush.msra.mxu0 %v158
    %1141 = vmatpush.msra.mxu0 %v154
    %1142 = vmatpush.msra.mxu0 %v150
    %1143 = vmatpush.msra.mxu0 %v146
    %1144 = vmatpush.msra.mxu0 %v142
    %1145 = vmatpush.msra.mxu0 %v138
    %1146 = vmatpush.msra.mxu0 %v134
    %1147 = vmatpush.msra.mxu0 %v130
    %1148 = vmatpush.msra.mxu0 %v126
    %1149 = vmatpush.msra.mxu0 %v122
    %1150 = vmatpush.msra.mxu0 %v118
    %1151 = vmatpush.msra.mxu0 %v114
    %1152 = vmatpush.msra.mxu0 %v110
    %1153 = vmatmul.f32.gmra.mxu0 %v1000
    %v1154 = vpop.f32.mrf.mxu0
    %v1155 = vadd.f32 0.0, %v1154
    %1156 = vdwg.mxu0
    %1157 = vmatpush.msra.mxu0 %v171
    %1158 = vmatpush.msra.mxu0 %v167
    %1159 = vmatpush.msra.mxu0 %v163
    %1160 = vmatpush.msra.mxu0 %v159
    %1161 = vmatpush.msra.mxu0 %v155
    %1162 = vmatpush.msra.mxu0 %v151
    %1163 = vmatpush.msra.mxu0 %v147
    %1164 = vmatpush.msra.mxu0 %v143
    %1165 = vmatpush.msra.mxu0 %v139
    %1166 = vmatpush.msra.mxu0 %v135
    %1167 = vmatpush.msra.mxu0 %v131
    %1168 = vmatpush.msra.mxu0 %v127
    %1169 = vmatpush.msra.mxu0 %v123
    %1170 = vmatpush.msra.mxu0 %v119
    %1171 = vmatpush.msra.mxu0 %v115
    %1172 = vmatpush.msra.mxu0 %v111
    %1173 = vmatmul.f32.gmra.mxu0 %v1000
    %v1174 = vpop.f32.mrf.mxu0
    %v1175 = vadd.f32 0.0, %v1174
    %1176 = vdwg.mxu0
    %v1177 = vadd.f32 %v1093, %v1115
    %v1178 = vadd.f32 %v1094, %v1135
    %v1179 = vadd.f32 %v1095, %v1155
    %v1180 = vadd.f32 %v1096, %v1175
    %v1181 = vmul.f32 %v1177, 0.5
    %v1182 = vtanh.pop %v1181
    %v1183 = vmul.f32 %v1182, 0.5
    %v1184 = vadd.f32 %v1183, 0.5
    %v1185 = vmul.f32 %v1178, 0.5
    %v1186 = vtanh.pop %v1185
    %v1187 = vmul.f32 %v1186, 0.5
    %v1188 = vadd.f32 %v1187, 0.5
    %v1189 = vtanh.pop %v1179
    %v1190 = vmul.f32 %v1180, 0.5
    %v1191 = vtanh.pop %v1190
    %v1192 = vmul.f32 %v1191, 0.5
    %v1193 = vadd.f32 %v1192, 0.5
    %v1194 = vmul.f32 %v1188, %v1003
    %v1195 = vmul.f32 %v1184, %v1189
    %v1196 = vadd.f32 %v1194, %v1195
    %v1197 = vtanh.pop %v1196
    %v1198 = vmul.f32 %v1193, %v1197
    %v1199 = vsub.f32 %v1198, %v98
    %1201 = vset.pattern.permute.xlu0 0
    %1202 = vperm.xlu0 %1201, %v1009
    %v1203 = vpop.permute.xlu0 %1202
    %v1205 = vmul.f32 %v1203, %v1199
    %v1206 = vadd.f32 %v98, %v1205
    %v1207 = vsub.f32 %v1196, %v99
    %v1208 = vmul.f32 %v1203, %v1207
    %v1209 = vadd.f32 %v99, %v1208
    %s1210 = scalar_lea.vmem [#allocation12], 32
    %1211 = vst [vmem:[%s1210] sm:$0xff] %v1206
    %s1212 = scalar_lea.vmem %s0, 40
    %v1213 = vld [vmem:[%s1212] sm:$0xff]
    %s1214 = scalar_lea.vmem %s1, 40
    %v1215 = vld [vmem:[%s1214] sm:$0xff]
    %v1217 = vsel %vm177, %v1213, 0
    %1219 = vmatpush.msra.mxu0 0.0
    %1220 = vmatpush.msra.mxu0 0.0
    %1221 = vmatpush.msra.mxu0 0.0
    %1222 = vmatpush.msra.mxu0 0.0
    %1223 = vmatpush.msra.mxu0 0.0
    %1224 = vmatpush.msra.mxu0 0.0
    %1225 = vmatpush.msra.mxu0 0.0
    %1226 = vmatpush.msra.mxu0 0.0
    %1227 = vmatpush.msra.mxu0 0.0
    %1228 = vmatpush.msra.mxu0 0.0
    %1229 = vmatpush.msra.mxu0 0.0
    %1230 = vmatpush.msra.mxu0 0.0
    %1231 = vmatpush.msra.mxu0 0.0
    %1232 = vmatpush.msra.mxu0 0.0
    %1233 = vmatpush.msra.mxu0 %v104
    %1234 = vmatpush.msra.mxu0 %v100
    %1235 = vmatmul.f32.gmra.mxu0 %v1217
    %v1236 = vpop.f32.mrf.mxu0
    %v1237 = vadd.f32 0.0, %v1236
    %1238 = vdwg.mxu0
    %1239 = vmatpush.msra.mxu0 0.0
    %1240 = vmatpush.msra.mxu0 0.0
    %1241 = vmatpush.msra.mxu0 0.0
    %1242 = vmatpush.msra.mxu0 0.0
    %1243 = vmatpush.msra.mxu0 0.0
    %1244 = vmatpush.msra.mxu0 0.0
    %1245 = vmatpush.msra.mxu0 0.0
    %1246 = vmatpush.msra.mxu0 0.0
    %1247 = vmatpush.msra.mxu0 0.0
    %1248 = vmatpush.msra.mxu0 0.0
    %1249 = vmatpush.msra.mxu0 0.0
    %1250 = vmatpush.msra.mxu0 0.0
    %1251 = vmatpush.msra.mxu0 0.0
    %1252 = vmatpush.msra.mxu0 0.0
    %1253 = vmatpush.msra.mxu0 %v105
    %1254 = vmatpush.msra.mxu0 %v101
    %1255 = vmatmul.f32.gmra.mxu0 %v1217
    %v1256 = vpop.f32.mrf.mxu0
    %v1257 = vadd.f32 0.0, %v1256
    %1258 = vdwg.mxu0
    %1259 = vmatpush.msra.mxu0 0.0
    %1260 = vmatpush.msra.mxu0 0.0
    %1261 = vmatpush.msra.mxu0 0.0
    %1262 = vmatpush.msra.mxu0 0.0
    %1263 = vmatpush.msra.mxu0 0.0
    %1264 = vmatpush.msra.mxu0 0.0
    %1265 = vmatpush.msra.mxu0 0.0
    %1266 = vmatpush.msra.mxu0 0.0
    %1267 = vmatpush.msra.mxu0 0.0
    %1268 = vmatpush.msra.mxu0 0.0
    %1269 = vmatpush.msra.mxu0 0.0
    %1270 = vmatpush.msra.mxu0 0.0
    %1271 = vmatpush.msra.mxu0 0.0
    %1272 = vmatpush.msra.mxu0 0.0
    %1273 = vmatpush.msra.mxu0 %v106
    %1274 = vmatpush.msra.mxu0 %v102
    %1275 = vmatmul.f32.gmra.mxu0 %v1217
    %v1276 = vpop.f32.mrf.mxu0
    %v1277 = vadd.f32 0.0, %v1276
    %1278 = vdwg.mxu0
    %1279 = vmatpush.msra.mxu0 0.0
    %1280 = vmatpush.msra.mxu0 0.0
    %1281 = vmatpush.msra.mxu0 0.0
    %1282 = vmatpush.msra.mxu0 0.0
    %1283 = vmatpush.msra.mxu0 0.0
    %1284 = vmatpush.msra.mxu0 0.0
    %1285 = vmatpush.msra.mxu0 0.0
    %1286 = vmatpush.msra.mxu0 0.0
    %1287 = vmatpush.msra.mxu0 0.0
    %1288 = vmatpush.msra.mxu0 0.0
    %1289 = vmatpush.msra.mxu0 0.0
    %1290 = vmatpush.msra.mxu0 0.0
    %1291 = vmatpush.msra.mxu0 0.0
    %1292 = vmatpush.msra.mxu0 0.0
    %1293 = vmatpush.msra.mxu0 %v107
    %1294 = vmatpush.msra.mxu0 %v103
    %1295 = vmatmul.f32.gmra.mxu0 %v1217
    %v1296 = vpop.f32.mrf.mxu0
    %v1297 = vadd.f32 0.0, %v1296
    %1298 = vdwg.mxu0
    %v1299 = vadd.f32 %v262, %v1237
    %v1300 = vadd.f32 %v263, %v1257
    %v1301 = vadd.f32 %v264, %v1277
    %v1302 = vadd.f32 %v265, %v1297
    %1303 = vmatpush.msra.mxu0 %v168
    %1304 = vmatpush.msra.mxu0 %v164
    %1305 = vmatpush.msra.mxu0 %v160
    %1306 = vmatpush.msra.mxu0 %v156
    %1307 = vmatpush.msra.mxu0 %v152
    %1308 = vmatpush.msra.mxu0 %v148
    %1309 = vmatpush.msra.mxu0 %v144
    %1310 = vmatpush.msra.mxu0 %v140
    %1311 = vmatpush.msra.mxu0 %v136
    %1312 = vmatpush.msra.mxu0 %v132
    %1313 = vmatpush.msra.mxu0 %v128
    %1314 = vmatpush.msra.mxu0 %v124
    %1315 = vmatpush.msra.mxu0 %v120
    %1316 = vmatpush.msra.mxu0 %v116
    %1317 = vmatpush.msra.mxu0 %v112
    %1318 = vmatpush.msra.mxu0 %v108
    %1319 = vmatmul.f32.gmra.mxu0 %v1206
    %v1320 = vpop.f32.mrf.mxu0
    %v1321 = vadd.f32 0.0, %v1320
    %1322 = vdwg.mxu0
    %1323 = vmatpush.msra.mxu0 %v169
    %1324 = vmatpush.msra.mxu0 %v165
    %1325 = vmatpush.msra.mxu0 %v161
    %1326 = vmatpush.msra.mxu0 %v157
    %1327 = vmatpush.msra.mxu0 %v153
    %1328 = vmatpush.msra.mxu0 %v149
    %1329 = vmatpush.msra.mxu0 %v145
    %1330 = vmatpush.msra.mxu0 %v141
    %1331 = vmatpush.msra.mxu0 %v137
    %1332 = vmatpush.msra.mxu0 %v133
    %1333 = vmatpush.msra.mxu0 %v129
    %1334 = vmatpush.msra.mxu0 %v125
    %1335 = vmatpush.msra.mxu0 %v121
    %1336 = vmatpush.msra.mxu0 %v117
    %1337 = vmatpush.msra.mxu0 %v113
    %1338 = vmatpush.msra.mxu0 %v109
    %1339 = vmatmul.f32.gmra.mxu0 %v1206
    %v1340 = vpop.f32.mrf.mxu0
    %v1341 = vadd.f32 0.0, %v1340
    %1342 = vdwg.mxu0
    %1343 = vmatpush.msra.mxu0 %v170
    %1344 = vmatpush.msra.mxu0 %v166
    %1345 = vmatpush.msra.mxu0 %v162
    %1346 = vmatpush.msra.mxu0 %v158
    %1347 = vmatpush.msra.mxu0 %v154
    %1348 = vmatpush.msra.mxu0 %v150
    %1349 = vmatpush.msra.mxu0 %v146
    %1350 = vmatpush.msra.mxu0 %v142
    %1351 = vmatpush.msra.mxu0 %v138
    %1352 = vmatpush.msra.mxu0 %v134
    %1353 = vmatpush.msra.mxu0 %v130
    %1354 = vmatpush.msra.mxu0 %v126
    %1355 = vmatpush.msra.mxu0 %v122
    %1356 = vmatpush.msra.mxu0 %v118
    %1357 = vmatpush.msra.mxu0 %v114
    %1358 = vmatpush.msra.mxu0 %v110
    %1359 = vmatmul.f32.gmra.mxu0 %v1206
    %v1360 = vpop.f32.mrf.mxu0
    %v1361 = vadd.f32 0.0, %v1360
    %1362 = vdwg.mxu0
    %1363 = vmatpush.msra.mxu0 %v171
    %1364 = vmatpush.msra.mxu0 %v167
    %1365 = vmatpush.msra.mxu0 %v163
    %1366 = vmatpush.msra.mxu0 %v159
    %1367 = vmatpush.msra.mxu0 %v155
    %1368 = vmatpush.msra.mxu0 %v151
    %1369 = vmatpush.msra.mxu0 %v147
    %1370 = vmatpush.msra.mxu0 %v143
    %1371 = vmatpush.msra.mxu0 %v139
    %1372 = vmatpush.msra.mxu0 %v135
    %1373 = vmatpush.msra.mxu0 %v131
    %1374 = vmatpush.msra.mxu0 %v127
    %1375 = vmatpush.msra.mxu0 %v123
    %1376 = vmatpush.msra.mxu0 %v119
    %1377 = vmatpush.msra.mxu0 %v115
    %1378 = vmatpush.msra.mxu0 %v111
    %1379 = vmatmul.f32.gmra.mxu0 %v1206
    %v1380 = vpop.f32.mrf.mxu0
    %v1381 = vadd.f32 0.0, %v1380
    %1382 = vdwg.mxu0
    %v1383 = vadd.f32 %v1299, %v1321
    %v1384 = vadd.f32 %v1300, %v1341
    %v1385 = vadd.f32 %v1301, %v1361
    %v1386 = vadd.f32 %v1302, %v1381
    %v1387 = vmul.f32 %v1383, 0.5
    %v1388 = vtanh.pop %v1387
    %v1389 = vmul.f32 %v1388, 0.5
    %v1390 = vadd.f32 %v1389, 0.5
    %v1391 = vmul.f32 %v1384, 0.5
    %v1392 = vtanh.pop %v1391
    %v1393 = vmul.f32 %v1392, 0.5
    %v1394 = vadd.f32 %v1393, 0.5
    %v1395 = vtanh.pop %v1385
    %v1396 = vmul.f32 %v1386, 0.5
    %v1397 = vtanh.pop %v1396
    %v1398 = vmul.f32 %v1397, 0.5
    %v1399 = vadd.f32 %v1398, 0.5
    %v1400 = vmul.f32 %v1394, %v1209
    %v1401 = vmul.f32 %v1390, %v1395
    %v1402 = vadd.f32 %v1400, %v1401
    %v1403 = vtanh.pop %v1402
    %v1404 = vmul.f32 %v1399, %v1403
    %v1405 = vsub.f32 %v1404, %v98
    %1407 = vset.pattern.permute.xlu0 0
    %1408 = vperm.xlu0 %1407, %v1215
    %v1409 = vpop.permute.xlu0 %1408
    %v1411 = vmul.f32 %v1409, %v1405
    %v1412 = vadd.f32 %v98, %v1411
    %v1413 = vsub.f32 %v1402, %v99
    %v1414 = vmul.f32 %v1409, %v1413
    %v1415 = vadd.f32 %v99, %v1414
    %s1416 = scalar_lea.vmem [#allocation12], 40
    %1417 = vst [vmem:[%s1416] sm:$0xff] %v1412
    %s1418 = scalar_lea.vmem %s0, 48
    %v1419 = vld [vmem:[%s1418] sm:$0xff]
    %s1420 = scalar_lea.vmem %s1, 48
    %v1421 = vld [vmem:[%s1420] sm:$0xff]
    %v1423 = vsel %vm177, %v1419, 0
    %1425 = vmatpush.msra.mxu0 0.0
    %1426 = vmatpush.msra.mxu0 0.0
    %1427 = vmatpush.msra.mxu0 0.0
    %1428 = vmatpush.msra.mxu0 0.0
    %1429 = vmatpush.msra.mxu0 0.0
    %1430 = vmatpush.msra.mxu0 0.0
    %1431 = vmatpush.msra.mxu0 0.0
    %1432 = vmatpush.msra.mxu0 0.0
    %1433 = vmatpush.msra.mxu0 0.0
    %1434 = vmatpush.msra.mxu0 0.0
    %1435 = vmatpush.msra.mxu0 0.0
    %1436 = vmatpush.msra.mxu0 0.0
    %1437 = vmatpush.msra.mxu0 0.0
    %1438 = vmatpush.msra.mxu0 0.0
    %1439 = vmatpush.msra.mxu0 %v104
    %1440 = vmatpush.msra.mxu0 %v100
    %1441 = vmatmul.f32.gmra.mxu0 %v1423
    %v1442 = vpop.f32.mrf.mxu0
    %v1443 = vadd.f32 0.0, %v1442
    %1444 = vdwg.mxu0
    %1445 = vmatpush.msra.mxu0 0.0
    %1446 = vmatpush.msra.mxu0 0.0
    %1447 = vmatpush.msra.mxu0 0.0
    %1448 = vmatpush.msra.mxu0 0.0
    %1449 = vmatpush.msra.mxu0 0.0
    %1450 = vmatpush.msra.mxu0 0.0
    %1451 = vmatpush.msra.mxu0 0.0
    %1452 = vmatpush.msra.mxu0 0.0
    %1453 = vmatpush.msra.mxu0 0.0
    %1454 = vmatpush.msra.mxu0 0.0
    %1455 = vmatpush.msra.mxu0 0.0
    %1456 = vmatpush.msra.mxu0 0.0
    %1457 = vmatpush.msra.mxu0 0.0
    %1458 = vmatpush.msra.mxu0 0.0
    %1459 = vmatpush.msra.mxu0 %v105
    %1460 = vmatpush.msra.mxu0 %v101
    %1461 = vmatmul.f32.gmra.mxu0 %v1423
    %v1462 = vpop.f32.mrf.mxu0
    %v1463 = vadd.f32 0.0, %v1462
    %1464 = vdwg.mxu0
    %1465 = vmatpush.msra.mxu0 0.0
    %1466 = vmatpush.msra.mxu0 0.0
    %1467 = vmatpush.msra.mxu0 0.0
    %1468 = vmatpush.msra.mxu0 0.0
    %1469 = vmatpush.msra.mxu0 0.0
    %1470 = vmatpush.msra.mxu0 0.0
    %1471 = vmatpush.msra.mxu0 0.0
    %1472 = vmatpush.msra.mxu0 0.0
    %1473 = vmatpush.msra.mxu0 0.0
    %1474 = vmatpush.msra.mxu0 0.0
    %1475 = vmatpush.msra.mxu0 0.0
    %1476 = vmatpush.msra.mxu0 0.0
    %1477 = vmatpush.msra.mxu0 0.0
    %1478 = vmatpush.msra.mxu0 0.0
    %1479 = vmatpush.msra.mxu0 %v106
    %1480 = vmatpush.msra.mxu0 %v102
    %1481 = vmatmul.f32.gmra.mxu0 %v1423
    %v1482 = vpop.f32.mrf.mxu0
    %v1483 = vadd.f32 0.0, %v1482
    %1484 = vdwg.mxu0
    %1485 = vmatpush.msra.mxu0 0.0
    %1486 = vmatpush.msra.mxu0 0.0
    %1487 = vmatpush.msra.mxu0 0.0
    %1488 = vmatpush.msra.mxu0 0.0
    %1489 = vmatpush.msra.mxu0 0.0
    %1490 = vmatpush.msra.mxu0 0.0
    %1491 = vmatpush.msra.mxu0 0.0
    %1492 = vmatpush.msra.mxu0 0.0
    %1493 = vmatpush.msra.mxu0 0.0
    %1494 = vmatpush.msra.mxu0 0.0
    %1495 = vmatpush.msra.mxu0 0.0
    %1496 = vmatpush.msra.mxu0 0.0
    %1497 = vmatpush.msra.mxu0 0.0
    %1498 = vmatpush.msra.mxu0 0.0
    %1499 = vmatpush.msra.mxu0 %v107
    %1500 = vmatpush.msra.mxu0 %v103
    %1501 = vmatmul.f32.gmra.mxu0 %v1423
    %v1502 = vpop.f32.mrf.mxu0
    %v1503 = vadd.f32 0.0, %v1502
    %1504 = vdwg.mxu0
    %v1505 = vadd.f32 %v262, %v1443
    %v1506 = vadd.f32 %v263, %v1463
    %v1507 = vadd.f32 %v264, %v1483
    %v1508 = vadd.f32 %v265, %v1503
    %1509 = vmatpush.msra.mxu0 %v168
    %1510 = vmatpush.msra.mxu0 %v164
    %1511 = vmatpush.msra.mxu0 %v160
    %1512 = vmatpush.msra.mxu0 %v156
    %1513 = vmatpush.msra.mxu0 %v152
    %1514 = vmatpush.msra.mxu0 %v148
    %1515 = vmatpush.msra.mxu0 %v144
    %1516 = vmatpush.msra.mxu0 %v140
    %1517 = vmatpush.msra.mxu0 %v136
    %1518 = vmatpush.msra.mxu0 %v132
    %1519 = vmatpush.msra.mxu0 %v128
    %1520 = vmatpush.msra.mxu0 %v124
    %1521 = vmatpush.msra.mxu0 %v120
    %1522 = vmatpush.msra.mxu0 %v116
    %1523 = vmatpush.msra.mxu0 %v112
    %1524 = vmatpush.msra.mxu0 %v108
    %1525 = vmatmul.f32.gmra.mxu0 %v1412
    %v1526 = vpop.f32.mrf.mxu0
    %v1527 = vadd.f32 0.0, %v1526
    %1528 = vdwg.mxu0
    %1529 = vmatpush.msra.mxu0 %v169
    %1530 = vmatpush.msra.mxu0 %v165
    %1531 = vmatpush.msra.mxu0 %v161
    %1532 = vmatpush.msra.mxu0 %v157
    %1533 = vmatpush.msra.mxu0 %v153
    %1534 = vmatpush.msra.mxu0 %v149
    %1535 = vmatpush.msra.mxu0 %v145
    %1536 = vmatpush.msra.mxu0 %v141
    %1537 = vmatpush.msra.mxu0 %v137
    %1538 = vmatpush.msra.mxu0 %v133
    %1539 = vmatpush.msra.mxu0 %v129
    %1540 = vmatpush.msra.mxu0 %v125
    %1541 = vmatpush.msra.mxu0 %v121
    %1542 = vmatpush.msra.mxu0 %v117
    %1543 = vmatpush.msra.mxu0 %v113
    %1544 = vmatpush.msra.mxu0 %v109
    %1545 = vmatmul.f32.gmra.mxu0 %v1412
    %v1546 = vpop.f32.mrf.mxu0
    %v1547 = vadd.f32 0.0, %v1546
    %1548 = vdwg.mxu0
    %1549 = vmatpush.msra.mxu0 %v170
    %1550 = vmatpush.msra.mxu0 %v166
    %1551 = vmatpush.msra.mxu0 %v162
    %1552 = vmatpush.msra.mxu0 %v158
    %1553 = vmatpush.msra.mxu0 %v154
    %1554 = vmatpush.msra.mxu0 %v150
    %1555 = vmatpush.msra.mxu0 %v146
    %1556 = vmatpush.msra.mxu0 %v142
    %1557 = vmatpush.msra.mxu0 %v138
    %1558 = vmatpush.msra.mxu0 %v134
    %1559 = vmatpush.msra.mxu0 %v130
    %1560 = vmatpush.msra.mxu0 %v126
    %1561 = vmatpush.msra.mxu0 %v122
    %1562 = vmatpush.msra.mxu0 %v118
    %1563 = vmatpush.msra.mxu0 %v114
    %1564 = vmatpush.msra.mxu0 %v110
    %1565 = vmatmul.f32.gmra.mxu0 %v1412
    %v1566 = vpop.f32.mrf.mxu0
    %v1567 = vadd.f32 0.0, %v1566
    %1568 = vdwg.mxu0
    %1569 = vmatpush.msra.mxu0 %v171
    %1570 = vmatpush.msra.mxu0 %v167
    %1571 = vmatpush.msra.mxu0 %v163
    %1572 = vmatpush.msra.mxu0 %v159
    %1573 = vmatpush.msra.mxu0 %v155
    %1574 = vmatpush.msra.mxu0 %v151
    %1575 = vmatpush.msra.mxu0 %v147
    %1576 = vmatpush.msra.mxu0 %v143
    %1577 = vmatpush.msra.mxu0 %v139
    %1578 = vmatpush.msra.mxu0 %v135
    %1579 = vmatpush.msra.mxu0 %v131
    %1580 = vmatpush.msra.mxu0 %v127
    %1581 = vmatpush.msra.mxu0 %v123
    %1582 = vmatpush.msra.mxu0 %v119
    %1583 = vmatpush.msra.mxu0 %v115
    %1584 = vmatpush.msra.mxu0 %v111
    %1585 = vmatmul.f32.gmra.mxu0 %v1412
    %v1586 = vpop.f32.mrf.mxu0
    %v1587 = vadd.f32 0.0, %v1586
    %1588 = vdwg.mxu0
    %v1589 = vadd.f32 %v1505, %v1527
    %v1590 = vadd.f32 %v1506, %v1547
    %v1591 = vadd.f32 %v1507, %v1567
    %v1592 = vadd.f32 %v1508, %v1587
    %v1593 = vmul.f32 %v1589, 0.5
    %v1594 = vtanh.pop %v1593
    %v1595 = vmul.f32 %v1594, 0.5
    %v1596 = vadd.f32 %v1595, 0.5
    %v1597 = vmul.f32 %v1590, 0.5
    %v1598 = vtanh.pop %v1597
    %v1599 = vmul.f32 %v1598, 0.5
    %v1600 = vadd.f32 %v1599, 0.5
    %v1601 = vtanh.pop %v1591
    %v1602 = vmul.f32 %v1592, 0.5
    %v1603 = vtanh.pop %v1602
    %v1604 = vmul.f32 %v1603, 0.5
    %v1605 = vadd.f32 %v1604, 0.5
    %v1606 = vmul.f32 %v1600, %v1415
    %v1607 = vmul.f32 %v1596, %v1601
    %v1608 = vadd.f32 %v1606, %v1607
    %v1609 = vtanh.pop %v1608
    %v1610 = vmul.f32 %v1605, %v1609
    %v1611 = vsub.f32 %v1610, %v98
    %1613 = vset.pattern.permute.xlu0 0
    %1614 = vperm.xlu0 %1613, %v1421
    %v1615 = vpop.permute.xlu0 %1614
    %v1617 = vmul.f32 %v1615, %v1611
    %v1618 = vadd.f32 %v98, %v1617
    %v1619 = vsub.f32 %v1608, %v99
    %v1620 = vmul.f32 %v1615, %v1619
    %v1621 = vadd.f32 %v99, %v1620
    %s1622 = scalar_lea.vmem [#allocation12], 48
    %1623 = vst [vmem:[%s1622] sm:$0xff] %v1618
    %s1624 = scalar_lea.vmem %s0, 56
    %v1625 = vld [vmem:[%s1624] sm:$0xff]
    %s1626 = scalar_lea.vmem %s1, 56
    %v1627 = vld [vmem:[%s1626] sm:$0xff]
    %v1629 = vsel %vm177, %v1625, 0
    %1631 = vmatpush.msra.mxu0 0.0
    %1632 = vmatpush.msra.mxu0 0.0
    %1633 = vmatpush.msra.mxu0 0.0
    %1634 = vmatpush.msra.mxu0 0.0
    %1635 = vmatpush.msra.mxu0 0.0
    %1636 = vmatpush.msra.mxu0 0.0
    %1637 = vmatpush.msra.mxu0 0.0
    %1638 = vmatpush.msra.mxu0 0.0
    %1639 = vmatpush.msra.mxu0 0.0
    %1640 = vmatpush.msra.mxu0 0.0
    %1641 = vmatpush.msra.mxu0 0.0
    %1642 = vmatpush.msra.mxu0 0.0
    %1643 = vmatpush.msra.mxu0 0.0
    %1644 = vmatpush.msra.mxu0 0.0
    %1645 = vmatpush.msra.mxu0 %v104
    %1646 = vmatpush.msra.mxu0 %v100
    %1647 = vmatmul.f32.gmra.mxu0 %v1629
    %v1648 = vpop.f32.mrf.mxu0
    %v1649 = vadd.f32 0.0, %v1648
    %1650 = vdwg.mxu0
    %1651 = vmatpush.msra.mxu0 0.0
    %1652 = vmatpush.msra.mxu0 0.0
    %1653 = vmatpush.msra.mxu0 0.0
    %1654 = vmatpush.msra.mxu0 0.0
    %1655 = vmatpush.msra.mxu0 0.0
    %1656 = vmatpush.msra.mxu0 0.0
    %1657 = vmatpush.msra.mxu0 0.0
    %1658 = vmatpush.msra.mxu0 0.0
    %1659 = vmatpush.msra.mxu0 0.0
    %1660 = vmatpush.msra.mxu0 0.0
    %1661 = vmatpush.msra.mxu0 0.0
    %1662 = vmatpush.msra.mxu0 0.0
    %1663 = vmatpush.msra.mxu0 0.0
    %1664 = vmatpush.msra.mxu0 0.0
    %1665 = vmatpush.msra.mxu0 %v105
    %1666 = vmatpush.msra.mxu0 %v101
    %1667 = vmatmul.f32.gmra.mxu0 %v1629
    %v1668 = vpop.f32.mrf.mxu0
    %v1669 = vadd.f32 0.0, %v1668
    %1670 = vdwg.mxu0
    %1671 = vmatpush.msra.mxu0 0.0
    %1672 = vmatpush.msra.mxu0 0.0
    %1673 = vmatpush.msra.mxu0 0.0
    %1674 = vmatpush.msra.mxu0 0.0
    %1675 = vmatpush.msra.mxu0 0.0
    %1676 = vmatpush.msra.mxu0 0.0
    %1677 = vmatpush.msra.mxu0 0.0
    %1678 = vmatpush.msra.mxu0 0.0
    %1679 = vmatpush.msra.mxu0 0.0
    %1680 = vmatpush.msra.mxu0 0.0
    %1681 = vmatpush.msra.mxu0 0.0
    %1682 = vmatpush.msra.mxu0 0.0
    %1683 = vmatpush.msra.mxu0 0.0
    %1684 = vmatpush.msra.mxu0 0.0
    %1685 = vmatpush.msra.mxu0 %v106
    %1686 = vmatpush.msra.mxu0 %v102
    %1687 = vmatmul.f32.gmra.mxu0 %v1629
    %v1688 = vpop.f32.mrf.mxu0
    %v1689 = vadd.f32 0.0, %v1688
    %1690 = vdwg.mxu0
    %1691 = vmatpush.msra.mxu0 0.0
    %1692 = vmatpush.msra.mxu0 0.0
    %1693 = vmatpush.msra.mxu0 0.0
    %1694 = vmatpush.msra.mxu0 0.0
    %1695 = vmatpush.msra.mxu0 0.0
    %1696 = vmatpush.msra.mxu0 0.0
    %1697 = vmatpush.msra.mxu0 0.0
    %1698 = vmatpush.msra.mxu0 0.0
    %1699 = vmatpush.msra.mxu0 0.0
    %1700 = vmatpush.msra.mxu0 0.0
    %1701 = vmatpush.msra.mxu0 0.0
    %1702 = vmatpush.msra.mxu0 0.0
    %1703 = vmatpush.msra.mxu0 0.0
    %1704 = vmatpush.msra.mxu0 0.0
    %1705 = vmatpush.msra.mxu0 %v107
    %1706 = vmatpush.msra.mxu0 %v103
    %1707 = vmatmul.f32.gmra.mxu0 %v1629
    %v1708 = vpop.f32.mrf.mxu0
    %v1709 = vadd.f32 0.0, %v1708
    %1710 = vdwg.mxu0
    %v1711 = vadd.f32 %v262, %v1649
    %v1712 = vadd.f32 %v263, %v1669
    %v1713 = vadd.f32 %v264, %v1689
    %v1714 = vadd.f32 %v265, %v1709
    %1715 = vmatpush.msra.mxu0 %v168
    %1716 = vmatpush.msra.mxu0 %v164
    %1717 = vmatpush.msra.mxu0 %v160
    %1718 = vmatpush.msra.mxu0 %v156
    %1719 = vmatpush.msra.mxu0 %v152
    %1720 = vmatpush.msra.mxu0 %v148
    %1721 = vmatpush.msra.mxu0 %v144
    %1722 = vmatpush.msra.mxu0 %v140
    %1723 = vmatpush.msra.mxu0 %v136
    %1724 = vmatpush.msra.mxu0 %v132
    %1725 = vmatpush.msra.mxu0 %v128
    %1726 = vmatpush.msra.mxu0 %v124
    %1727 = vmatpush.msra.mxu0 %v120
    %1728 = vmatpush.msra.mxu0 %v116
    %1729 = vmatpush.msra.mxu0 %v112
    %1730 = vmatpush.msra.mxu0 %v108
    %1731 = vmatmul.f32.gmra.mxu0 %v1618
    %v1732 = vpop.f32.mrf.mxu0
    %v1733 = vadd.f32 0.0, %v1732
    %1734 = vdwg.mxu0
    %1735 = vmatpush.msra.mxu0 %v169
    %1736 = vmatpush.msra.mxu0 %v165
    %1737 = vmatpush.msra.mxu0 %v161
    %1738 = vmatpush.msra.mxu0 %v157
    %1739 = vmatpush.msra.mxu0 %v153
    %1740 = vmatpush.msra.mxu0 %v149
    %1741 = vmatpush.msra.mxu0 %v145
    %1742 = vmatpush.msra.mxu0 %v141
    %1743 = vmatpush.msra.mxu0 %v137
    %1744 = vmatpush.msra.mxu0 %v133
    %1745 = vmatpush.msra.mxu0 %v129
    %1746 = vmatpush.msra.mxu0 %v125
    %1747 = vmatpush.msra.mxu0 %v121
    %1748 = vmatpush.msra.mxu0 %v117
    %1749 = vmatpush.msra.mxu0 %v113
    %1750 = vmatpush.msra.mxu0 %v109
    %1751 = vmatmul.f32.gmra.mxu0 %v1618
    %v1752 = vpop.f32.mrf.mxu0
    %v1753 = vadd.f32 0.0, %v1752
    %1754 = vdwg.mxu0
    %1755 = vmatpush.msra.mxu0 %v170
    %1756 = vmatpush.msra.mxu0 %v166
    %1757 = vmatpush.msra.mxu0 %v162
    %1758 = vmatpush.msra.mxu0 %v158
    %1759 = vmatpush.msra.mxu0 %v154
    %1760 = vmatpush.msra.mxu0 %v150
    %1761 = vmatpush.msra.mxu0 %v146
    %1762 = vmatpush.msra.mxu0 %v142
    %1763 = vmatpush.msra.mxu0 %v138
    %1764 = vmatpush.msra.mxu0 %v134
    %1765 = vmatpush.msra.mxu0 %v130
    %1766 = vmatpush.msra.mxu0 %v126
    %1767 = vmatpush.msra.mxu0 %v122
    %1768 = vmatpush.msra.mxu0 %v118
    %1769 = vmatpush.msra.mxu0 %v114
    %1770 = vmatpush.msra.mxu0 %v110
    %1771 = vmatmul.f32.gmra.mxu0 %v1618
    %v1772 = vpop.f32.mrf.mxu0
    %v1773 = vadd.f32 0.0, %v1772
    %1774 = vdwg.mxu0
    %1775 = vmatpush.msra.mxu0 %v171
    %1776 = vmatpush.msra.mxu0 %v167
    %1777 = vmatpush.msra.mxu0 %v163
    %1778 = vmatpush.msra.mxu0 %v159
    %1779 = vmatpush.msra.mxu0 %v155
    %1780 = vmatpush.msra.mxu0 %v151
    %1781 = vmatpush.msra.mxu0 %v147
    %1782 = vmatpush.msra.mxu0 %v143
    %1783 = vmatpush.msra.mxu0 %v139
    %1784 = vmatpush.msra.mxu0 %v135
    %1785 = vmatpush.msra.mxu0 %v131
    %1786 = vmatpush.msra.mxu0 %v127
    %1787 = vmatpush.msra.mxu0 %v123
    %1788 = vmatpush.msra.mxu0 %v119
    %1789 = vmatpush.msra.mxu0 %v115
    %1790 = vmatpush.msra.mxu0 %v111
    %1791 = vmatmul.f32.gmra.mxu0 %v1618
    %v1792 = vpop.f32.mrf.mxu0
    %v1793 = vadd.f32 0.0, %v1792
    %1794 = vdwg.mxu0
    %v1795 = vadd.f32 %v1711, %v1733
    %v1796 = vadd.f32 %v1712, %v1753
    %v1797 = vadd.f32 %v1713, %v1773
    %v1798 = vadd.f32 %v1714, %v1793
    %v1799 = vmul.f32 %v1795, 0.5
    %v1800 = vtanh.pop %v1799
    %v1801 = vmul.f32 %v1800, 0.5
    %v1802 = vadd.f32 %v1801, 0.5
    %v1803 = vmul.f32 %v1796, 0.5
    %v1804 = vtanh.pop %v1803
    %v1805 = vmul.f32 %v1804, 0.5
    %v1806 = vadd.f32 %v1805, 0.5
    %v1807 = vtanh.pop %v1797
    %v1808 = vmul.f32 %v1798, 0.5
    %v1809 = vtanh.pop %v1808
    %v1810 = vmul.f32 %v1809, 0.5
    %v1811 = vadd.f32 %v1810, 0.5
    %v1812 = vmul.f32 %v1806, %v1621
    %v1813 = vmul.f32 %v1802, %v1807
    %v1814 = vadd.f32 %v1812, %v1813
    %v1815 = vtanh.pop %v1814
    %v1816 = vmul.f32 %v1811, %v1815
    %v1817 = vsub.f32 %v1816, %v98
    %1819 = vset.pattern.permute.xlu0 0
    %1820 = vperm.xlu0 %1819, %v1627
    %v1821 = vpop.permute.xlu0 %1820
    %v1823 = vmul.f32 %v1821, %v1817
    %v1824 = vadd.f32 %v98, %v1823
    %v1825 = vsub.f32 %v1814, %v99
    %v1826 = vmul.f32 %v1821, %v1825
    %v1827 = vadd.f32 %v99, %v1826
    %s1828 = scalar_lea.vmem [#allocation12], 56
    %1829 = vst [vmem:[%s1828] sm:$0xff] %v1824
    %1830 = vst [vmem:[#allocation2] sm:$0xff] %v1824
    %1831 = vst [vmem:[#allocation3] sm:$0xff] %v1827
    // Predicated region
    $region50: #{tpu_custom_call.1} parent=1 // pred_check
      %p1832 = pneg %p90
    $region51: #{tpu_custom_call.1} parent=1 // pred_check_branch
      %1834 = sbr.rel (%p1832) target = $region53
    $region52: #{tpu_custom_call.1} parent=1 // pred_region
      %1835 = vst [vmem:[#allocation13] sm:$0xff] %v1824
      %1836 = vst [vmem:[#allocation15] sm:$0xff] %v1827
    $region53: #{tpu_custom_call.1} parent=1 // pred_fallthru
      _
    // Predicated region
    $region54: #{tpu_custom_call.1} parent=1 // pred_check
      _
    $region55: #{tpu_custom_call.1} parent=1 // pred_check_branch
      %1838 = sbr.rel (0) target = $region57
    $region56: #{tpu_custom_call.1} parent=1 // pred_region
      %1840 = vsyncadd [#allocation6], 0
      %s1841 = sshll.u32 [#allocation12], 4
      %s1842 = int_to_ptr.vmem [resolvable:$true] %s1841
      %s1843 = sshll.u32 %s7, 4
      %s1844 = int_to_ptr.hbm [resolvable:$true] %s1843
      %1849 = dma.vmem_to_hbm [thread:$0]  %s1842, 1024, %s1844, [#allocation6], 128, 128, 8
    $region57: #{tpu_custom_call.1} parent=1 // pred_fallthru
      _
    // Predicated region
    $region58: #{tpu_custom_call.1} parent=1 // pred_check
      _
    $region59: #{tpu_custom_call.1} parent=1 // pred_check_branch
      %1851 = sbr.rel (0) target = $region61
    $region60: #{tpu_custom_call.1} parent=1 // pred_region
      %1853 = vsyncadd [#allocation14], 0
      %s1855 = sshll.u32 [#allocation13], 4
      %s1856 = int_to_ptr.vmem [resolvable:$true] %s1855
      %s1857 = sshll.u32 %s8, 4
      %s1858 = int_to_ptr.hbm [resolvable:$true] %s1857
      %1860 = dma.vmem_to_hbm [thread:$0]  %s1856, 128, %s1858, [#allocation14]
    $region61: #{tpu_custom_call.1} parent=1 // pred_fallthru
      _
    // Predicated region
    $region62: #{tpu_custom_call.1} parent=1 // pred_check
      _
    $region63: #{tpu_custom_call.1} parent=1 // pred_check_branch
      %1862 = sbr.rel (0) target = $region65
    $region64: #{tpu_custom_call.1} parent=1 // pred_region
      %1864 = vsyncadd [#allocation14], 0
      %s1866 = sshll.u32 [#allocation15], 4
      %s1867 = int_to_ptr.vmem [resolvable:$true] %s1866
      %s1868 = sshll.u32 %s9, 4
      %s1869 = int_to_ptr.hbm [resolvable:$true] %s1868
      %1871 = dma.vmem_to_hbm [thread:$0]  %s1867, 128, %s1869, [#allocation14]
    $region65: #{tpu_custom_call.1} parent=1 // pred_fallthru
      _
    // Predicated region
    $region66: #{tpu_custom_call.1} parent=1 // pred_check
      _
    $region67: #{tpu_custom_call.1} parent=1 // pred_check_branch
      %1873 = sbr.rel (0) target = $region69
    $region68: #{tpu_custom_call.1} parent=1 // pred_region
      %1875 = dma.done [#allocation6], 1024
    $region69: #{tpu_custom_call.1} parent=1 // pred_fallthru
      _
    // Predicated region
    $region70: #{tpu_custom_call.1} parent=1 // pred_check
      _
    $region71: #{tpu_custom_call.1} parent=1 // pred_check_branch
      %1877 = sbr.rel (0) target = $region73
    $region72: #{tpu_custom_call.1} parent=1 // pred_region
      %1879 = dma.done [#allocation14], 128
    $region73: #{tpu_custom_call.1} parent=1 // pred_fallthru
      _
    // Predicated region
    $region74: #{tpu_custom_call.1} parent=1 // pred_check
      _
    $region75: #{tpu_custom_call.1} parent=1 // pred_check_branch
      %1881 = sbr.rel (0) target = $region77
    $region76: #{tpu_custom_call.1} parent=1 // pred_region
      %1883 = dma.done [#allocation14], 128
    $region77: #{tpu_custom_call.1} parent=1 // pred_fallthru
      _
    %1884 = vsyncpa [#allocation5], 1
    %1885 = vsyncpa [#allocation8], 1
    %1886 = vsyncpa [#allocation11], 1
    %1887 = vsyncpa [#allocation6], 1
    %1888 = vsyncpa [#allocation14], 1

</llo_original>
